<compile_context>
chip_gen: v6e
topology: v6e:2x2x1
jax: 0.10.0
libtpu: 0.0.40
codegen_flags: <defaults>
</compile_context>

<pallas_src>
import jax
import jax.numpy as jnp
from jax import lax
from jax.experimental import pallas as pl
from jax.experimental.pallas import tpu as pltpu

RNN_HIDDEN = 38
D_MODEL = RNN_HIDDEN + 2          # 40
N_HEADS = 10
HEAD_DIM = D_MODEL // N_HEADS     # 4
D_FF = 2048                       # torch TransformerEncoderLayer default
N_LAYERS = 3
LN_EPS = 1e-5
QKV_PAD = 128                     # each of Q/K/V gets its own 128-lane tile

# rows of the packed per-layer vector slab [L, 16, D_MODEL]
R_BQ, R_BK, R_BV, R_BO = 0, 1, 2, 3
R_LN1G, R_LN1B, R_LN2G, R_LN2B = 4, 5, 6, 7
R_B2 = 8
VEC_ROWS = 16


def _layer_norm(x, gamma, beta):
    mean = jnp.mean(x, axis=-1, keepdims=True)
    var = jnp.mean((x - mean) ** 2, axis=-1, keepdims=True)      # biased, like torch
    return (x - mean) * lax.rsqrt(var + LN_EPS) * gamma + beta


def _mm(a, b):
    # a @ b (contract a's last dim with b's first), f32 accumulate on the MXU.
    return lax.dot_general(a, b, (((1,), (0,)), ((), ())),
                           preferred_element_type=jnp.float32)


def _mm_t(a, b):
    # a @ b.T without materializing a transpose (contract last dims of both).
    return lax.dot_general(a, b, (((1,), (1,)), ((), ())),
                           preferred_element_type=jnp.float32)


def sp_model_kernel(x_ref, mask_ref, wqkv_ref, wo_ref, vecs_ref,
                    w1_ref, b1_ref, w2t_ref, wf_ref, bf_ref,
                    out_ref, x_scratch):
    l = pl.program_id(0)
    n = x_scratch.shape[0]
    D = D_MODEL

    # Load the input once; carry the activation in persistent VMEM scratch.
    @pl.when(l == 0)
    def _():
        x_scratch[...] = x_ref[...].astype(jnp.float32)

    x = x_scratch[...]                                            # [n, D] f32
    head_mask = mask_ref[...]                                     # [H*n, D] f32 (host-built)
    vecs = vecs_ref[0]                                            # [16, D] packed vectors

    # ---- fused QKV projection (bf16 weights, f32 MXU accumulation) ----
    qkv = _mm(x.astype(jnp.bfloat16), wqkv_ref[0])                # [n, 3*128]
    q = qkv[:, 0:D] + vecs[R_BQ:R_BQ + 1]                         # 1/sqrt(hd) folded into wq/bq
    k = qkv[:, QKV_PAD:QKV_PAD + D] + vecs[R_BK:R_BK + 1]
    v = qkv[:, 2 * QKV_PAD:2 * QKV_PAD + D] + vecs[R_BV:R_BV + 1]

    # ---- all heads batched: replicate Q rows, per-head column mask ----
    q_rep = jnp.tile(q, (N_HEADS, 1)) * head_mask                 # [H*n, D]
    s = _mm_t(q_rep, k)                                           # [H*n, n] per-head scores
    s = s - jnp.max(s, axis=-1, keepdims=True)
    p = jnp.exp(s)
    p = p * pl.reciprocal(jnp.sum(p, axis=-1, keepdims=True), approx=True)
    ctx = _mm(p, v) * head_mask                                   # [H*n, D] per-head context
    attn = jnp.sum(ctx.reshape(N_HEADS, n, D), axis=0)            # heads re-assembled -> [n, D]
    attn = _mm(attn.astype(jnp.bfloat16), wo_ref[0]) + vecs[R_BO:R_BO + 1]

    x = _layer_norm(x + attn, vecs[R_LN1G:R_LN1G + 1], vecs[R_LN1B:R_LN1B + 1])

    # ---- feed-forward (bf16 weights, f32 accumulation; LN stays f32) ----
    h1 = _mm(x.astype(jnp.bfloat16), w1_ref[0]) + b1_ref[0]       # [n, D_FF]
    h1 = jnp.maximum(h1, 0.0)
    h2 = _mm(h1.astype(jnp.bfloat16), w2t_ref[0]) + vecs[R_B2:R_B2 + 1]

    x = _layer_norm(x + h2, vecs[R_LN2G:R_LN2G + 1], vecs[R_LN2B:R_LN2B + 1])
    x_scratch[...] = x

    # ---- final linear head, written only on the last layer step ----
    @pl.when(l == pl.num_programs(0) - 1)
    def _():
        out_ref[...] = (_mm(x, wf_ref[...]) + bf_ref[...]).astype(out_ref.dtype)


def init_params(key):
    def nrm(k, shape, scale=0.05):
        return scale * jax.random.normal(k, shape, dtype=jnp.float32)

    ks = jax.random.split(key, 8)
    L, D, F, H = N_LAYERS, D_MODEL, D_FF, RNN_HIDDEN
    q_scale = 1.0 / (HEAD_DIM ** 0.5)

    # Fused QKV slab: each projection in its own 128-lane tile; scale folded into Q.
    wq = nrm(ks[0], (L, D, D)) * q_scale
    wk = nrm(ks[1], (L, D, D))
    wv = nrm(ks[2], (L, D, D))
    wqkv = jnp.zeros((L, D, 3 * QKV_PAD), jnp.float32)
    wqkv = wqkv.at[:, :, 0:D].set(wq)
    wqkv = wqkv.at[:, :, QKV_PAD:QKV_PAD + D].set(wk)
    wqkv = wqkv.at[:, :, 2 * QKV_PAD:2 * QKV_PAD + D].set(wv)

    # Packed small per-layer vectors (all biases zero at init, LN gammas one).
    vecs = jnp.zeros((L, VEC_ROWS, D), jnp.float32)
    vecs = vecs.at[:, R_LN1G, :].set(1.0)
    vecs = vecs.at[:, R_LN2G, :].set(1.0)
    # (bq would be scaled by q_scale here if non-zero.)

    params = dict(
        wqkv=wqkv.astype(jnp.bfloat16),
        wo=nrm(ks[3], (L, D, D)).astype(jnp.bfloat16),
        vecs=vecs,
        w1=nrm(ks[4], (L, D, F)).astype(jnp.bfloat16),            # x @ w1
        b1=jnp.zeros((L, 1, F), jnp.float32),
        w2t=nrm(ks[5], (L, F, D)).astype(jnp.bfloat16),           # pre-transposed [in=F, out=D]
        wf=nrm(ks[6], (D, H)),
        bf=jnp.zeros((1, H), jnp.float32),
    )
    return params


def _layer_spec(*blk):
    zeros = (0,) * len(blk)
    return pl.BlockSpec((1,) + blk, lambda l, _z=zeros: (l,) + _z)


def _fixed_spec(*blk):
    zeros = (0,) * len(blk)
    return pl.BlockSpec(blk, lambda l, _z=zeros: _z)


def sp_model_forward(x, params):
    n = x.shape[0]
    D, F, H = D_MODEL, D_FF, RNN_HIDDEN
    hn = N_HEADS * n

    # Grid-invariant per-head block mask, built once on the host (hoisted).
    row_head = jnp.arange(hn, dtype=jnp.int32)[:, None] // n
    col_head = jnp.arange(D, dtype=jnp.int32)[None, :] // HEAD_DIM
    head_mask = (row_head == col_head).astype(jnp.float32)        # [hn, D]

    args = (x, head_mask, params["wqkv"], params["wo"], params["vecs"],
            params["w1"], params["b1"], params["w2t"], params["wf"], params["bf"])
    in_specs = [
        _fixed_spec(n, D),                                        # x
        _fixed_spec(hn, D),                                       # head_mask
        _layer_spec(D, 3 * QKV_PAD),                              # wqkv
        _layer_spec(D, D),                                        # wo
        _layer_spec(VEC_ROWS, D),                                 # packed vectors
        _layer_spec(D, F),                                        # w1
        _layer_spec(1, F),                                        # b1
        _layer_spec(F, D),                                        # w2 (pre-transposed)
        _fixed_spec(D, H),                                        # wf
        _fixed_spec(1, H),                                        # bf
    ]
    return pl.pallas_call(
        sp_model_kernel,
        out_shape=jax.ShapeDtypeStruct((n, H), jnp.float32),
        grid=(N_LAYERS,),
        in_specs=in_specs,
        out_specs=_fixed_spec(n, H),
        scratch_shapes=[pltpu.VMEM((n, D), jnp.float32)],
        compiler_params=pltpu.CompilerParams(
            dimension_semantics=("arbitrary",),
            vmem_limit_bytes=32 << 20),
    )(*args)


def sp_model_reference(x, params):
    """Pure-JAX reference mirroring the kernel's dtype choices (bf16 matmul inputs)."""
    def bf(a):
        return a.astype(jnp.bfloat16).astype(jnp.float32)

    D, H, HD = D_MODEL, N_HEADS, HEAD_DIM
    n = x.shape[0]
    x = x.astype(jnp.float32)
    for l in range(N_LAYERS):
        vecs = params["vecs"][l]
        wqkv = params["wqkv"][l].astype(jnp.float32)
        qkv = bf(x) @ wqkv
        q = qkv[:, 0:D] + vecs[R_BQ]
        k = qkv[:, QKV_PAD:QKV_PAD + D] + vecs[R_BK]
        v = qkv[:, 2 * QKV_PAD:2 * QKV_PAD + D] + vecs[R_BV]
        qh = q.reshape(n, H, HD).transpose(1, 0, 2)               # scale already folded
        kh = k.reshape(n, H, HD).transpose(1, 0, 2)
        vh = v.reshape(n, H, HD).transpose(1, 0, 2)
        s = jnp.einsum('hqd,hkd->hqk', qh, kh)
        p = jax.nn.softmax(s, axis=-1)
        ctx = jnp.einsum('hqk,hkd->hqd', p, vh)
        attn = ctx.transpose(1, 0, 2).reshape(n, D)
        attn = bf(attn) @ params["wo"][l].astype(jnp.float32) + vecs[R_BO]
        x = _layer_norm(x + attn, vecs[R_LN1G], vecs[R_LN1B])
        h1 = jnp.maximum(bf(x) @ params["w1"][l].astype(jnp.float32)
                         + params["b1"][l][0], 0.0)
        h2 = bf(h1) @ params["w2t"][l].astype(jnp.float32) + vecs[R_B2]
        x = _layer_norm(x + h2, vecs[R_LN2G], vecs[R_LN2B])
    return x @ params["wf"] + params["bf"]


if __name__ == "__main__":
    key = jax.random.PRNGKey(0)
    k_x, k_p = jax.random.split(key)
    N = 8  # sequence length (number of hidden-position vectors)
    x = jax.random.normal(k_x, (N, D_MODEL), dtype=jnp.float32)
    params = init_params(k_p)

    out = jax.block_until_ready(sp_model_forward(x, params))
    assert out.shape == (N, RNN_HIDDEN) and out.dtype == jnp.float32
    assert bool(jnp.all(jnp.isfinite(out)))

    ref = sp_model_reference(x, params)
    err = float(jnp.max(jnp.abs(out - ref)))
    assert err < 5e-2, f"max abs err vs reference: {err}"

    print("KERNEL_OK")
</pallas_src>

<mosaic_0001>
module attributes {stable_mosaic.version = 11 : i64} {
  func.func @sp_model_kernel(%arg0: i32, %arg1: memref<8x40xf32, #tpu.memory_space<vmem>>, %arg2: memref<80x40xf32, #tpu.memory_space<vmem>>, %arg3: memref<1x40x384xbf16, #tpu.memory_space<vmem>>, %arg4: memref<1x40x40xbf16, #tpu.memory_space<vmem>>, %arg5: memref<1x16x40xf32, #tpu.memory_space<vmem>>, %arg6: memref<1x40x2048xbf16, #tpu.memory_space<vmem>>, %arg7: memref<1x1x2048xf32, #tpu.memory_space<vmem>>, %arg8: memref<1x2048x40xbf16, #tpu.memory_space<vmem>>, %arg9: memref<40x38xf32, #tpu.memory_space<vmem>>, %arg10: memref<1x38xf32, #tpu.memory_space<vmem>>, %arg11: memref<8x38xf32, #tpu.memory_space<vmem>>, %arg12: memref<8x40xf32, #tpu.memory_space<vmem>>) attributes {dimension_semantics = [#tpu.dimension_semantics<arbitrary>], iteration_bounds = array<i64: 3>, scalar_prefetch = 0 : i64, scratch_operands = 1 : i64, tpu.core_type = #tpu.core_type<tc>, window_params = [{pipeline_mode = #tpu.pipeline_mode<synchronous>, transform_indices = @transform_0, window_bounds = array<i64: 8, 40>}, {pipeline_mode = #tpu.pipeline_mode<synchronous>, transform_indices = @transform_1, window_bounds = array<i64: 80, 40>}, {transform_indices = @transform_2, window_bounds = array<i64: 1, 40, 384>}, {transform_indices = @transform_3, window_bounds = array<i64: 1, 40, 40>}, {transform_indices = @transform_4, window_bounds = array<i64: 1, 16, 40>}, {transform_indices = @transform_5, window_bounds = array<i64: 1, 40, 2048>}, {transform_indices = @transform_6, window_bounds = array<i64: 1, 1, 2048>}, {transform_indices = @transform_7, window_bounds = array<i64: 1, 2048, 40>}, {pipeline_mode = #tpu.pipeline_mode<synchronous>, transform_indices = @transform_8, window_bounds = array<i64: 40, 38>}, {pipeline_mode = #tpu.pipeline_mode<synchronous>, transform_indices = @transform_9, window_bounds = array<i64: 1, 38>}, {pipeline_mode = #tpu.pipeline_mode<synchronous>, transform_indices = @transform_10, window_bounds = array<i64: 8, 38>}]} {
    %c0_i32 = arith.constant 0 : i32
    %0 = arith.cmpi eq, %arg0, %c0_i32 : i32
    %1 = arith.extui %0 : i1 to i32
    %c0_i32_0 = arith.constant 0 : i32
    %2 = arith.cmpi ne, %1, %c0_i32_0 : i32
    scf.if %2 {
      %c0_44 = arith.constant 0 : index
      %c0_45 = arith.constant 0 : index
      %118 = vector.load %arg1[%c0_44, %c0_45] : memref<8x40xf32, #tpu.memory_space<vmem>>, vector<8x40xf32>
      %c0_46 = arith.constant 0 : index
      %c0_47 = arith.constant 0 : index
      %119 = vector.load %arg12[%c0_46, %c0_47] : memref<8x40xf32, #tpu.memory_space<vmem>>, vector<8x40xf32>
      tpu.vector_store %arg12[%c0_46, %c0_47], %118 {strides = array<i32>} : memref<8x40xf32, #tpu.memory_space<vmem>>, vector<8x40xf32>,
    } else {
    }
    %c0 = arith.constant 0 : index
    %c0_1 = arith.constant 0 : index
    %3 = vector.load %arg12[%c0, %c0_1] : memref<8x40xf32, #tpu.memory_space<vmem>>, vector<8x40xf32>
    %c0_2 = arith.constant 0 : index
    %c0_3 = arith.constant 0 : index
    %4 = vector.load %arg2[%c0_2, %c0_3] : memref<80x40xf32, #tpu.memory_space<vmem>>, vector<80x40xf32>
    %c0_4 = arith.constant 0 : index
    %c0_5 = arith.constant 0 : index
    %c0_6 = arith.constant 0 : index
    %5 = vector.load %arg5[%c0_4, %c0_5, %c0_6] : memref<1x16x40xf32, #tpu.memory_space<vmem>>, vector<1x16x40xf32>
    %6 = vector.shape_cast %5 : vector<1x16x40xf32> to vector<16x40xf32>
    %7 = arith.truncf %3 : vector<8x40xf32> to vector<8x40xbf16>
    %c0_7 = arith.constant 0 : index
    %c0_8 = arith.constant 0 : index
    %c0_9 = arith.constant 0 : index
    %8 = vector.load %arg3[%c0_7, %c0_8, %c0_9] : memref<1x40x384xbf16, #tpu.memory_space<vmem>>, vector<1x40x384xbf16>
    %9 = vector.shape_cast %8 : vector<1x40x384xbf16> to vector<40x384xbf16>
    %cst = arith.constant dense<0.000000e+00> : vector<8x384xf32>
    %10 = tpu.matmul %7, %9, %cst {dimension_numbers = #tpu.dot_dimension_numbers<[1], [0], [0], [1], [0, 0, 1, 1], [], []>} : vector<8x40xbf16>, vector<40x384xbf16>, vector<8x384xf32> -> vector<8x384xf32>
    %11 = vector.extract_strided_slice %10 {offsets = [0, 0], sizes = [8, 40], strides = [1, 1]} : vector<8x384xf32> to vector<8x40xf32>
    %12 = vector.extract_strided_slice %6 {offsets = [0, 0], sizes = [1, 40], strides = [1, 1]} : vector<16x40xf32> to vector<1x40xf32>
    %13 = vector.broadcast %12 : vector<1x40xf32> to vector<8x40xf32>
    %14 = arith.addf %11, %13 : vector<8x40xf32>
    %15 = vector.extract_strided_slice %10 {offsets = [0, 128], sizes = [8, 40], strides = [1, 1]} : vector<8x384xf32> to vector<8x40xf32>
    %16 = vector.extract_strided_slice %6 {offsets = [1, 0], sizes = [1, 40], strides = [1, 1]} : vector<16x40xf32> to vector<1x40xf32>
    %17 = vector.broadcast %16 : vector<1x40xf32> to vector<8x40xf32>
    %18 = arith.addf %15, %17 : vector<8x40xf32>
    %19 = vector.extract_strided_slice %10 {offsets = [0, 256], sizes = [8, 40], strides = [1, 1]} : vector<8x384xf32> to vector<8x40xf32>
    %20 = vector.extract_strided_slice %6 {offsets = [2, 0], sizes = [1, 40], strides = [1, 1]} : vector<16x40xf32> to vector<1x40xf32>
    %21 = vector.broadcast %20 : vector<1x40xf32> to vector<8x40xf32>
    %22 = arith.addf %19, %21 : vector<8x40xf32>
    %23 = tpu.concatenate %14, %14, %14, %14, %14, %14, %14, %14, %14, %14 in 0 : vector<8x40xf32>, vector<8x40xf32>, vector<8x40xf32>, vector<8x40xf32>, vector<8x40xf32>, vector<8x40xf32>, vector<8x40xf32>, vector<8x40xf32>, vector<8x40xf32>, vector<8x40xf32> -> vector<80x40xf32>
    %24 = arith.mulf %23, %4 : vector<80x40xf32>
    %cst_10 = arith.constant dense<0.000000e+00> : vector<80x8xf32>
    %25 = tpu.matmul %24, %18, %cst_10 {dimension_numbers = #tpu.dot_dimension_numbers<[1], [1], [0], [0], [0, 0, 1, 0], [], []>} : vector<80x40xf32>, vector<8x40xf32>, vector<80x8xf32> -> vector<80x8xf32>
    %cst_11 = arith.constant dense<0xFF800000> : vector<80xf32>
    %26 = vector.multi_reduction <maximumf>, %25, %cst_11 [1] : vector<80x8xf32> to vector<80xf32>
    %27 = vector.shape_cast %26 : vector<80xf32> to vector<80x1xf32>
    %28 = vector.broadcast %27 : vector<80x1xf32> to vector<80x8xf32>
    %29 = arith.subf %25, %28 : vector<80x8xf32>
    %30 = math.exp %29 : vector<80x8xf32>
    %cst_12 = arith.constant dense<0.000000e+00> : vector<80xf32>
    %31 = vector.multi_reduction <add>, %30, %cst_12 [1] : vector<80x8xf32> to vector<80xf32>
    %32 = vector.shape_cast %31 : vector<80xf32> to vector<80x1xf32>
    %33 = tpu.reciprocal %32 {approx = true} : vector<80x1xf32> -> vector<80x1xf32>
    %34 = vector.broadcast %33 : vector<80x1xf32> to vector<80x8xf32>
    %35 = arith.mulf %30, %34 : vector<80x8xf32>
    %cst_13 = arith.constant dense<0.000000e+00> : vector<80x40xf32>
    %36 = tpu.matmul %35, %22, %cst_13 {dimension_numbers = #tpu.dot_dimension_numbers<[1], [0], [0], [1], [0, 0, 1, 1], [], []>} : vector<80x8xf32>, vector<8x40xf32>, vector<80x40xf32> -> vector<80x40xf32>
    %37 = arith.mulf %36, %4 : vector<80x40xf32>
    %38 = vector.shape_cast %37 : vector<80x40xf32> to vector<10x8x40xf32>
    %cst_14 = arith.constant dense<0.000000e+00> : vector<8x40xf32>
    %39 = vector.multi_reduction <add>, %38, %cst_14 [0] : vector<10x8x40xf32> to vector<8x40xf32>
    %40 = arith.truncf %39 : vector<8x40xf32> to vector<8x40xbf16>
    %c0_15 = arith.constant 0 : index
    %c0_16 = arith.constant 0 : index
    %c0_17 = arith.constant 0 : index
    %41 = vector.load %arg4[%c0_15, %c0_16, %c0_17] : memref<1x40x40xbf16, #tpu.memory_space<vmem>>, vector<1x40x40xbf16>
    %42 = vector.shape_cast %41 : vector<1x40x40xbf16> to vector<40x40xbf16>
    %cst_18 = arith.constant dense<0.000000e+00> : vector<8x40xf32>
    %43 = tpu.matmul %40, %42, %cst_18 {dimension_numbers = #tpu.dot_dimension_numbers<[1], [0], [0], [1], [0, 0, 1, 1], [], []>} : vector<8x40xbf16>, vector<40x40xbf16>, vector<8x40xf32> -> vector<8x40xf32>
    %44 = vector.extract_strided_slice %6 {offsets = [3, 0], sizes = [1, 40], strides = [1, 1]} : vector<16x40xf32> to vector<1x40xf32>
    %45 = vector.broadcast %44 : vector<1x40xf32> to vector<8x40xf32>
    %46 = arith.addf %43, %45 : vector<8x40xf32>
    %47 = arith.addf %3, %46 : vector<8x40xf32>
    %48 = vector.extract_strided_slice %6 {offsets = [4, 0], sizes = [1, 40], strides = [1, 1]} : vector<16x40xf32> to vector<1x40xf32>
    %49 = vector.extract_strided_slice %6 {offsets = [5, 0], sizes = [1, 40], strides = [1, 1]} : vector<16x40xf32> to vector<1x40xf32>
    %cst_19 = arith.constant dense<0.000000e+00> : vector<8xf32>
    %50 = vector.multi_reduction <add>, %47, %cst_19 [1] : vector<8x40xf32> to vector<8xf32>
    %51 = vector.shape_cast %50 : vector<8xf32> to vector<8x1xf32>
    %cst_20 = arith.constant 4.000000e+01 : f32
    %52 = vector.broadcast %cst_20 : f32 to vector<8x1xf32>
    %53 = arith.divf %51, %52 : vector<8x1xf32>
    %54 = vector.broadcast %53 : vector<8x1xf32> to vector<8x40xf32>
    %55 = arith.subf %47, %54 : vector<8x40xf32>
    %56 = arith.mulf %55, %55 : vector<8x40xf32>
    %cst_21 = arith.constant dense<0.000000e+00> : vector<8xf32>
    %57 = vector.multi_reduction <add>, %56, %cst_21 [1] : vector<8x40xf32> to vector<8xf32>
    %58 = vector.shape_cast %57 : vector<8xf32> to vector<8x1xf32>
    %cst_22 = arith.constant 4.000000e+01 : f32
    %59 = vector.broadcast %cst_22 : f32 to vector<8x1xf32>
    %60 = arith.divf %58, %59 : vector<8x1xf32>
    %61 = vector.broadcast %53 : vector<8x1xf32> to vector<8x40xf32>
    %62 = arith.subf %47, %61 : vector<8x40xf32>
    %cst_23 = arith.constant 9.99999974E-6 : f32
    %63 = vector.broadcast %cst_23 : f32 to vector<8x1xf32>
    %64 = arith.addf %60, %63 : vector<8x1xf32>
    %65 = math.rsqrt %64 : vector<8x1xf32>
    %66 = vector.broadcast %65 : vector<8x1xf32> to vector<8x40xf32>
    %67 = arith.mulf %62, %66 : vector<8x40xf32>
    %68 = vector.broadcast %48 : vector<1x40xf32> to vector<8x40xf32>
    %69 = arith.mulf %67, %68 : vector<8x40xf32>
    %70 = vector.broadcast %49 : vector<1x40xf32> to vector<8x40xf32>
    %71 = arith.addf %69, %70 : vector<8x40xf32>
    %72 = arith.truncf %71 : vector<8x40xf32> to vector<8x40xbf16>
    %c0_24 = arith.constant 0 : index
    %c0_25 = arith.constant 0 : index
    %c0_26 = arith.constant 0 : index
    %73 = vector.load %arg6[%c0_24, %c0_25, %c0_26] : memref<1x40x2048xbf16, #tpu.memory_space<vmem>>, vector<1x40x2048xbf16>
    %74 = vector.shape_cast %73 : vector<1x40x2048xbf16> to vector<40x2048xbf16>
    %cst_27 = arith.constant dense<0.000000e+00> : vector<8x2048xf32>
    %75 = tpu.matmul %72, %74, %cst_27 {dimension_numbers = #tpu.dot_dimension_numbers<[1], [0], [0], [1], [0, 0, 1, 1], [], []>} : vector<8x40xbf16>, vector<40x2048xbf16>, vector<8x2048xf32> -> vector<8x2048xf32>
    %c0_28 = arith.constant 0 : index
    %c0_29 = arith.constant 0 : index
    %c0_30 = arith.constant 0 : index
    %76 = vector.load %arg7[%c0_28, %c0_29, %c0_30] : memref<1x1x2048xf32, #tpu.memory_space<vmem>>, vector<1x1x2048xf32>
    %77 = vector.shape_cast %76 : vector<1x1x2048xf32> to vector<1x2048xf32>
    %78 = vector.broadcast %77 : vector<1x2048xf32> to vector<8x2048xf32>
    %79 = arith.addf %75, %78 : vector<8x2048xf32>
    %cst_31 = arith.constant 0.000000e+00 : f32
    %80 = vector.broadcast %cst_31 : f32 to vector<8x2048xf32>
    %81 = arith.maximumf %79, %80 : vector<8x2048xf32>
    %82 = arith.truncf %81 : vector<8x2048xf32> to vector<8x2048xbf16>
    %c0_32 = arith.constant 0 : index
    %c0_33 = arith.constant 0 : index
    %c0_34 = arith.constant 0 : index
    %83 = vector.load %arg8[%c0_32, %c0_33, %c0_34] : memref<1x2048x40xbf16, #tpu.memory_space<vmem>>, vector<1x2048x40xbf16>
    %84 = vector.shape_cast %83 : vector<1x2048x40xbf16> to vector<2048x40xbf16>
    %cst_35 = arith.constant dense<0.000000e+00> : vector<8x40xf32>
    %85 = tpu.matmul %82, %84, %cst_35 {dimension_numbers = #tpu.dot_dimension_numbers<[1], [0], [0], [1], [0, 0, 1, 1], [], []>} : vector<8x2048xbf16>, vector<2048x40xbf16>, vector<8x40xf32> -> vector<8x40xf32>
    %86 = vector.extract_strided_slice %6 {offsets = [8, 0], sizes = [1, 40], strides = [1, 1]} : vector<16x40xf32> to vector<1x40xf32>
    %87 = vector.broadcast %86 : vector<1x40xf32> to vector<8x40xf32>
    %88 = arith.addf %85, %87 : vector<8x40xf32>
    %89 = arith.addf %71, %88 : vector<8x40xf32>
    %90 = vector.extract_strided_slice %6 {offsets = [6, 0], sizes = [1, 40], strides = [1, 1]} : vector<16x40xf32> to vector<1x40xf32>
    %91 = vector.extract_strided_slice %6 {offsets = [7, 0], sizes = [1, 40], strides = [1, 1]} : vector<16x40xf32> to vector<1x40xf32>
    %cst_36 = arith.constant dense<0.000000e+00> : vector<8xf32>
    %92 = vector.multi_reduction <add>, %89, %cst_36 [1] : vector<8x40xf32> to vector<8xf32>
    %93 = vector.shape_cast %92 : vector<8xf32> to vector<8x1xf32>
    %cst_37 = arith.constant 4.000000e+01 : f32
    %94 = vector.broadcast %cst_37 : f32 to vector<8x1xf32>
    %95 = arith.divf %93, %94 : vector<8x1xf32>
    %96 = vector.broadcast %95 : vector<8x1xf32> to vector<8x40xf32>
    %97 = arith.subf %89, %96 : vector<8x40xf32>
    %98 = arith.mulf %97, %97 : vector<8x40xf32>
    %cst_38 = arith.constant dense<0.000000e+00> : vector<8xf32>
    %99 = vector.multi_reduction <add>, %98, %cst_38 [1] : vector<8x40xf32> to vector<8xf32>
    %100 = vector.shape_cast %99 : vector<8xf32> to vector<8x1xf32>
    %cst_39 = arith.constant 4.000000e+01 : f32
    %101 = vector.broadcast %cst_39 : f32 to vector<8x1xf32>
    %102 = arith.divf %100, %101 : vector<8x1xf32>
    %103 = vector.broadcast %95 : vector<8x1xf32> to vector<8x40xf32>
    %104 = arith.subf %89, %103 : vector<8x40xf32>
    %cst_40 = arith.constant 9.99999974E-6 : f32
    %105 = vector.broadcast %cst_40 : f32 to vector<8x1xf32>
    %106 = arith.addf %102, %105 : vector<8x1xf32>
    %107 = math.rsqrt %106 : vector<8x1xf32>
    %108 = vector.broadcast %107 : vector<8x1xf32> to vector<8x40xf32>
    %109 = arith.mulf %104, %108 : vector<8x40xf32>
    %110 = vector.broadcast %90 : vector<1x40xf32> to vector<8x40xf32>
    %111 = arith.mulf %109, %110 : vector<8x40xf32>
    %112 = vector.broadcast %91 : vector<1x40xf32> to vector<8x40xf32>
    %113 = arith.addf %111, %112 : vector<8x40xf32>
    %c0_41 = arith.constant 0 : index
    %c0_42 = arith.constant 0 : index
    %114 = vector.load %arg12[%c0_41, %c0_42] : memref<8x40xf32, #tpu.memory_space<vmem>>, vector<8x40xf32>
    tpu.vector_store %arg12[%c0_41, %c0_42], %113 {strides = array<i32>} : memref<8x40xf32, #tpu.memory_space<vmem>>, vector<8x40xf32>,
    %c2_i32 = arith.constant 2 : i32
    %115 = arith.cmpi eq, %arg0, %c2_i32 : i32
    %116 = arith.extui %115 : i1 to i32
    %c0_i32_43 = arith.constant 0 : i32
    %117 = arith.cmpi ne, %116, %c0_i32_43 : i32
    scf.if %117 {
      %c0_44 = arith.constant 0 : index
      %c0_45 = arith.constant 0 : index
      %118 = vector.load %arg9[%c0_44, %c0_45] : memref<40x38xf32, #tpu.memory_space<vmem>>, vector<40x38xf32>
      %cst_46 = arith.constant dense<0.000000e+00> : vector<8x38xf32>
      %119 = tpu.matmul %113, %118, %cst_46 {dimension_numbers = #tpu.dot_dimension_numbers<[1], [0], [0], [1], [0, 0, 1, 1], [], []>} : vector<8x40xf32>, vector<40x38xf32>, vector<8x38xf32> -> vector<8x38xf32>
      %c0_47 = arith.constant 0 : index
      %c0_48 = arith.constant 0 : index
      %120 = vector.load %arg10[%c0_47, %c0_48] : memref<1x38xf32, #tpu.memory_space<vmem>>, vector<1x38xf32>
      %121 = vector.broadcast %120 : vector<1x38xf32> to vector<8x38xf32>
      %122 = arith.addf %119, %121 : vector<8x38xf32>
      %c0_49 = arith.constant 0 : index
      %c0_50 = arith.constant 0 : index
      %123 = vector.load %arg11[%c0_49, %c0_50] : memref<8x38xf32, #tpu.memory_space<vmem>>, vector<8x38xf32>
      tpu.vector_store %arg11[%c0_49, %c0_50], %122 {strides = array<i32>} : memref<8x38xf32, #tpu.memory_space<vmem>>, vector<8x38xf32>,
    } else {
    }
    return
  }
  func.func @transform_0(%arg0: i32) -> (i32, i32) {
    %c0_i32 = arith.constant 0 : i32
    %c0_i32_0 = arith.constant 0 : i32
    %c0_i32_1 = arith.constant 0 : i32
    return %c0_i32, %c0_i32_0 : i32, i32
  }
  func.func @transform_1(%arg0: i32) -> (i32, i32) {
    %c0_i32 = arith.constant 0 : i32
    %c0_i32_0 = arith.constant 0 : i32
    %c0_i32_1 = arith.constant 0 : i32
    return %c0_i32, %c0_i32_0 : i32, i32
  }
  func.func @transform_2(%arg0: i32) -> (i32, i32, i32) {
    %c0_i32 = arith.constant 0 : i32
    %c0_i32_0 = arith.constant 0 : i32
    %c0_i32_1 = arith.constant 0 : i32
    return %arg0, %c0_i32, %c0_i32_0 : i32, i32, i32
  }
  func.func @transform_3(%arg0: i32) -> (i32, i32, i32) {
    %c0_i32 = arith.constant 0 : i32
    %c0_i32_0 = arith.constant 0 : i32
    %c0_i32_1 = arith.constant 0 : i32
    return %arg0, %c0_i32, %c0_i32_0 : i32, i32, i32
  }
  func.func @transform_4(%arg0: i32) -> (i32, i32, i32) {
    %c0_i32 = arith.constant 0 : i32
    %c0_i32_0 = arith.constant 0 : i32
    %c0_i32_1 = arith.constant 0 : i32
    return %arg0, %c0_i32, %c0_i32_0 : i32, i32, i32
  }
  func.func @transform_5(%arg0: i32) -> (i32, i32, i32) {
    %c0_i32 = arith.constant 0 : i32
    %c0_i32_0 = arith.constant 0 : i32
    %c0_i32_1 = arith.constant 0 : i32
    return %arg0, %c0_i32, %c0_i32_0 : i32, i32, i32
  }
  func.func @transform_6(%arg0: i32) -> (i32, i32, i32) {
    %c0_i32 = arith.constant 0 : i32
    %c0_i32_0 = arith.constant 0 : i32
    %c0_i32_1 = arith.constant 0 : i32
    return %arg0, %c0_i32, %c0_i32_0 : i32, i32, i32
  }
  func.func @transform_7(%arg0: i32) -> (i32, i32, i32) {
    %c0_i32 = arith.constant 0 : i32
    %c0_i32_0 = arith.constant 0 : i32
    %c0_i32_1 = arith.constant 0 : i32
    return %arg0, %c0_i32, %c0_i32_0 : i32, i32, i32
  }
  func.func @transform_8(%arg0: i32) -> (i32, i32) {
    %c0_i32 = arith.constant 0 : i32
    %c0_i32_0 = arith.constant 0 : i32
    %c0_i32_1 = arith.constant 0 : i32
    return %c0_i32, %c0_i32_0 : i32, i32
  }
  func.func @transform_9(%arg0: i32) -> (i32, i32) {
    %c0_i32 = arith.constant 0 : i32
    %c0_i32_0 = arith.constant 0 : i32
    %c0_i32_1 = arith.constant 0 : i32
    return %c0_i32, %c0_i32_0 : i32, i32
  }
  func.func @transform_10(%arg0: i32) -> (i32, i32) {
    %c0_i32 = arith.constant 0 : i32
    %c0_i32_0 = arith.constant 0 : i32
    %c0_i32_1 = arith.constant 0 : i32
    return %c0_i32, %c0_i32_0 : i32, i32
  }
}

</mosaic_0001>

<llo_original>
// kernel: tpu_custom_call.1
$region0: #{tpu_custom_call.1}
  #allocation0 [shape = 'u32[]', space=smem, size = 0x4, offset = 0x4, fixed_abs, tag = 'smem constant byte address 0x4 - core index']
  #allocation1 [shape = 'u32[144,128]{1,0:T(1,128)}', space=vmem, size = 0x12000, scoped, tag = 'internal scratch']
  #allocation2 [shape = 'f32[8,40]{1,0:T(8,128)}', space=vmem, size = 0x1000, scoped, tag = 'scratch operand']
  %s0 = inlined_call_operand.vmem [shape: f32[8,40], index: 0, kind: input, shape index: {}]
  %s1 = inlined_call_operand.vmem [shape: f32[80,40], index: 1, kind: input, shape index: {}]
  %s2 = inlined_call_operand.vmem [shape: bf16[3,40,384], index: 2, kind: input, shape index: {}]
  %s3 = inlined_call_operand.vmem [shape: bf16[3,40,40], index: 3, kind: input, shape index: {}]
  %s4 = inlined_call_operand.vmem [shape: f32[3,16,40], index: 4, kind: input, shape index: {}]
  %s5 = inlined_call_operand.vmem [shape: bf16[3,40,2048], index: 5, kind: input, shape index: {}]
  %s6 = inlined_call_operand.vmem [shape: f32[3,1,2048], index: 6, kind: input, shape index: {}]
  %s7 = inlined_call_operand.vmem [shape: bf16[3,2048,40], index: 7, kind: input, shape index: {}]
  %s8 = inlined_call_operand.vmem [shape: f32[40,38], index: 8, kind: input, shape index: {}]
  %s9 = inlined_call_operand.vmem [shape: f32[1,38], index: 9, kind: input, shape index: {}]
  %s10 = inlined_call_operand.hbm [shape: f32[8,38], index: 10, kind: output, shape index: {}]
  %s11 = sld [smem:[#allocation0]]
  $region81: #{tpu_custom_call.1} parent=0
    _
  %s13 = ssub.s32 1, %s11
  %s14 = scalar_select 0, %s13, %s11
  $region1: #{tpu_custom_call.1} parent=0
    #allocation3 [shape = 'u8[4096]{0}', space=vmem, size = 0x1000, scoped, tag = 'output window, operand 0, single buffered']
    #allocation4 [shape = 's32[2]{0}', space=sflag, size = 0x8, scoped, tag = 'scoped memory for tpu_custom_call.1']
    %15 = vsyncpa [#allocation4], 0
    loop: start=0, step=1, limit=5
    $region2: #{tpu_custom_call.1} parent=1 // loop_pre_header
      _
    $region3: #{tpu_custom_call.1} parent=1 // loop_header
      %s17 = sphi 0, %s21
      %p18 = scmp.ge.s32.totalorder %s17, 5
      %s25 = sphi 0, %s25
      %s27 = sphi 0, %s25
      %s28 = sphi 0, %s27
      %s42 = sphi 0, %s28
      %s46 = sphi 0, %s46
      %s48 = sphi 0, %s46
      %s49 = sphi 0, %s48
      %s63 = sphi 0, %s49
      %s69 = sphi 0, %s71
      %s72 = sphi 0, %s69
      %s73 = sphi 0, %s72
      %s89 = sphi 0, %s73
      %s95 = sphi 0, %s97
      %s98 = sphi 0, %s95
      %s99 = sphi 0, %s98
      %s115 = sphi 0, %s99
      %s121 = sphi 0, %s123
      %s124 = sphi 0, %s121
      %s125 = sphi 0, %s124
      %s141 = sphi 0, %s125
      %s147 = sphi 0, %s149
      %s150 = sphi 0, %s147
      %s151 = sphi 0, %s150
      %s167 = sphi 0, %s151
      %s173 = sphi 0, %s175
      %s176 = sphi 0, %s173
      %s177 = sphi 0, %s176
      %s193 = sphi 0, %s177
      %s199 = sphi 0, %s201
      %s202 = sphi 0, %s199
      %s203 = sphi 0, %s202
      %s219 = sphi 0, %s203
      %s223 = sphi 0, %s223
      %s225 = sphi 0, %s223
      %s226 = sphi 0, %s225
      %s240 = sphi 0, %s226
      %s244 = sphi 0, %s244
      %s246 = sphi 0, %s244
      %s247 = sphi 0, %s246
      %s261 = sphi 0, %s247
      %s265 = sphi 0, %s265
      %s267 = sphi 0, %s265
      %s268 = sphi 0, %s267
      %s282 = sphi 0, %s268
    $region4: #{tpu_custom_call.1} parent=1 // loop_header_branch
      %20 = sbr.rel (%p18) target = $region8
    $region5: #{tpu_custom_call.1} parent=1 // loop_body
      %s22 = ssub.s32 %s17, 1
      %s23 = ssub.s32 %s17, 2
      %s24 = sadd.s32 %s17, 1
      %s26 = sadd.s32 %s25, 1
      %p29 = scmp.eq.s32.totalorder %s17, 2
      %p30 = scmp.ne.s32.totalorder %s25, %s27
      %p31 = scmp.eq.s32.totalorder %s17, 0
      %p32 = por %p30, %p31
      %p33 = scmp.ne.s32.totalorder %s25, %s27
      %p34 = scmp.eq.s32.totalorder %s22, 2
      %p35 = por %p33, %p34
      %p36 = scmp.ne.s32.totalorder %s27, %s28
      %p37 = scmp.eq.s32.totalorder %s22, 0
      %p38 = por %p36, %p37
      %p39 = scmp.ne.s32.totalorder %s27, %s28
      %p40 = scmp.eq.s32.totalorder %s23, 2
      %p41 = por %p39, %p40
      %p43 = scmp.ne.s32.totalorder %s28, %s42
      %p44 = scmp.eq.s32.totalorder %s23, 0
      %p45 = por %p43, %p44
      %s47 = sadd.s32 %s46, 1
      %p50 = scmp.eq.s32.totalorder %s17, 2
      %p51 = scmp.ne.s32.totalorder %s46, %s48
      %p52 = scmp.eq.s32.totalorder %s17, 0
      %p53 = por %p51, %p52
      %p54 = scmp.ne.s32.totalorder %s46, %s48
      %p55 = scmp.eq.s32.totalorder %s22, 2
      %p56 = por %p54, %p55
      %p57 = scmp.ne.s32.totalorder %s48, %s49
      %p58 = scmp.eq.s32.totalorder %s22, 0
      %p59 = por %p57, %p58
      %p60 = scmp.ne.s32.totalorder %s48, %s49
      %p61 = scmp.eq.s32.totalorder %s23, 2
      %p62 = por %p60, %p61
      %p64 = scmp.ne.s32.totalorder %s49, %s63
      %p65 = scmp.eq.s32.totalorder %s23, 0
      %p66 = por %p64, %p65
      %s67 = ssub.s32 %s17, %s24
      %p68 = scmp.eq.s32.totalorder %s67, 0
      %s70 = sadd.s32 %s69, 1
      %s71 = scalar_select %p68, %s69, %s70
      %p74 = pneg %p68
      %p75 = scmp.eq.s32.totalorder %s17, 2
      %p76 = por %p74, %p75
      %p77 = scmp.ne.s32.totalorder %s69, %s72
      %p78 = scmp.eq.s32.totalorder %s17, 0
      %p79 = por %p77, %p78
      %p80 = scmp.ne.s32.totalorder %s69, %s72
      %p81 = scmp.eq.s32.totalorder %s22, 2
      %p82 = por %p80, %p81
      %p83 = scmp.ne.s32.totalorder %s72, %s73
      %p84 = scmp.eq.s32.totalorder %s22, 0
      %p85 = por %p83, %p84
      %p86 = scmp.ne.s32.totalorder %s72, %s73
      %p87 = scmp.eq.s32.totalorder %s23, 2
      %p88 = por %p86, %p87
      %p90 = scmp.ne.s32.totalorder %s73, %s89
      %p91 = scmp.eq.s32.totalorder %s23, 0
      %p92 = por %p90, %p91
      %s93 = ssub.s32 %s17, %s24
      %p94 = scmp.eq.s32.totalorder %s93, 0
      %s96 = sadd.s32 %s95, 1
      %s97 = scalar_select %p94, %s95, %s96
      %p100 = pneg %p94
      %p101 = scmp.eq.s32.totalorder %s17, 2
      %p102 = por %p100, %p101
      %p103 = scmp.ne.s32.totalorder %s95, %s98
      %p104 = scmp.eq.s32.totalorder %s17, 0
      %p105 = por %p103, %p104
      %p106 = scmp.ne.s32.totalorder %s95, %s98
      %p107 = scmp.eq.s32.totalorder %s22, 2
      %p108 = por %p106, %p107
      %p109 = scmp.ne.s32.totalorder %s98, %s99
      %p110 = scmp.eq.s32.totalorder %s22, 0
      %p111 = por %p109, %p110
      %p112 = scmp.ne.s32.totalorder %s98, %s99
      %p113 = scmp.eq.s32.totalorder %s23, 2
      %p114 = por %p112, %p113
      %p116 = scmp.ne.s32.totalorder %s99, %s115
      %p117 = scmp.eq.s32.totalorder %s23, 0
      %p118 = por %p116, %p117
      %s119 = ssub.s32 %s17, %s24
      %p120 = scmp.eq.s32.totalorder %s119, 0
      %s122 = sadd.s32 %s121, 1
      %s123 = scalar_select %p120, %s121, %s122
      %p126 = pneg %p120
      %p127 = scmp.eq.s32.totalorder %s17, 2
      %p128 = por %p126, %p127
      %p129 = scmp.ne.s32.totalorder %s121, %s124
      %p130 = scmp.eq.s32.totalorder %s17, 0
      %p131 = por %p129, %p130
      %p132 = scmp.ne.s32.totalorder %s121, %s124
      %p133 = scmp.eq.s32.totalorder %s22, 2
      %p134 = por %p132, %p133
      %p135 = scmp.ne.s32.totalorder %s124, %s125
      %p136 = scmp.eq.s32.totalorder %s22, 0
      %p137 = por %p135, %p136
      %p138 = scmp.ne.s32.totalorder %s124, %s125
      %p139 = scmp.eq.s32.totalorder %s23, 2
      %p140 = por %p138, %p139
      %p142 = scmp.ne.s32.totalorder %s125, %s141
      %p143 = scmp.eq.s32.totalorder %s23, 0
      %p144 = por %p142, %p143
      %s145 = ssub.s32 %s17, %s24
      %p146 = scmp.eq.s32.totalorder %s145, 0
      %s148 = sadd.s32 %s147, 1
      %s149 = scalar_select %p146, %s147, %s148
      %p152 = pneg %p146
      %p153 = scmp.eq.s32.totalorder %s17, 2
      %p154 = por %p152, %p153
      %p155 = scmp.ne.s32.totalorder %s147, %s150
      %p156 = scmp.eq.s32.totalorder %s17, 0
      %p157 = por %p155, %p156
      %p158 = scmp.ne.s32.totalorder %s147, %s150
      %p159 = scmp.eq.s32.totalorder %s22, 2
      %p160 = por %p158, %p159
      %p161 = scmp.ne.s32.totalorder %s150, %s151
      %p162 = scmp.eq.s32.totalorder %s22, 0
      %p163 = por %p161, %p162
      %p164 = scmp.ne.s32.totalorder %s150, %s151
      %p165 = scmp.eq.s32.totalorder %s23, 2
      %p166 = por %p164, %p165
      %p168 = scmp.ne.s32.totalorder %s151, %s167
      %p169 = scmp.eq.s32.totalorder %s23, 0
      %p170 = por %p168, %p169
      %s171 = ssub.s32 %s17, %s24
      %p172 = scmp.eq.s32.totalorder %s171, 0
      %s174 = sadd.s32 %s173, 1
      %s175 = scalar_select %p172, %s173, %s174
      %p178 = pneg %p172
      %p179 = scmp.eq.s32.totalorder %s17, 2
      %p180 = por %p178, %p179
      %p181 = scmp.ne.s32.totalorder %s173, %s176
      %p182 = scmp.eq.s32.totalorder %s17, 0
      %p183 = por %p181, %p182
      %p184 = scmp.ne.s32.totalorder %s173, %s176
      %p185 = scmp.eq.s32.totalorder %s22, 2
      %p186 = por %p184, %p185
      %p187 = scmp.ne.s32.totalorder %s176, %s177
      %p188 = scmp.eq.s32.totalorder %s22, 0
      %p189 = por %p187, %p188
      %p190 = scmp.ne.s32.totalorder %s176, %s177
      %p191 = scmp.eq.s32.totalorder %s23, 2
      %p192 = por %p190, %p191
      %p194 = scmp.ne.s32.totalorder %s177, %s193
      %p195 = scmp.eq.s32.totalorder %s23, 0
      %p196 = por %p194, %p195
      %s197 = ssub.s32 %s17, %s24
      %p198 = scmp.eq.s32.totalorder %s197, 0
      %s200 = sadd.s32 %s199, 1
      %s201 = scalar_select %p198, %s199, %s200
      %p204 = pneg %p198
      %p205 = scmp.eq.s32.totalorder %s17, 2
      %p206 = por %p204, %p205
      %p207 = scmp.ne.s32.totalorder %s199, %s202
      %p208 = scmp.eq.s32.totalorder %s17, 0
      %p209 = por %p207, %p208
      %p210 = scmp.ne.s32.totalorder %s199, %s202
      %p211 = scmp.eq.s32.totalorder %s22, 2
      %p212 = por %p210, %p211
      %p213 = scmp.ne.s32.totalorder %s202, %s203
      %p214 = scmp.eq.s32.totalorder %s22, 0
      %p215 = por %p213, %p214
      %p216 = scmp.ne.s32.totalorder %s202, %s203
      %p217 = scmp.eq.s32.totalorder %s23, 2
      %p218 = por %p216, %p217
      %p220 = scmp.ne.s32.totalorder %s203, %s219
      %p221 = scmp.eq.s32.totalorder %s23, 0
      %p222 = por %p220, %p221
      %s224 = sadd.s32 %s223, 1
      %p227 = scmp.eq.s32.totalorder %s17, 2
      %p228 = scmp.ne.s32.totalorder %s223, %s225
      %p229 = scmp.eq.s32.totalorder %s17, 0
      %p230 = por %p228, %p229
      %p231 = scmp.ne.s32.totalorder %s223, %s225
      %p232 = scmp.eq.s32.totalorder %s22, 2
      %p233 = por %p231, %p232
      %p234 = scmp.ne.s32.totalorder %s225, %s226
      %p235 = scmp.eq.s32.totalorder %s22, 0
      %p236 = por %p234, %p235
      %p237 = scmp.ne.s32.totalorder %s225, %s226
      %p238 = scmp.eq.s32.totalorder %s23, 2
      %p239 = por %p237, %p238
      %p241 = scmp.ne.s32.totalorder %s226, %s240
      %p242 = scmp.eq.s32.totalorder %s23, 0
      %p243 = por %p241, %p242
      %s245 = sadd.s32 %s244, 1
      %p248 = scmp.eq.s32.totalorder %s17, 2
      %p249 = scmp.ne.s32.totalorder %s244, %s246
      %p250 = scmp.eq.s32.totalorder %s17, 0
      %p251 = por %p249, %p250
      %p252 = scmp.ne.s32.totalorder %s244, %s246
      %p253 = scmp.eq.s32.totalorder %s22, 2
      %p254 = por %p252, %p253
      %p255 = scmp.ne.s32.totalorder %s246, %s247
      %p256 = scmp.eq.s32.totalorder %s22, 0
      %p257 = por %p255, %p256
      %p258 = scmp.ne.s32.totalorder %s246, %s247
      %p259 = scmp.eq.s32.totalorder %s23, 2
      %p260 = por %p258, %p259
      %p262 = scmp.ne.s32.totalorder %s247, %s261
      %p263 = scmp.eq.s32.totalorder %s23, 0
      %p264 = por %p262, %p263
      %s266 = sadd.s32 %s265, 1
      %p269 = scmp.eq.s32.totalorder %s17, 2
      %p270 = scmp.ne.s32.totalorder %s265, %s267
      %p271 = scmp.eq.s32.totalorder %s17, 0
      %p272 = por %p270, %p271
      %p273 = scmp.ne.s32.totalorder %s265, %s267
      %p274 = scmp.eq.s32.totalorder %s22, 2
      %p275 = por %p273, %p274
      %p276 = scmp.ne.s32.totalorder %s267, %s268
      %p277 = scmp.eq.s32.totalorder %s22, 0
      %p278 = por %p276, %p277
      %p279 = scmp.ne.s32.totalorder %s267, %s268
      %p280 = scmp.eq.s32.totalorder %s23, 2
      %p281 = por %p279, %p280
      %p283 = scmp.ne.s32.totalorder %s268, %s282
      %p284 = scmp.eq.s32.totalorder %s23, 0
      %p285 = por %p283, %p284
      %p286 = scmp.le.s32.totalorder 1, %s17
      %p287 = scmp.lt.s32.totalorder %s17, 4
      %p288 = pnand %p286, %p287
      %p289 = pneg %p288
      // Predicated region
      $region9: #{tpu_custom_call.1} parent=5 // pred_check
        _
      $region10: #{tpu_custom_call.1} parent=5 // pred_check_branch
        %291 = sbr.rel (%p288) target = $region12
      $region11: #{tpu_custom_call.1} parent=5 // pred_region
        %s292 = ssub.s32 %s17, 1
        // Predicated region
        $region13: #{tpu_custom_call.1} parent=11 // pred_check
          %p293 = pneg %p38
        $region14: #{tpu_custom_call.1} parent=11 // pred_check_branch
          %295 = sbr.rel (%p293) target = $region16
        $region15: #{tpu_custom_call.1} parent=11 // pred_region
          _
        $region16: #{tpu_custom_call.1} parent=11 // pred_fallthru
          _
        // Predicated region
        $region17: #{tpu_custom_call.1} parent=11 // pred_check
          %p296 = pneg %p59
        $region18: #{tpu_custom_call.1} parent=11 // pred_check_branch
          %298 = sbr.rel (%p296) target = $region20
        $region19: #{tpu_custom_call.1} parent=11 // pred_region
          _
        $region20: #{tpu_custom_call.1} parent=11 // pred_fallthru
          _
        // Predicated region
        $region21: #{tpu_custom_call.1} parent=11 // pred_check
          %p299 = pneg %p236
        $region22: #{tpu_custom_call.1} parent=11 // pred_check_branch
          %301 = sbr.rel (%p299) target = $region24
        $region23: #{tpu_custom_call.1} parent=11 // pred_region
          _
        $region24: #{tpu_custom_call.1} parent=11 // pred_fallthru
          _
        // Predicated region
        $region25: #{tpu_custom_call.1} parent=11 // pred_check
          %p302 = pneg %p257
        $region26: #{tpu_custom_call.1} parent=11 // pred_check_branch
          %304 = sbr.rel (%p302) target = $region28
        $region27: #{tpu_custom_call.1} parent=11 // pred_region
          _
        $region28: #{tpu_custom_call.1} parent=11 // pred_fallthru
          _
      $region12: #{tpu_custom_call.1} parent=5 // pred_fallthru
        _
      %p305 = scmp.lt.s32.totalorder %s17, 3
      // Predicated region
      $region29: #{tpu_custom_call.1} parent=5 // pred_check
        %p306 = pneg %p305
      $region30: #{tpu_custom_call.1} parent=5 // pred_check_branch
        %308 = sbr.rel (%p306) target = $region32
      $region31: #{tpu_custom_call.1} parent=5 // pred_region
        // Predicated region
        $region33: #{tpu_custom_call.1} parent=31 // pred_check
          %p309 = pneg %p79
        $region34: #{tpu_custom_call.1} parent=31 // pred_check_branch
          %311 = sbr.rel (%p309) target = $region36
        $region35: #{tpu_custom_call.1} parent=31 // pred_region
          %p312 = scmp.lt.s32.totalorder %s17, 2
          %s313 = scalar_select %p312, %s17, 2
          %s314 = smul.addr %s313, 15
          %s315 = smul.addr %s314, 4
          %s316 = scalar_lea.vmem %s2, %s315
        $region36: #{tpu_custom_call.1} parent=31 // pred_fallthru
          _
        // Predicated region
        $region37: #{tpu_custom_call.1} parent=31 // pred_check
          %p317 = pneg %p105
        $region38: #{tpu_custom_call.1} parent=31 // pred_check_branch
          %319 = sbr.rel (%p317) target = $region40
        $region39: #{tpu_custom_call.1} parent=31 // pred_region
          %p320 = scmp.lt.s32.totalorder %s17, 2
          %s321 = scalar_select %p320, %s17, 2
          %s322 = smul.addr %s321, 5
          %s323 = smul.addr %s322, 4
          %s324 = scalar_lea.vmem %s3, %s323
        $region40: #{tpu_custom_call.1} parent=31 // pred_fallthru
          _
        // Predicated region
        $region41: #{tpu_custom_call.1} parent=31 // pred_check
          %p325 = pneg %p131
        $region42: #{tpu_custom_call.1} parent=31 // pred_check_branch
          %327 = sbr.rel (%p325) target = $region44
        $region43: #{tpu_custom_call.1} parent=31 // pred_region
          %p328 = scmp.lt.s32.totalorder %s17, 2
          %s329 = scalar_select %p328, %s17, 2
          %s330 = smul.addr %s329, 2
          %s331 = smul.addr %s330, 8
          %s332 = scalar_lea.vmem %s4, %s331
        $region44: #{tpu_custom_call.1} parent=31 // pred_fallthru
          _
        // Predicated region
        $region45: #{tpu_custom_call.1} parent=31 // pred_check
          %p333 = pneg %p157
        $region46: #{tpu_custom_call.1} parent=31 // pred_check_branch
          %335 = sbr.rel (%p333) target = $region48
        $region47: #{tpu_custom_call.1} parent=31 // pred_region
          %p336 = scmp.lt.s32.totalorder %s17, 2
          %s337 = scalar_select %p336, %s17, 2
          %s338 = smul.addr %s337, 80
          %s339 = smul.addr %s338, 4
          %s340 = scalar_lea.vmem %s5, %s339
        $region48: #{tpu_custom_call.1} parent=31 // pred_fallthru
          _
        // Predicated region
        $region49: #{tpu_custom_call.1} parent=31 // pred_check
          %p341 = pneg %p183
        $region50: #{tpu_custom_call.1} parent=31 // pred_check_branch
          %343 = sbr.rel (%p341) target = $region52
        $region51: #{tpu_custom_call.1} parent=31 // pred_region
          %p344 = scmp.lt.s32.totalorder %s17, 2
          %s345 = scalar_select %p344, %s17, 2
          %s346 = smul.addr %s345, 16
          %s347 = scalar_lea.vmem %s6, %s346
        $region52: #{tpu_custom_call.1} parent=31 // pred_fallthru
          _
        // Predicated region
        $region53: #{tpu_custom_call.1} parent=31 // pred_check
          %p348 = pneg %p209
        $region54: #{tpu_custom_call.1} parent=31 // pred_check_branch
          %350 = sbr.rel (%p348) target = $region56
        $region55: #{tpu_custom_call.1} parent=31 // pred_region
          %p351 = scmp.lt.s32.totalorder %s17, 2
          %s352 = scalar_select %p351, %s17, 2
          %s353 = smul.addr %s352, 256
          %s354 = smul.addr %s353, 4
          %s355 = scalar_lea.vmem %s7, %s354
        $region56: #{tpu_custom_call.1} parent=31 // pred_fallthru
          _
      $region32: #{tpu_custom_call.1} parent=5 // pred_fallthru
        _
      %p356 = scmp.le.s32.totalorder 1, %s17
      %p357 = scmp.lt.s32.totalorder %s17, 4
      %p358 = pnand %p356, %p357
      %p359 = pneg %p358
      // Predicated region
      $region57: #{tpu_custom_call.1} parent=5 // pred_check
        _
      $region58: #{tpu_custom_call.1} parent=5 // pred_check_branch
        %361 = sbr.rel (%p358) target = $region60
      $region59: #{tpu_custom_call.1} parent=5 // pred_region
        %s362 = ssub.s32 %s17, 1
        %p363 = pneg %p38
        %p364 = pneg %p35
        %p365 = pneg %p59
        %p366 = pneg %p56
        %p367 = scmp.lt.s32.totalorder %s22, 2
        %s368 = scalar_select %p367, %s22, 2
        %s369 = smul.addr %s368, 15
        %s370 = smul.addr %s369, 4
        %s371 = scalar_lea.vmem %s2, %s370
        %p372 = pneg %p85
        %p373 = pneg %p82
        %p374 = scmp.lt.s32.totalorder %s22, 2
        %s375 = scalar_select %p374, %s22, 2
        %s376 = smul.addr %s375, 5
        %s377 = smul.addr %s376, 4
        %s378 = scalar_lea.vmem %s3, %s377
        %p379 = pneg %p111
        %p380 = pneg %p108
        %p381 = scmp.lt.s32.totalorder %s22, 2
        %s382 = scalar_select %p381, %s22, 2
        %s383 = smul.addr %s382, 2
        %s384 = smul.addr %s383, 8
        %s385 = scalar_lea.vmem %s4, %s384
        %p386 = pneg %p137
        %p387 = pneg %p134
        %p388 = scmp.lt.s32.totalorder %s22, 2
        %s389 = scalar_select %p388, %s22, 2
        %s390 = smul.addr %s389, 80
        %s391 = smul.addr %s390, 4
        %s392 = scalar_lea.vmem %s5, %s391
        %p393 = pneg %p163
        %p394 = pneg %p160
        %p395 = scmp.lt.s32.totalorder %s22, 2
        %s396 = scalar_select %p395, %s22, 2
        %s397 = smul.addr %s396, 16
        %s398 = scalar_lea.vmem %s6, %s397
        %p399 = pneg %p189
        %p400 = pneg %p186
        %p401 = scmp.lt.s32.totalorder %s22, 2
        %s402 = scalar_select %p401, %s22, 2
        %s403 = smul.addr %s402, 256
        %s404 = smul.addr %s403, 4
        %s405 = scalar_lea.vmem %s7, %s404
        %p406 = pneg %p215
        %p407 = pneg %p212
        %p408 = pneg %p236
        %p409 = pneg %p233
        %p410 = pneg %p257
        %p411 = pneg %p254
        %p412 = pneg %p278
        %p413 = pneg %p275
        %p414 = scmp.lt.s32.totalorder %s22, 2
        %s415 = scalar_select %p414, %s22, 2
        %s416 = smul.addr %s415, 15
        %s417 = smul.addr %s416, 4
        %s418 = scalar_lea.vmem %s2, %s417
        %p419 = scmp.lt.s32.totalorder %s22, 2
        %s420 = scalar_select %p419, %s22, 2
        %s421 = smul.addr %s420, 5
        %s422 = smul.addr %s421, 4
        %s423 = scalar_lea.vmem %s3, %s422
        %p424 = scmp.lt.s32.totalorder %s22, 2
        %s425 = scalar_select %p424, %s22, 2
        %s426 = smul.addr %s425, 2
        %s427 = smul.addr %s426, 8
        %s428 = scalar_lea.vmem %s4, %s427
        %p429 = scmp.lt.s32.totalorder %s22, 2
        %s430 = scalar_select %p429, %s22, 2
        %s431 = smul.addr %s430, 80
        %s432 = smul.addr %s431, 4
        %s433 = scalar_lea.vmem %s5, %s432
        %p434 = scmp.lt.s32.totalorder %s22, 2
        %s435 = scalar_select %p434, %s22, 2
        %s436 = smul.addr %s435, 16
        %s437 = scalar_lea.vmem %s6, %s436
        %p438 = scmp.lt.s32.totalorder %s22, 2
        %s439 = scalar_select %p438, %s22, 2
        %s440 = smul.addr %s439, 256
        %s441 = smul.addr %s440, 4
        %s442 = scalar_lea.vmem %s7, %s441
        %p444 = scmp.eq.s32.totalorder %s22, 0
        // Predicated region
        $region61: #{tpu_custom_call.1} parent=59 // pred_check
          %p445 = pneg %p444
        $region62: #{tpu_custom_call.1} parent=59 // pred_check_branch
          %447 = sbr.rel (%p445) target = $region64
        $region63: #{tpu_custom_call.1} parent=59 // pred_region
          %v448 = vld [vmem:[%s0] sm:$0xff]
          %vm449 = vcmask 326656
          %450 = vst.msk [vmem:[#allocation2] sm:$0xff] %vm449, %v448
        $region64: #{tpu_custom_call.1} parent=59 // pred_fallthru
          _
        %v451 = vld [vmem:[#allocation2] sm:$0xff]
        %v452 = vld [vmem:[%s1] sm:$0xff]
        %v453 = vld [vmem:[%s1 + $0x8] sm:$0xff]
        %v454 = vld [vmem:[%s1 + $0x10] sm:$0xff]
        %v455 = vld [vmem:[%s1 + $0x18] sm:$0xff]
        %v456 = vld [vmem:[%s1 + $0x20] sm:$0xff]
        %v457 = vld [vmem:[%s1 + $0x28] sm:$0xff]
        %v458 = vld [vmem:[%s1 + $0x30] sm:$0xff]
        %v459 = vld [vmem:[%s1 + $0x38] sm:$0xff]
        %v460 = vld [vmem:[%s1 + $0x40] sm:$0xff]
        %v461 = vld [vmem:[%s1 + $0x48] sm:$0xff]
        %v462 = vld [vmem:[%s428] sm:$0xff]
        %v463 = vld [vmem:[%s428 + $0x8] sm:$0xff]
        %v464 = vpack.c.bf16 %v451, %v451
        %v465 = vld [vmem:[%s418] sm:$0xff]
        %v466 = vld [vmem:[%s418 + $0x8] sm:$0xf]
        %v467 = vld [vmem:[%s418 + $0xc] sm:$0xff]
        %v468 = vld [vmem:[%s418 + $0x14] sm:$0xf]
        %v469 = vld [vmem:[%s418 + $0x18] sm:$0xff]
        %v470 = vld [vmem:[%s418 + $0x20] sm:$0xf]
        %v471 = vld [vmem:[%s418 + $0x24] sm:$0xff]
        %v472 = vld [vmem:[%s418 + $0x2c] sm:$0xf]
        %v473 = vld [vmem:[%s418 + $0x30] sm:$0xff]
        %v474 = vld [vmem:[%s418 + $0x38] sm:$0xf]
        %v485 = vunpack.c.l.b16 %v465
        %v486 = vunpack.c.h.b16 %v465
        %v487 = vunpack.c.l.b16 %v466
        %v488 = vunpack.c.l.b16 %v467
        %v489 = vunpack.c.h.b16 %v467
        %v490 = vunpack.c.l.b16 %v468
        %v491 = vunpack.c.l.b16 %v469
        %v492 = vunpack.c.h.b16 %v469
        %v493 = vunpack.c.l.b16 %v470
        %v494 = vunpack.c.l.b16 %v471
        %v495 = vunpack.c.h.b16 %v471
        %v496 = vunpack.c.l.b16 %v472
        %v497 = vunpack.c.l.b16 %v473
        %v498 = vunpack.c.h.b16 %v473
        %v499 = vunpack.c.l.b16 %v474
        %v500 = vpack.c.b16 %v488, %v485
        %v501 = vpack.c.b16 %v489, %v486
        %v502 = vpack.c.b16 %v490, %v487
        %v503 = vpack.c.b16 %v494, %v491
        %v504 = vpack.c.b16 %v495, %v492
        %v505 = vpack.c.b16 %v496, %v493
        %v506 = vpack.c.b16 %v497, %v497
        %v507 = vpack.c.b16 %v498, %v498
        %v508 = vpack.c.b16 %v499, %v499
        %vm515 = vcmask 326656
        %v517 = vsel %vm515, %v464, 0
        %vm519 = vcmask 1043456
        %v521 = vsel %vm519, %v506, 0
        %v524 = vsel %vm519, %v507, 0
        %v527 = vsel %vm519, %v508, 0
        %529 = vmatprep.subr.bf16.mxu0 0
        %530 = vmatpush1.bf16.msra.mxu0 0
        %531 = vmatprep.subr.bf16.mxu0 0
        %532 = vmatpush1.bf16.msra.mxu0 0
        %533 = vmatprep.subr.bf16.mxu0 0
        %534 = vmatpush1.bf16.msra.mxu0 0
        %535 = vmatprep.subr.bf16.mxu0 0
        %536 = vmatpush1.bf16.msra.mxu0 0
        %537 = vmatprep.subr.bf16.mxu0 0
        %538 = vmatpush1.bf16.msra.mxu0 0
        %539 = vmatprep.subr.bf16.mxu0 %v524
        %540 = vmatpush1.bf16.msra.mxu0 %v521
        %541 = vmatprep.subr.bf16.mxu0 %v504
        %542 = vmatpush1.bf16.msra.mxu0 %v503
        %543 = vmatprep.subr.bf16.mxu0 %v501
        %544 = vmatpush1.bf16.msra.mxu0 %v500
        %545 = vmatprep.subr.bf16.mxu0 0
        %546 = vmatpush2.bf16.msra.mxu0 0
        %547 = vmatprep.subr.bf16.mxu0 0
        %548 = vmatpush2.bf16.msra.mxu0 0
        %549 = vmatprep.subr.bf16.mxu0 0
        %550 = vmatpush2.bf16.msra.mxu0 0
        %551 = vmatprep.subr.bf16.mxu0 0
        %552 = vmatpush2.bf16.msra.mxu0 0
        %553 = vmatprep.subr.bf16.mxu0 0
        %554 = vmatpush2.bf16.msra.mxu0 0
        %555 = vmatprep.subr.bf16.mxu0 0
        %556 = vmatpush2.bf16.msra.mxu0 0
        %557 = vmatprep.subr.bf16.mxu0 0
        %558 = vmatpush2.bf16.msra.mxu0 0
        %559 = vmatprep.subr.bf16.mxu0 0
        %560 = vmatpush2.bf16.msra.mxu0 0
        %561 = vmatprep.mubr.bf16.mxu0 0
        %562 = vmatmul.mubr.bf16.gmra.mxu0 %v517
        %v563 = vpop.f32.mrf.mxu0
        %v564 = vadd.f32 0.0, %v563
        %v565 = vpop.f32.mrf.mxu0
        %v566 = vadd.f32 0.0, %v565
        %v567 = vpop.f32.mrf.mxu0
        %v568 = vpop.f32.mrf.mxu0
        %569 = vdwg.mxu0
        %570 = vmatprep.subr.bf16.mxu0 0
        %571 = vmatpush1.bf16.msra.mxu0 0
        %572 = vmatprep.subr.bf16.mxu0 0
        %573 = vmatpush1.bf16.msra.mxu0 0
        %574 = vmatprep.subr.bf16.mxu0 0
        %575 = vmatpush1.bf16.msra.mxu0 0
        %576 = vmatprep.subr.bf16.mxu0 0
        %577 = vmatpush1.bf16.msra.mxu0 0
        %578 = vmatprep.subr.bf16.mxu0 0
        %579 = vmatpush1.bf16.msra.mxu0 0
        %580 = vmatprep.subr.bf16.mxu0 0
        %581 = vmatpush1.bf16.msra.mxu0 %v527
        %582 = vmatprep.subr.bf16.mxu0 0
        %583 = vmatpush1.bf16.msra.mxu0 %v505
        %584 = vmatprep.subr.bf16.mxu0 0
        %585 = vmatpush1.bf16.msra.mxu0 %v502
        %586 = vmatprep.subr.bf16.mxu0 0
        %587 = vmatpush2.bf16.msra.mxu0 0
        %588 = vmatprep.subr.bf16.mxu0 0
        %589 = vmatpush2.bf16.msra.mxu0 0
        %590 = vmatprep.subr.bf16.mxu0 0
        %591 = vmatpush2.bf16.msra.mxu0 0
        %592 = vmatprep.subr.bf16.mxu0 0
        %593 = vmatpush2.bf16.msra.mxu0 0
        %594 = vmatprep.subr.bf16.mxu0 0
        %595 = vmatpush2.bf16.msra.mxu0 0
        %596 = vmatprep.subr.bf16.mxu0 0
        %597 = vmatpush2.bf16.msra.mxu0 0
        %598 = vmatprep.subr.bf16.mxu0 0
        %599 = vmatpush2.bf16.msra.mxu0 0
        %600 = vmatprep.subr.bf16.mxu0 0
        %601 = vmatpush2.bf16.msra.mxu0 0
        %602 = vmatprep.mubr.bf16.mxu0 0
        %603 = vmatmul.mubr.bf16.gmra.mxu0 %v517
        %v604 = vpop.f32.mrf.mxu0
        %v605 = vadd.f32 0.0, %v604
        %v606 = vpop.f32.mrf.mxu0
        %v607 = vpop.f32.mrf.mxu0
        %v608 = vpop.f32.mrf.mxu0
        %609 = vdwg.mxu0
        %v610 = vlaneseq
        %v611 = vshrl.u32 %v610, 7
        %v612 = vsub.s32 0, %v611
        %v613 = vrot.slane %v462, %v612
        %v614 = vadd.f32 %v564, %v613
        %v615 = vlaneseq
        %v616 = vshrl.u32 %v615, 7
        %v617 = vsub.s32 1, %v616
        %v618 = vrot.slane %v462, %v617
        %v619 = vadd.f32 %v566, %v618
        %v620 = vlaneseq
        %v621 = vshrl.u32 %v620, 7
        %v622 = vsub.s32 2, %v621
        %v623 = vrot.slane %v462, %v622
        %v624 = vadd.f32 %v605, %v623
        %v625 = vmul.f32 %v614, %v452
        %v626 = vmul.f32 %v614, %v453
        %v627 = vmul.f32 %v614, %v454
        %v628 = vmul.f32 %v614, %v455
        %v629 = vmul.f32 %v614, %v456
        %v630 = vmul.f32 %v614, %v457
        %v631 = vmul.f32 %v614, %v458
        %v632 = vmul.f32 %v614, %v459
        %v633 = vmul.f32 %v614, %v460
        %v634 = vmul.f32 %v614, %v461
        %v636 = vsel %vm515, %v625, 0
        %v639 = vsel %vm515, %v626, 0
        %v642 = vsel %vm515, %v627, 0
        %v645 = vsel %vm515, %v628, 0
        %v648 = vsel %vm515, %v629, 0
        %v651 = vsel %vm515, %v630, 0
        %v654 = vsel %vm515, %v631, 0
        %v657 = vsel %vm515, %v632, 0
        %v660 = vsel %vm515, %v633, 0
        %v663 = vsel %vm515, %v634, 0
        %v666 = vsel %vm515, %v619, 0
        %668 = vmatprep.subr.mxu0 0.0
        %669 = vmatpush1.xpose.msra.mxu0 0.0
        %670 = vmatprep.subr.mxu0 0.0
        %671 = vmatpush1.xpose.msra.mxu0 0.0
        %672 = vmatprep.subr.mxu0 0.0
        %673 = vmatpush1.xpose.msra.mxu0 0.0
        %674 = vmatprep.subr.mxu0 0.0
        %675 = vmatpush1.xpose.msra.mxu0 0.0
        %676 = vmatprep.subr.mxu0 0.0
        %677 = vmatpush1.xpose.msra.mxu0 0.0
        %678 = vmatprep.subr.mxu0 0.0
        %679 = vmatpush1.xpose.msra.mxu0 0.0
        %680 = vmatprep.subr.mxu0 0.0
        %681 = vmatpush1.xpose.msra.mxu0 0.0
        %682 = vmatprep.subr.mxu0 0.0
        %683 = vmatpush1.xpose.msra.mxu0 0.0
        %684 = vmatprep.subr.mxu0 0.0
        %685 = vmatpush1.xpose.msra.mxu0 0.0
        %686 = vmatprep.subr.mxu0 0.0
        %687 = vmatpush1.xpose.msra.mxu0 0.0
        %688 = vmatprep.subr.mxu0 0.0
        %689 = vmatpush1.xpose.msra.mxu0 0.0
        %690 = vmatprep.subr.mxu0 0.0
        %691 = vmatpush1.xpose.msra.mxu0 0.0
        %692 = vmatprep.subr.mxu0 0.0
        %693 = vmatpush1.xpose.msra.mxu0 0.0
        %694 = vmatprep.subr.mxu0 0.0
        %695 = vmatpush1.xpose.msra.mxu0 0.0
        %696 = vmatprep.subr.mxu0 0.0
        %697 = vmatpush1.xpose.msra.mxu0 0.0
        %698 = vmatprep.subr.mxu0 0.0
        %699 = vmatpush1.xpose.msra.mxu0 %v666
        %700 = vmatprep.subr.mxu0 0.0
        %701 = vmatpush2.xpose.msra.mxu0 0.0
        %702 = vmatprep.subr.mxu0 0.0
        %703 = vmatpush2.xpose.msra.mxu0 0.0
        %704 = vmatprep.subr.mxu0 0.0
        %705 = vmatpush2.xpose.msra.mxu0 0.0
        %706 = vmatprep.subr.mxu0 0.0
        %707 = vmatpush2.xpose.msra.mxu0 0.0
        %708 = vmatprep.subr.mxu0 0.0
        %709 = vmatpush2.xpose.msra.mxu0 0.0
        %710 = vmatprep.subr.mxu0 0.0
        %711 = vmatpush2.xpose.msra.mxu0 0.0
        %712 = vmatprep.subr.mxu0 0.0
        %713 = vmatpush2.xpose.msra.mxu0 0.0
        %714 = vmatprep.subr.mxu0 0.0
        %715 = vmatpush2.xpose.msra.mxu0 0.0
        %716 = vmatprep.subr.mxu0 0.0
        %717 = vmatpush2.xpose.msra.mxu0 0.0
        %718 = vmatprep.subr.mxu0 0.0
        %719 = vmatpush2.xpose.msra.mxu0 0.0
        %720 = vmatprep.subr.mxu0 0.0
        %721 = vmatpush2.xpose.msra.mxu0 0.0
        %722 = vmatprep.subr.mxu0 0.0
        %723 = vmatpush2.xpose.msra.mxu0 0.0
        %724 = vmatprep.subr.mxu0 0.0
        %725 = vmatpush2.xpose.msra.mxu0 0.0
        %726 = vmatprep.subr.mxu0 0.0
        %727 = vmatpush2.xpose.msra.mxu0 0.0
        %728 = vmatprep.subr.mxu0 0.0
        %729 = vmatpush2.xpose.msra.mxu0 0.0
        %730 = vmatprep.subr.mxu0 0.0
        %731 = vmatpush2.xpose.msra.mxu0 0.0
        %732 = vmatprep.mubr.f32.mxu0 0.0
        %733 = vmatmul.mubr.f32.gmra.mxu0 %v636
        %v734 = vpop.f32.mrf.mxu0
        %v735 = vadd.f32 0.0, %v734
        %v736 = vpop.f32.mrf.mxu0
        %737 = vmatprep.mubr.f32.mxu0 0.0
        %738 = vmatmul.mubr.f32.gmra.mxu0 %v639
        %v739 = vpop.f32.mrf.mxu0
        %v740 = vadd.f32 0.0, %v739
        %v741 = vpop.f32.mrf.mxu0
        %742 = vmatprep.mubr.f32.mxu0 0.0
        %743 = vmatmul.mubr.f32.gmra.mxu0 %v642
        %v744 = vpop.f32.mrf.mxu0
        %v745 = vadd.f32 0.0, %v744
        %v746 = vpop.f32.mrf.mxu0
        %747 = vmatprep.mubr.f32.mxu0 0.0
        %748 = vmatmul.mubr.f32.gmra.mxu0 %v645
        %v749 = vpop.f32.mrf.mxu0
        %v750 = vadd.f32 0.0, %v749
        %v751 = vpop.f32.mrf.mxu0
        %752 = vmatprep.mubr.f32.mxu0 0.0
        %753 = vmatmul.mubr.f32.gmra.mxu0 %v648
        %v754 = vpop.f32.mrf.mxu0
        %v755 = vadd.f32 0.0, %v754
        %v756 = vpop.f32.mrf.mxu0
        %757 = vmatprep.mubr.f32.mxu0 0.0
        %758 = vmatmul.mubr.f32.gmra.mxu0 %v651
        %v759 = vpop.f32.mrf.mxu0
        %v760 = vadd.f32 0.0, %v759
        %v761 = vpop.f32.mrf.mxu0
        %762 = vmatprep.mubr.f32.mxu0 0.0
        %763 = vmatmul.mubr.f32.gmra.mxu0 %v654
        %v764 = vpop.f32.mrf.mxu0
        %v765 = vadd.f32 0.0, %v764
        %v766 = vpop.f32.mrf.mxu0
        %767 = vmatprep.mubr.f32.mxu0 0.0
        %768 = vmatmul.mubr.f32.gmra.mxu0 %v657
        %v769 = vpop.f32.mrf.mxu0
        %v770 = vadd.f32 0.0, %v769
        %v771 = vpop.f32.mrf.mxu0
        %772 = vmatprep.mubr.f32.mxu0 0.0
        %773 = vmatmul.mubr.f32.gmra.mxu0 %v660
        %v774 = vpop.f32.mrf.mxu0
        %v775 = vadd.f32 0.0, %v774
        %v776 = vpop.f32.mrf.mxu0
        %777 = vmatprep.mubr.f32.mxu0 0.0
        %778 = vmatmul.mubr.f32.gmra.mxu0 %v663
        %v779 = vpop.f32.mrf.mxu0
        %v780 = vadd.f32 0.0, %v779
        %v781 = vpop.f32.mrf.mxu0
        %782 = vdwg.mxu0
        %vm783 = vcmask 64512
        %v784 = vsel %vm783, %v735, -inf
        %785 = vmax.xlane.f32.xlu0 %v784
        %v786 = vpop.xlane.xlu0 %785
        %v787 = vsel %vm783, %v740, -inf
        %788 = vmax.xlane.f32.xlu0 %v787
        %v789 = vpop.xlane.xlu0 %788
        %v790 = vsel %vm783, %v745, -inf
        %791 = vmax.xlane.f32.xlu0 %v790
        %v792 = vpop.xlane.xlu0 %791
        %v793 = vsel %vm783, %v750, -inf
        %794 = vmax.xlane.f32.xlu0 %v793
        %v795 = vpop.xlane.xlu0 %794
        %v796 = vsel %vm783, %v755, -inf
        %797 = vmax.xlane.f32.xlu0 %v796
        %v798 = vpop.xlane.xlu0 %797
        %v799 = vsel %vm783, %v760, -inf
        %800 = vmax.xlane.f32.xlu0 %v799
        %v801 = vpop.xlane.xlu0 %800
        %v802 = vsel %vm783, %v765, -inf
        %803 = vmax.xlane.f32.xlu0 %v802
        %v804 = vpop.xlane.xlu0 %803
        %v805 = vsel %vm783, %v770, -inf
        %806 = vmax.xlane.f32.xlu0 %v805
        %v807 = vpop.xlane.xlu0 %806
        %v808 = vsel %vm783, %v775, -inf
        %809 = vmax.xlane.f32.xlu0 %v808
        %v810 = vpop.xlane.xlu0 %809
        %v811 = vsel %vm783, %v780, -inf
        %812 = vmax.xlane.f32.xlu0 %v811
        %v813 = vpop.xlane.xlu0 %812
        %v814 = vsub.f32 %v735, %v786
        %v815 = vsub.f32 %v740, %v789
        %v816 = vsub.f32 %v745, %v792
        %v817 = vsub.f32 %v750, %v795
        %v818 = vsub.f32 %v755, %v798
        %v819 = vsub.f32 %v760, %v801
        %v820 = vsub.f32 %v765, %v804
        %v821 = vsub.f32 %v770, %v807
        %v822 = vsub.f32 %v775, %v810
        %v823 = vsub.f32 %v780, %v813
        %v824 = vmul.f32 %v814, 1.442695
        %v825 = vpow.pop %v824
        %v826 = vmul.f32 %v815, 1.442695
        %v827 = vpow.pop %v826
        %v828 = vmul.f32 %v816, 1.442695
        %v829 = vpow.pop %v828
        %v830 = vmul.f32 %v817, 1.442695
        %v831 = vpow.pop %v830
        %v832 = vmul.f32 %v818, 1.442695
        %v833 = vpow.pop %v832
        %v834 = vmul.f32 %v819, 1.442695
        %v835 = vpow.pop %v834
        %v836 = vmul.f32 %v820, 1.442695
        %v837 = vpow.pop %v836
        %v838 = vmul.f32 %v821, 1.442695
        %v839 = vpow.pop %v838
        %v840 = vmul.f32 %v822, 1.442695
        %v841 = vpow.pop %v840
        %v842 = vmul.f32 %v823, 1.442695
        %v843 = vpow.pop %v842
        %v844 = vsel %vm783, %v825, 0.0
        %845 = vadd.xlane.f32.xlu0 %v844
        %v846 = vpop.xlane.xlu0 %845
        %v847 = vsel %vm783, %v827, 0.0
        %848 = vadd.xlane.f32.xlu0 %v847
        %v849 = vpop.xlane.xlu0 %848
        %v850 = vsel %vm783, %v829, 0.0
        %851 = vadd.xlane.f32.xlu0 %v850
        %v852 = vpop.xlane.xlu0 %851
        %v853 = vsel %vm783, %v831, 0.0
        %854 = vadd.xlane.f32.xlu0 %v853
        %v855 = vpop.xlane.xlu0 %854
        %v856 = vsel %vm783, %v833, 0.0
        %857 = vadd.xlane.f32.xlu0 %v856
        %v858 = vpop.xlane.xlu0 %857
        %v859 = vsel %vm783, %v835, 0.0
        %860 = vadd.xlane.f32.xlu0 %v859
        %v861 = vpop.xlane.xlu0 %860
        %v862 = vsel %vm783, %v837, 0.0
        %863 = vadd.xlane.f32.xlu0 %v862
        %v864 = vpop.xlane.xlu0 %863
        %v865 = vsel %vm783, %v839, 0.0
        %866 = vadd.xlane.f32.xlu0 %v865
        %v867 = vpop.xlane.xlu0 %866
        %v868 = vsel %vm783, %v841, 0.0
        %869 = vadd.xlane.f32.xlu0 %v868
        %v870 = vpop.xlane.xlu0 %869
        %v871 = vsel %vm783, %v843, 0.0
        %872 = vadd.xlane.f32.xlu0 %v871
        %v873 = vpop.xlane.xlu0 %872
        %v874 = vrcp.pop %v846
        %v875 = vrcp.pop %v849
        %v876 = vrcp.pop %v852
        %v877 = vrcp.pop %v855
        %v878 = vrcp.pop %v858
        %v879 = vrcp.pop %v861
        %v880 = vrcp.pop %v864
        %v881 = vrcp.pop %v867
        %v882 = vrcp.pop %v870
        %v883 = vrcp.pop %v873
        %v884 = vmul.f32 %v825, %v874
        %v885 = vmul.f32 %v827, %v875
        %v886 = vmul.f32 %v829, %v876
        %v887 = vmul.f32 %v831, %v877
        %v888 = vmul.f32 %v833, %v878
        %v889 = vmul.f32 %v835, %v879
        %v890 = vmul.f32 %v837, %v880
        %v891 = vmul.f32 %v839, %v881
        %v892 = vmul.f32 %v841, %v882
        %v893 = vmul.f32 %v843, %v883
        %v895 = vsel %vm783, %v884, 0
        %v898 = vsel %vm783, %v885, 0
        %v901 = vsel %vm783, %v886, 0
        %v904 = vsel %vm783, %v887, 0
        %v907 = vsel %vm783, %v888, 0
        %v910 = vsel %vm783, %v889, 0
        %v913 = vsel %vm783, %v890, 0
        %v916 = vsel %vm783, %v891, 0
        %v919 = vsel %vm783, %v892, 0
        %v922 = vsel %vm783, %v893, 0
        %924 = vmatprep.subr.mxu0 0.0
        %925 = vmatpush1.msra.mxu0 0.0
        %926 = vmatprep.subr.mxu0 0.0
        %927 = vmatpush1.msra.mxu0 0.0
        %928 = vmatprep.subr.mxu0 0.0
        %929 = vmatpush1.msra.mxu0 0.0
        %930 = vmatprep.subr.mxu0 0.0
        %931 = vmatpush1.msra.mxu0 0.0
        %932 = vmatprep.subr.mxu0 0.0
        %933 = vmatpush1.msra.mxu0 0.0
        %934 = vmatprep.subr.mxu0 0.0
        %935 = vmatpush1.msra.mxu0 0.0
        %936 = vmatprep.subr.mxu0 0.0
        %937 = vmatpush1.msra.mxu0 0.0
        %938 = vmatprep.subr.mxu0 0.0
        %939 = vmatpush1.msra.mxu0 0.0
        %940 = vmatprep.subr.mxu0 0.0
        %941 = vmatpush1.msra.mxu0 0.0
        %942 = vmatprep.subr.mxu0 0.0
        %943 = vmatpush1.msra.mxu0 0.0
        %944 = vmatprep.subr.mxu0 0.0
        %945 = vmatpush1.msra.mxu0 0.0
        %946 = vmatprep.subr.mxu0 0.0
        %947 = vmatpush1.msra.mxu0 0.0
        %948 = vmatprep.subr.mxu0 0.0
        %949 = vmatpush1.msra.mxu0 0.0
        %950 = vmatprep.subr.mxu0 0.0
        %951 = vmatpush1.msra.mxu0 0.0
        %952 = vmatprep.subr.mxu0 0.0
        %953 = vmatpush1.msra.mxu0 0.0
        %954 = vmatprep.subr.mxu0 0.0
        %955 = vmatpush1.msra.mxu0 %v624
        %956 = vmatprep.subr.mxu0 0.0
        %957 = vmatpush2.msra.mxu0 0.0
        %958 = vmatprep.subr.mxu0 0.0
        %959 = vmatpush2.msra.mxu0 0.0
        %960 = vmatprep.subr.mxu0 0.0
        %961 = vmatpush2.msra.mxu0 0.0
        %962 = vmatprep.subr.mxu0 0.0
        %963 = vmatpush2.msra.mxu0 0.0
        %964 = vmatprep.subr.mxu0 0.0
        %965 = vmatpush2.msra.mxu0 0.0
        %966 = vmatprep.subr.mxu0 0.0
        %967 = vmatpush2.msra.mxu0 0.0
        %968 = vmatprep.subr.mxu0 0.0
        %969 = vmatpush2.msra.mxu0 0.0
        %970 = vmatprep.subr.mxu0 0.0
        %971 = vmatpush2.msra.mxu0 0.0
        %972 = vmatprep.subr.mxu0 0.0
        %973 = vmatpush2.msra.mxu0 0.0
        %974 = vmatprep.subr.mxu0 0.0
        %975 = vmatpush2.msra.mxu0 0.0
        %976 = vmatprep.subr.mxu0 0.0
        %977 = vmatpush2.msra.mxu0 0.0
        %978 = vmatprep.subr.mxu0 0.0
        %979 = vmatpush2.msra.mxu0 0.0
        %980 = vmatprep.subr.mxu0 0.0
        %981 = vmatpush2.msra.mxu0 0.0
        %982 = vmatprep.subr.mxu0 0.0
        %983 = vmatpush2.msra.mxu0 0.0
        %984 = vmatprep.subr.mxu0 0.0
        %985 = vmatpush2.msra.mxu0 0.0
        %986 = vmatprep.subr.mxu0 0.0
        %987 = vmatpush2.msra.mxu0 0.0
        %988 = vmatprep.mubr.f32.mxu0 0.0
        %989 = vmatmul.mubr.f32.gmra.mxu0 %v895
        %v990 = vpop.f32.mrf.mxu0
        %v991 = vadd.f32 0.0, %v990
        %v992 = vpop.f32.mrf.mxu0
        %993 = vmatprep.mubr.f32.mxu0 0.0
        %994 = vmatmul.mubr.f32.gmra.mxu0 %v898
        %v995 = vpop.f32.mrf.mxu0
        %v996 = vadd.f32 0.0, %v995
        %v997 = vpop.f32.mrf.mxu0
        %998 = vmatprep.mubr.f32.mxu0 0.0
        %999 = vmatmul.mubr.f32.gmra.mxu0 %v901
        %v1000 = vpop.f32.mrf.mxu0
        %v1001 = vadd.f32 0.0, %v1000
        %v1002 = vpop.f32.mrf.mxu0
        %1003 = vmatprep.mubr.f32.mxu0 0.0
        %1004 = vmatmul.mubr.f32.gmra.mxu0 %v904
        %v1005 = vpop.f32.mrf.mxu0
        %v1006 = vadd.f32 0.0, %v1005
        %v1007 = vpop.f32.mrf.mxu0
        %1008 = vmatprep.mubr.f32.mxu0 0.0
        %1009 = vmatmul.mubr.f32.gmra.mxu0 %v907
        %v1010 = vpop.f32.mrf.mxu0
        %v1011 = vadd.f32 0.0, %v1010
        %v1012 = vpop.f32.mrf.mxu0
        %1013 = vmatprep.mubr.f32.mxu0 0.0
        %1014 = vmatmul.mubr.f32.gmra.mxu0 %v910
        %v1015 = vpop.f32.mrf.mxu0
        %v1016 = vadd.f32 0.0, %v1015
        %v1017 = vpop.f32.mrf.mxu0
        %1018 = vmatprep.mubr.f32.mxu0 0.0
        %1019 = vmatmul.mubr.f32.gmra.mxu0 %v913
        %v1020 = vpop.f32.mrf.mxu0
        %v1021 = vadd.f32 0.0, %v1020
        %v1022 = vpop.f32.mrf.mxu0
        %1023 = vmatprep.mubr.f32.mxu0 0.0
        %1024 = vmatmul.mubr.f32.gmra.mxu0 %v916
        %v1025 = vpop.f32.mrf.mxu0
        %v1026 = vadd.f32 0.0, %v1025
        %v1027 = vpop.f32.mrf.mxu0
        %1028 = vmatprep.mubr.f32.mxu0 0.0
        %1029 = vmatmul.mubr.f32.gmra.mxu0 %v919
        %v1030 = vpop.f32.mrf.mxu0
        %v1031 = vadd.f32 0.0, %v1030
        %v1032 = vpop.f32.mrf.mxu0
        %1033 = vmatprep.mubr.f32.mxu0 0.0
        %1034 = vmatmul.mubr.f32.gmra.mxu0 %v922
        %v1035 = vpop.f32.mrf.mxu0
        %v1036 = vadd.f32 0.0, %v1035
        %v1037 = vpop.f32.mrf.mxu0
        %1038 = vdwg.mxu0
        %v1039 = vmul.f32 %v991, %v452
        %v1040 = vmul.f32 %v996, %v453
        %v1041 = vmul.f32 %v1001, %v454
        %v1042 = vmul.f32 %v1006, %v455
        %v1043 = vmul.f32 %v1011, %v456
        %v1044 = vmul.f32 %v1016, %v457
        %v1045 = vmul.f32 %v1021, %v458
        %v1046 = vmul.f32 %v1026, %v459
        %v1047 = vmul.f32 %v1031, %v460
        %v1048 = vmul.f32 %v1036, %v461
        %v1049 = vsel %vm515, %v1039, 0.0
        %v1050 = vsel %vm515, %v1040, 0.0
        %v1051 = vadd.f32 %v1049, %v1050
        %v1052 = vsel %vm515, %v1041, 0.0
        %v1053 = vadd.f32 %v1051, %v1052
        %v1054 = vsel %vm515, %v1042, 0.0
        %v1055 = vadd.f32 %v1053, %v1054
        %v1056 = vsel %vm515, %v1043, 0.0
        %v1057 = vadd.f32 %v1055, %v1056
        %v1058 = vsel %vm515, %v1044, 0.0
        %v1059 = vadd.f32 %v1057, %v1058
        %v1060 = vsel %vm515, %v1045, 0.0
        %v1061 = vadd.f32 %v1059, %v1060
        %v1062 = vsel %vm515, %v1046, 0.0
        %v1063 = vadd.f32 %v1061, %v1062
        %v1064 = vsel %vm515, %v1047, 0.0
        %v1065 = vadd.f32 %v1063, %v1064
        %v1066 = vsel %vm515, %v1048, 0.0
        %v1067 = vadd.f32 %v1065, %v1066
        %v1068 = vpack.c.bf16 %v1067, %v1067
        %v1069 = vld [vmem:[%s423] sm:$0xf]
        %v1070 = vld [vmem:[%s423 + $0x4] sm:$0xf]
        %v1071 = vld [vmem:[%s423 + $0x8] sm:$0xf]
        %v1072 = vld [vmem:[%s423 + $0xc] sm:$0xf]
        %v1073 = vld [vmem:[%s423 + $0x10] sm:$0xf]
        %v1074 = vlaneseq
        %v1075 = vshrl.u32 %v1074, 7
        %v1076 = vsub.s32 3, %v1075
        %v1077 = vrot.slane %v462, %v1076
        %v1083 = vunpack.c.l.b16 %v1069
        %v1084 = vunpack.c.l.b16 %v1070
        %v1085 = vunpack.c.l.b16 %v1071
        %v1086 = vunpack.c.l.b16 %v1072
        %v1087 = vunpack.c.l.b16 %v1073
        %v1088 = vpack.c.b16 %v1084, %v1083
        %v1089 = vpack.c.b16 %v1086, %v1085
        %v1090 = vpack.c.b16 %v1087, %v1087
        %v1094 = vsel %vm515, %v1068, 0
        %v1097 = vsel %vm519, %v1090, 0
        %1099 = vmatprep.subr.bf16.mxu0 0
        %1100 = vmatpush1.bf16.msra.mxu0 0
        %1101 = vmatprep.subr.bf16.mxu0 0
        %1102 = vmatpush1.bf16.msra.mxu0 0
        %1103 = vmatprep.subr.bf16.mxu0 0
        %1104 = vmatpush1.bf16.msra.mxu0 0
        %1105 = vmatprep.subr.bf16.mxu0 0
        %1106 = vmatpush1.bf16.msra.mxu0 0
        %1107 = vmatprep.subr.bf16.mxu0 0
        %1108 = vmatpush1.bf16.msra.mxu0 0
        %1109 = vmatprep.subr.bf16.mxu0 0
        %1110 = vmatpush1.bf16.msra.mxu0 %v1097
        %1111 = vmatprep.subr.bf16.mxu0 0
        %1112 = vmatpush1.bf16.msra.mxu0 %v1089
        %1113 = vmatprep.subr.bf16.mxu0 0
        %1114 = vmatpush1.bf16.msra.mxu0 %v1088
        %1115 = vmatprep.subr.bf16.mxu0 0
        %1116 = vmatpush2.bf16.msra.mxu0 0
        %1117 = vmatprep.subr.bf16.mxu0 0
        %1118 = vmatpush2.bf16.msra.mxu0 0
        %1119 = vmatprep.subr.bf16.mxu0 0
        %1120 = vmatpush2.bf16.msra.mxu0 0
        %1121 = vmatprep.subr.bf16.mxu0 0
        %1122 = vmatpush2.bf16.msra.mxu0 0
        %1123 = vmatprep.subr.bf16.mxu0 0
        %1124 = vmatpush2.bf16.msra.mxu0 0
        %1125 = vmatprep.subr.bf16.mxu0 0
        %1126 = vmatpush2.bf16.msra.mxu0 0
        %1127 = vmatprep.subr.bf16.mxu0 0
        %1128 = vmatpush2.bf16.msra.mxu0 0
        %1129 = vmatprep.subr.bf16.mxu0 0
        %1130 = vmatpush2.bf16.msra.mxu0 0
        %1131 = vmatprep.mubr.bf16.mxu0 0
        %1132 = vmatmul.mubr.bf16.gmra.mxu0 %v1094
        %v1133 = vpop.f32.mrf.mxu0
        %v1134 = vadd.f32 %v1077, %v1133
        %v1135 = vpop.f32.mrf.mxu0
        %v1136 = vpop.f32.mrf.mxu0
        %v1137 = vpop.f32.mrf.mxu0
        %1138 = vdwg.mxu0
        %v1139 = vadd.f32 %v451, %v1134
        %v1140 = vsel %vm515, %v1139, 0.0
        %1141 = vadd.xlane.f32.xlu0 %v1140
        %v1142 = vpop.xlane.xlu0 %1141
        %v1143 = vrcp.pop 40.0
        %v1144 = vmul.f32 %v1142, %v1143
        %v1145 = vsub.f32 %v1139, %v1144
        %v1146 = vmul.f32 %v1145, %v1145
        %v1147 = vsel %vm515, %v1146, 0.0
        %1148 = vadd.xlane.f32.xlu0 %v1147
        %v1149 = vpop.xlane.xlu0 %1148
        %v1150 = vmul.f32 %v1149, %v1143
        %v1151 = vadd.f32 %v1150, 1e-05
        %v1152 = vrsqrt.pop %v1151
        %v1153 = vmul.f32 %v1145, %v1152
        %v1154 = vlaneseq
        %v1155 = vshrl.u32 %v1154, 7
        %v1156 = vsub.s32 4, %v1155
        %v1157 = vrot.slane %v462, %v1156
        %v1158 = vmul.f32 %v1153, %v1157
        %v1159 = vlaneseq
        %v1160 = vshrl.u32 %v1159, 7
        %v1161 = vsub.s32 5, %v1160
        %v1162 = vrot.slane %v462, %v1161
        %v1163 = vadd.f32 %v1158, %v1162
        %v1164 = vpack.c.bf16 %v1163, %v1163
        %v1165 = vld [vmem:[%s433] sm:$0xff]
        %v1166 = vld [vmem:[%s433 + $0x8] sm:$0xff]
        %v1167 = vld [vmem:[%s433 + $0x10] sm:$0xff]
        %v1168 = vld [vmem:[%s433 + $0x18] sm:$0xff]
        %v1169 = vld [vmem:[%s433 + $0x20] sm:$0xff]
        %v1170 = vld [vmem:[%s433 + $0x28] sm:$0xff]
        %v1171 = vld [vmem:[%s433 + $0x30] sm:$0xff]
        %v1172 = vld [vmem:[%s433 + $0x38] sm:$0xff]
        %v1173 = vld [vmem:[%s433 + $0x40] sm:$0xff]
        %v1174 = vld [vmem:[%s433 + $0x48] sm:$0xff]
        %v1175 = vld [vmem:[%s433 + $0x50] sm:$0xff]
        %v1176 = vld [vmem:[%s433 + $0x58] sm:$0xff]
        %v1177 = vld [vmem:[%s433 + $0x60] sm:$0xff]
        %v1178 = vld [vmem:[%s433 + $0x68] sm:$0xff]
        %v1179 = vld [vmem:[%s433 + $0x70] sm:$0xff]
        %v1180 = vld [vmem:[%s433 + $0x78] sm:$0xff]
        %v1181 = vld [vmem:[%s433 + $0x80] sm:$0xff]
        %v1182 = vld [vmem:[%s433 + $0x88] sm:$0xff]
        %v1183 = vld [vmem:[%s433 + $0x90] sm:$0xff]
        %v1184 = vld [vmem:[%s433 + $0x98] sm:$0xff]
        %v1185 = vld [vmem:[%s433 + $0xa0] sm:$0xff]
        %v1186 = vld [vmem:[%s433 + $0xa8] sm:$0xff]
        %v1187 = vld [vmem:[%s433 + $0xb0] sm:$0xff]
        %v1188 = vld [vmem:[%s433 + $0xb8] sm:$0xff]
        %v1189 = vld [vmem:[%s433 + $0xc0] sm:$0xff]
        %v1190 = vld [vmem:[%s433 + $0xc8] sm:$0xff]
        %v1191 = vld [vmem:[%s433 + $0xd0] sm:$0xff]
        %v1192 = vld [vmem:[%s433 + $0xd8] sm:$0xff]
        %v1193 = vld [vmem:[%s433 + $0xe0] sm:$0xff]
        %v1194 = vld [vmem:[%s433 + $0xe8] sm:$0xff]
        %v1195 = vld [vmem:[%s433 + $0xf0] sm:$0xff]
        %v1196 = vld [vmem:[%s433 + $0xf8] sm:$0xff]
        %v1197 = vld [vmem:[%s433 + $0x100] sm:$0xff]
        %v1198 = vld [vmem:[%s433 + $0x108] sm:$0xff]
        %v1199 = vld [vmem:[%s433 + $0x110] sm:$0xff]
        %v1200 = vld [vmem:[%s433 + $0x118] sm:$0xff]
        %v1201 = vld [vmem:[%s433 + $0x120] sm:$0xff]
        %v1202 = vld [vmem:[%s433 + $0x128] sm:$0xff]
        %v1203 = vld [vmem:[%s433 + $0x130] sm:$0xff]
        %v1204 = vld [vmem:[%s433 + $0x138] sm:$0xff]
        %v1205 = vld [vmem:[%s437] sm:$0xff]
        %v1206 = vld [vmem:[%s437 + $0x8] sm:$0xff]
        %v1209 = vlaneseq
        %v1210 = vshrl.u32 %v1209, 7
        %v1211 = vsub.s32 0, %v1210
        %v1212 = vrot.slane %v1205, %v1211
        %v1213 = vlaneseq
        %v1214 = vshrl.u32 %v1213, 7
        %v1215 = vsub.s32 1, %v1214
        %v1216 = vrot.slane %v1205, %v1215
        %v1217 = vlaneseq
        %v1218 = vshrl.u32 %v1217, 7
        %v1219 = vsub.s32 2, %v1218
        %v1220 = vrot.slane %v1205, %v1219
        %v1221 = vlaneseq
        %v1222 = vshrl.u32 %v1221, 7
        %v1223 = vsub.s32 3, %v1222
        %v1224 = vrot.slane %v1205, %v1223
        %v1225 = vlaneseq
        %v1226 = vshrl.u32 %v1225, 7
        %v1227 = vsub.s32 4, %v1226
        %v1228 = vrot.slane %v1205, %v1227
        %v1229 = vlaneseq
        %v1230 = vshrl.u32 %v1229, 7
        %v1231 = vsub.s32 5, %v1230
        %v1232 = vrot.slane %v1205, %v1231
        %v1233 = vlaneseq
        %v1234 = vshrl.u32 %v1233, 7
        %v1235 = vsub.s32 6, %v1234
        %v1236 = vrot.slane %v1205, %v1235
        %v1237 = vlaneseq
        %v1238 = vshrl.u32 %v1237, 7
        %v1239 = vsub.s32 7, %v1238
        %v1240 = vrot.slane %v1205, %v1239
        %v1241 = vlaneseq
        %v1242 = vshrl.u32 %v1241, 7
        %v1243 = vsub.s32 0, %v1242
        %v1244 = vrot.slane %v1206, %v1243
        %v1245 = vlaneseq
        %v1246 = vshrl.u32 %v1245, 7
        %v1247 = vsub.s32 1, %v1246
        %v1248 = vrot.slane %v1206, %v1247
        %v1249 = vlaneseq
        %v1250 = vshrl.u32 %v1249, 7
        %v1251 = vsub.s32 2, %v1250
        %v1252 = vrot.slane %v1206, %v1251
        %v1253 = vlaneseq
        %v1254 = vshrl.u32 %v1253, 7
        %v1255 = vsub.s32 3, %v1254
        %v1256 = vrot.slane %v1206, %v1255
        %v1257 = vlaneseq
        %v1258 = vshrl.u32 %v1257, 7
        %v1259 = vsub.s32 4, %v1258
        %v1260 = vrot.slane %v1206, %v1259
        %v1261 = vlaneseq
        %v1262 = vshrl.u32 %v1261, 7
        %v1263 = vsub.s32 5, %v1262
        %v1264 = vrot.slane %v1206, %v1263
        %v1265 = vlaneseq
        %v1266 = vshrl.u32 %v1265, 7
        %v1267 = vsub.s32 6, %v1266
        %v1268 = vrot.slane %v1206, %v1267
        %v1269 = vlaneseq
        %v1270 = vshrl.u32 %v1269, 7
        %v1271 = vsub.s32 7, %v1270
        %v1272 = vrot.slane %v1206, %v1271
        %v1329 = vunpack.c.l.b16 %v1165
        %v1330 = vunpack.c.h.b16 %v1165
        %v1331 = vunpack.c.l.b16 %v1166
        %v1332 = vunpack.c.h.b16 %v1166
        %v1333 = vunpack.c.l.b16 %v1167
        %v1334 = vunpack.c.h.b16 %v1167
        %v1335 = vunpack.c.l.b16 %v1168
        %v1336 = vunpack.c.h.b16 %v1168
        %v1337 = vunpack.c.l.b16 %v1169
        %v1338 = vunpack.c.h.b16 %v1169
        %v1339 = vunpack.c.l.b16 %v1170
        %v1340 = vunpack.c.h.b16 %v1170
        %v1341 = vunpack.c.l.b16 %v1171
        %v1342 = vunpack.c.h.b16 %v1171
        %v1343 = vunpack.c.l.b16 %v1172
        %v1344 = vunpack.c.h.b16 %v1172
        %v1345 = vunpack.c.l.b16 %v1173
        %v1346 = vunpack.c.h.b16 %v1173
        %v1347 = vunpack.c.l.b16 %v1174
        %v1348 = vunpack.c.h.b16 %v1174
        %v1349 = vunpack.c.l.b16 %v1175
        %v1350 = vunpack.c.h.b16 %v1175
        %v1351 = vunpack.c.l.b16 %v1176
        %v1352 = vunpack.c.h.b16 %v1176
        %v1353 = vunpack.c.l.b16 %v1177
        %v1354 = vunpack.c.h.b16 %v1177
        %v1355 = vunpack.c.l.b16 %v1178
        %v1356 = vunpack.c.h.b16 %v1178
        %v1357 = vunpack.c.l.b16 %v1179
        %v1358 = vunpack.c.h.b16 %v1179
        %v1359 = vunpack.c.l.b16 %v1180
        %v1360 = vunpack.c.h.b16 %v1180
        %v1361 = vunpack.c.l.b16 %v1181
        %v1362 = vunpack.c.h.b16 %v1181
        %v1363 = vunpack.c.l.b16 %v1182
        %v1364 = vunpack.c.h.b16 %v1182
        %v1365 = vunpack.c.l.b16 %v1183
        %v1366 = vunpack.c.h.b16 %v1183
        %v1367 = vunpack.c.l.b16 %v1184
        %v1368 = vunpack.c.h.b16 %v1184
        %v1369 = vunpack.c.l.b16 %v1185
        %v1370 = vunpack.c.h.b16 %v1185
        %v1371 = vunpack.c.l.b16 %v1186
        %v1372 = vunpack.c.h.b16 %v1186
        %v1373 = vunpack.c.l.b16 %v1187
        %v1374 = vunpack.c.h.b16 %v1187
        %v1375 = vunpack.c.l.b16 %v1188
        %v1376 = vunpack.c.h.b16 %v1188
        %v1377 = vunpack.c.l.b16 %v1189
        %v1378 = vunpack.c.h.b16 %v1189
        %v1379 = vunpack.c.l.b16 %v1190
        %v1380 = vunpack.c.h.b16 %v1190
        %v1381 = vunpack.c.l.b16 %v1191
        %v1382 = vunpack.c.h.b16 %v1191
        %v1383 = vunpack.c.l.b16 %v1192
        %v1384 = vunpack.c.h.b16 %v1192
        %v1385 = vunpack.c.l.b16 %v1193
        %v1386 = vunpack.c.h.b16 %v1193
        %v1387 = vunpack.c.l.b16 %v1194
        %v1388 = vunpack.c.h.b16 %v1194
        %v1389 = vunpack.c.l.b16 %v1195
        %v1390 = vunpack.c.h.b16 %v1195
        %v1391 = vunpack.c.l.b16 %v1196
        %v1392 = vunpack.c.h.b16 %v1196
        %v1393 = vunpack.c.l.b16 %v1197
        %v1394 = vunpack.c.h.b16 %v1197
        %v1395 = vunpack.c.l.b16 %v1198
        %v1396 = vunpack.c.h.b16 %v1198
        %v1397 = vunpack.c.l.b16 %v1199
        %v1398 = vunpack.c.h.b16 %v1199
        %v1399 = vunpack.c.l.b16 %v1200
        %v1400 = vunpack.c.h.b16 %v1200
        %v1401 = vunpack.c.l.b16 %v1201
        %v1402 = vunpack.c.h.b16 %v1201
        %v1403 = vunpack.c.l.b16 %v1202
        %v1404 = vunpack.c.h.b16 %v1202
        %v1405 = vunpack.c.l.b16 %v1203
        %v1406 = vunpack.c.h.b16 %v1203
        %v1407 = vunpack.c.l.b16 %v1204
        %v1408 = vunpack.c.h.b16 %v1204
        %v1409 = vpack.c.b16 %v1345, %v1329
        %v1410 = vpack.c.b16 %v1346, %v1330
        %v1411 = vpack.c.b16 %v1347, %v1331
        %v1412 = vpack.c.b16 %v1348, %v1332
        %v1413 = vpack.c.b16 %v1349, %v1333
        %v1414 = vpack.c.b16 %v1350, %v1334
        %v1415 = vpack.c.b16 %v1351, %v1335
        %v1416 = vpack.c.b16 %v1352, %v1336
        %v1417 = vpack.c.b16 %v1353, %v1337
        %v1418 = vpack.c.b16 %v1354, %v1338
        %v1419 = vpack.c.b16 %v1355, %v1339
        %v1420 = vpack.c.b16 %v1356, %v1340
        %v1421 = vpack.c.b16 %v1357, %v1341
        %v1422 = vpack.c.b16 %v1358, %v1342
        %v1423 = vpack.c.b16 %v1359, %v1343
        %v1424 = vpack.c.b16 %v1360, %v1344
        %v1425 = vpack.c.b16 %v1377, %v1361
        %v1426 = vpack.c.b16 %v1378, %v1362
        %v1427 = vpack.c.b16 %v1379, %v1363
        %v1428 = vpack.c.b16 %v1380, %v1364
        %v1429 = vpack.c.b16 %v1381, %v1365
        %v1430 = vpack.c.b16 %v1382, %v1366
        %v1431 = vpack.c.b16 %v1383, %v1367
        %v1432 = vpack.c.b16 %v1384, %v1368
        %v1433 = vpack.c.b16 %v1385, %v1369
        %v1434 = vpack.c.b16 %v1386, %v1370
        %v1435 = vpack.c.b16 %v1387, %v1371
        %v1436 = vpack.c.b16 %v1388, %v1372
        %v1437 = vpack.c.b16 %v1389, %v1373
        %v1438 = vpack.c.b16 %v1390, %v1374
        %v1439 = vpack.c.b16 %v1391, %v1375
        %v1440 = vpack.c.b16 %v1392, %v1376
        %v1441 = vpack.c.b16 %v1393, %v1393
        %v1442 = vpack.c.b16 %v1394, %v1394
        %v1443 = vpack.c.b16 %v1395, %v1395
        %v1444 = vpack.c.b16 %v1396, %v1396
        %v1445 = vpack.c.b16 %v1397, %v1397
        %v1446 = vpack.c.b16 %v1398, %v1398
        %v1447 = vpack.c.b16 %v1399, %v1399
        %v1448 = vpack.c.b16 %v1400, %v1400
        %v1449 = vpack.c.b16 %v1401, %v1401
        %v1450 = vpack.c.b16 %v1402, %v1402
        %v1451 = vpack.c.b16 %v1403, %v1403
        %v1452 = vpack.c.b16 %v1404, %v1404
        %v1453 = vpack.c.b16 %v1405, %v1405
        %v1454 = vpack.c.b16 %v1406, %v1406
        %v1455 = vpack.c.b16 %v1407, %v1407
        %v1456 = vpack.c.b16 %v1408, %v1408
        %v1490 = vsel %vm515, %v1164, 0
        %v1493 = vsel %vm519, %v1441, 0
        %v1496 = vsel %vm519, %v1442, 0
        %v1499 = vsel %vm519, %v1443, 0
        %v1502 = vsel %vm519, %v1444, 0
        %v1505 = vsel %vm519, %v1445, 0
        %v1508 = vsel %vm519, %v1446, 0
        %v1511 = vsel %vm519, %v1447, 0
        %v1514 = vsel %vm519, %v1448, 0
        %v1517 = vsel %vm519, %v1449, 0
        %v1520 = vsel %vm519, %v1450, 0
        %v1523 = vsel %vm519, %v1451, 0
        %v1526 = vsel %vm519, %v1452, 0
        %v1529 = vsel %vm519, %v1453, 0
        %v1532 = vsel %vm519, %v1454, 0
        %v1535 = vsel %vm519, %v1455, 0
        %v1538 = vsel %vm519, %v1456, 0
        %1540 = vmatprep.subr.bf16.mxu0 0
        %1541 = vmatpush1.bf16.msra.mxu0 0
        %1542 = vmatprep.subr.bf16.mxu0 0
        %1543 = vmatpush1.bf16.msra.mxu0 0
        %1544 = vmatprep.subr.bf16.mxu0 0
        %1545 = vmatpush1.bf16.msra.mxu0 0
        %1546 = vmatprep.subr.bf16.mxu0 0
        %1547 = vmatpush1.bf16.msra.mxu0 0
        %1548 = vmatprep.subr.bf16.mxu0 0
        %1549 = vmatpush1.bf16.msra.mxu0 0
        %1550 = vmatprep.subr.bf16.mxu0 %v1496
        %1551 = vmatpush1.bf16.msra.mxu0 %v1493
        %1552 = vmatprep.subr.bf16.mxu0 %v1426
        %1553 = vmatpush1.bf16.msra.mxu0 %v1425
        %1554 = vmatprep.subr.bf16.mxu0 %v1410
        %1555 = vmatpush1.bf16.msra.mxu0 %v1409
        %1556 = vmatprep.subr.bf16.mxu0 0
        %1557 = vmatpush2.bf16.msra.mxu0 0
        %1558 = vmatprep.subr.bf16.mxu0 0
        %1559 = vmatpush2.bf16.msra.mxu0 0
        %1560 = vmatprep.subr.bf16.mxu0 0
        %1561 = vmatpush2.bf16.msra.mxu0 0
        %1562 = vmatprep.subr.bf16.mxu0 0
        %1563 = vmatpush2.bf16.msra.mxu0 0
        %1564 = vmatprep.subr.bf16.mxu0 0
        %1565 = vmatpush2.bf16.msra.mxu0 0
        %1566 = vmatprep.subr.bf16.mxu0 0
        %1567 = vmatpush2.bf16.msra.mxu0 0
        %1568 = vmatprep.subr.bf16.mxu0 0
        %1569 = vmatpush2.bf16.msra.mxu0 0
        %1570 = vmatprep.subr.bf16.mxu0 0
        %1571 = vmatpush2.bf16.msra.mxu0 0
        %1572 = vmatprep.mubr.bf16.mxu0 0
        %1573 = vmatmul.mubr.bf16.gmra.mxu0 %v1490
        %v1574 = vpop.f32.mrf.mxu0
        %v1575 = vadd.f32 %v1212, %v1574
        %v1576 = vpop.f32.mrf.mxu0
        %v1577 = vadd.f32 %v1216, %v1576
        %v1578 = vpop.f32.mrf.mxu0
        %v1579 = vpop.f32.mrf.mxu0
        %1580 = vdwg.mxu0
        %1581 = vmatprep.subr.bf16.mxu0 0
        %1582 = vmatpush1.bf16.msra.mxu0 0
        %1583 = vmatprep.subr.bf16.mxu0 0
        %1584 = vmatpush1.bf16.msra.mxu0 0
        %1585 = vmatprep.subr.bf16.mxu0 0
        %1586 = vmatpush1.bf16.msra.mxu0 0
        %1587 = vmatprep.subr.bf16.mxu0 0
        %1588 = vmatpush1.bf16.msra.mxu0 0
        %1589 = vmatprep.subr.bf16.mxu0 0
        %1590 = vmatpush1.bf16.msra.mxu0 0
        %1591 = vmatprep.subr.bf16.mxu0 %v1502
        %1592 = vmatpush1.bf16.msra.mxu0 %v1499
        %1593 = vmatprep.subr.bf16.mxu0 %v1428
        %1594 = vmatpush1.bf16.msra.mxu0 %v1427
        %1595 = vmatprep.subr.bf16.mxu0 %v1412
        %1596 = vmatpush1.bf16.msra.mxu0 %v1411
        %1597 = vmatprep.subr.bf16.mxu0 0
        %1598 = vmatpush2.bf16.msra.mxu0 0
        %1599 = vmatprep.subr.bf16.mxu0 0
        %1600 = vmatpush2.bf16.msra.mxu0 0
        %1601 = vmatprep.subr.bf16.mxu0 0
        %1602 = vmatpush2.bf16.msra.mxu0 0
        %1603 = vmatprep.subr.bf16.mxu0 0
        %1604 = vmatpush2.bf16.msra.mxu0 0
        %1605 = vmatprep.subr.bf16.mxu0 0
        %1606 = vmatpush2.bf16.msra.mxu0 0
        %1607 = vmatprep.subr.bf16.mxu0 0
        %1608 = vmatpush2.bf16.msra.mxu0 0
        %1609 = vmatprep.subr.bf16.mxu0 0
        %1610 = vmatpush2.bf16.msra.mxu0 0
        %1611 = vmatprep.subr.bf16.mxu0 0
        %1612 = vmatpush2.bf16.msra.mxu0 0
        %1613 = vmatprep.mubr.bf16.mxu0 0
        %1614 = vmatmul.mubr.bf16.gmra.mxu0 %v1490
        %v1615 = vpop.f32.mrf.mxu0
        %v1616 = vadd.f32 %v1220, %v1615
        %v1617 = vpop.f32.mrf.mxu0
        %v1618 = vadd.f32 %v1224, %v1617
        %v1619 = vpop.f32.mrf.mxu0
        %v1620 = vpop.f32.mrf.mxu0
        %1621 = vdwg.mxu0
        %1622 = vmatprep.subr.bf16.mxu0 0
        %1623 = vmatpush1.bf16.msra.mxu0 0
        %1624 = vmatprep.subr.bf16.mxu0 0
        %1625 = vmatpush1.bf16.msra.mxu0 0
        %1626 = vmatprep.subr.bf16.mxu0 0
        %1627 = vmatpush1.bf16.msra.mxu0 0
        %1628 = vmatprep.subr.bf16.mxu0 0
        %1629 = vmatpush1.bf16.msra.mxu0 0
        %1630 = vmatprep.subr.bf16.mxu0 0
        %1631 = vmatpush1.bf16.msra.mxu0 0
        %1632 = vmatprep.subr.bf16.mxu0 %v1508
        %1633 = vmatpush1.bf16.msra.mxu0 %v1505
        %1634 = vmatprep.subr.bf16.mxu0 %v1430
        %1635 = vmatpush1.bf16.msra.mxu0 %v1429
        %1636 = vmatprep.subr.bf16.mxu0 %v1414
        %1637 = vmatpush1.bf16.msra.mxu0 %v1413
        %1638 = vmatprep.subr.bf16.mxu0 0
        %1639 = vmatpush2.bf16.msra.mxu0 0
        %1640 = vmatprep.subr.bf16.mxu0 0
        %1641 = vmatpush2.bf16.msra.mxu0 0
        %1642 = vmatprep.subr.bf16.mxu0 0
        %1643 = vmatpush2.bf16.msra.mxu0 0
        %1644 = vmatprep.subr.bf16.mxu0 0
        %1645 = vmatpush2.bf16.msra.mxu0 0
        %1646 = vmatprep.subr.bf16.mxu0 0
        %1647 = vmatpush2.bf16.msra.mxu0 0
        %1648 = vmatprep.subr.bf16.mxu0 0
        %1649 = vmatpush2.bf16.msra.mxu0 0
        %1650 = vmatprep.subr.bf16.mxu0 0
        %1651 = vmatpush2.bf16.msra.mxu0 0
        %1652 = vmatprep.subr.bf16.mxu0 0
        %1653 = vmatpush2.bf16.msra.mxu0 0
        %1654 = vmatprep.mubr.bf16.mxu0 0
        %1655 = vmatmul.mubr.bf16.gmra.mxu0 %v1490
        %v1656 = vpop.f32.mrf.mxu0
        %v1657 = vadd.f32 %v1228, %v1656
        %v1658 = vpop.f32.mrf.mxu0
        %v1659 = vadd.f32 %v1232, %v1658
        %v1660 = vpop.f32.mrf.mxu0
        %v1661 = vpop.f32.mrf.mxu0
        %1662 = vdwg.mxu0
        %1663 = vmatprep.subr.bf16.mxu0 0
        %1664 = vmatpush1.bf16.msra.mxu0 0
        %1665 = vmatprep.subr.bf16.mxu0 0
        %1666 = vmatpush1.bf16.msra.mxu0 0
        %1667 = vmatprep.subr.bf16.mxu0 0
        %1668 = vmatpush1.bf16.msra.mxu0 0
        %1669 = vmatprep.subr.bf16.mxu0 0
        %1670 = vmatpush1.bf16.msra.mxu0 0
        %1671 = vmatprep.subr.bf16.mxu0 0
        %1672 = vmatpush1.bf16.msra.mxu0 0
        %1673 = vmatprep.subr.bf16.mxu0 %v1514
        %1674 = vmatpush1.bf16.msra.mxu0 %v1511
        %1675 = vmatprep.subr.bf16.mxu0 %v1432
        %1676 = vmatpush1.bf16.msra.mxu0 %v1431
        %1677 = vmatprep.subr.bf16.mxu0 %v1416
        %1678 = vmatpush1.bf16.msra.mxu0 %v1415
        %1679 = vmatprep.subr.bf16.mxu0 0
        %1680 = vmatpush2.bf16.msra.mxu0 0
        %1681 = vmatprep.subr.bf16.mxu0 0
        %1682 = vmatpush2.bf16.msra.mxu0 0
        %1683 = vmatprep.subr.bf16.mxu0 0
        %1684 = vmatpush2.bf16.msra.mxu0 0
        %1685 = vmatprep.subr.bf16.mxu0 0
        %1686 = vmatpush2.bf16.msra.mxu0 0
        %1687 = vmatprep.subr.bf16.mxu0 0
        %1688 = vmatpush2.bf16.msra.mxu0 0
        %1689 = vmatprep.subr.bf16.mxu0 0
        %1690 = vmatpush2.bf16.msra.mxu0 0
        %1691 = vmatprep.subr.bf16.mxu0 0
        %1692 = vmatpush2.bf16.msra.mxu0 0
        %1693 = vmatprep.subr.bf16.mxu0 0
        %1694 = vmatpush2.bf16.msra.mxu0 0
        %1695 = vmatprep.mubr.bf16.mxu0 0
        %1696 = vmatmul.mubr.bf16.gmra.mxu0 %v1490
        %v1697 = vpop.f32.mrf.mxu0
        %v1698 = vadd.f32 %v1236, %v1697
        %v1699 = vpop.f32.mrf.mxu0
        %v1700 = vadd.f32 %v1240, %v1699
        %v1701 = vpop.f32.mrf.mxu0
        %v1702 = vpop.f32.mrf.mxu0
        %1703 = vdwg.mxu0
        %1704 = vmatprep.subr.bf16.mxu0 0
        %1705 = vmatpush1.bf16.msra.mxu0 0
        %1706 = vmatprep.subr.bf16.mxu0 0
        %1707 = vmatpush1.bf16.msra.mxu0 0
        %1708 = vmatprep.subr.bf16.mxu0 0
        %1709 = vmatpush1.bf16.msra.mxu0 0
        %1710 = vmatprep.subr.bf16.mxu0 0
        %1711 = vmatpush1.bf16.msra.mxu0 0
        %1712 = vmatprep.subr.bf16.mxu0 0
        %1713 = vmatpush1.bf16.msra.mxu0 0
        %1714 = vmatprep.subr.bf16.mxu0 %v1520
        %1715 = vmatpush1.bf16.msra.mxu0 %v1517
        %1716 = vmatprep.subr.bf16.mxu0 %v1434
        %1717 = vmatpush1.bf16.msra.mxu0 %v1433
        %1718 = vmatprep.subr.bf16.mxu0 %v1418
        %1719 = vmatpush1.bf16.msra.mxu0 %v1417
        %1720 = vmatprep.subr.bf16.mxu0 0
        %1721 = vmatpush2.bf16.msra.mxu0 0
        %1722 = vmatprep.subr.bf16.mxu0 0
        %1723 = vmatpush2.bf16.msra.mxu0 0
        %1724 = vmatprep.subr.bf16.mxu0 0
        %1725 = vmatpush2.bf16.msra.mxu0 0
        %1726 = vmatprep.subr.bf16.mxu0 0
        %1727 = vmatpush2.bf16.msra.mxu0 0
        %1728 = vmatprep.subr.bf16.mxu0 0
        %1729 = vmatpush2.bf16.msra.mxu0 0
        %1730 = vmatprep.subr.bf16.mxu0 0
        %1731 = vmatpush2.bf16.msra.mxu0 0
        %1732 = vmatprep.subr.bf16.mxu0 0
        %1733 = vmatpush2.bf16.msra.mxu0 0
        %1734 = vmatprep.subr.bf16.mxu0 0
        %1735 = vmatpush2.bf16.msra.mxu0 0
        %1736 = vmatprep.mubr.bf16.mxu0 0
        %1737 = vmatmul.mubr.bf16.gmra.mxu0 %v1490
        %v1738 = vpop.f32.mrf.mxu0
        %v1739 = vadd.f32 %v1244, %v1738
        %v1740 = vpop.f32.mrf.mxu0
        %v1741 = vadd.f32 %v1248, %v1740
        %v1742 = vpop.f32.mrf.mxu0
        %v1743 = vpop.f32.mrf.mxu0
        %1744 = vdwg.mxu0
        %1745 = vmatprep.subr.bf16.mxu0 0
        %1746 = vmatpush1.bf16.msra.mxu0 0
        %1747 = vmatprep.subr.bf16.mxu0 0
        %1748 = vmatpush1.bf16.msra.mxu0 0
        %1749 = vmatprep.subr.bf16.mxu0 0
        %1750 = vmatpush1.bf16.msra.mxu0 0
        %1751 = vmatprep.subr.bf16.mxu0 0
        %1752 = vmatpush1.bf16.msra.mxu0 0
        %1753 = vmatprep.subr.bf16.mxu0 0
        %1754 = vmatpush1.bf16.msra.mxu0 0
        %1755 = vmatprep.subr.bf16.mxu0 %v1526
        %1756 = vmatpush1.bf16.msra.mxu0 %v1523
        %1757 = vmatprep.subr.bf16.mxu0 %v1436
        %1758 = vmatpush1.bf16.msra.mxu0 %v1435
        %1759 = vmatprep.subr.bf16.mxu0 %v1420
        %1760 = vmatpush1.bf16.msra.mxu0 %v1419
        %1761 = vmatprep.subr.bf16.mxu0 0
        %1762 = vmatpush2.bf16.msra.mxu0 0
        %1763 = vmatprep.subr.bf16.mxu0 0
        %1764 = vmatpush2.bf16.msra.mxu0 0
        %1765 = vmatprep.subr.bf16.mxu0 0
        %1766 = vmatpush2.bf16.msra.mxu0 0
        %1767 = vmatprep.subr.bf16.mxu0 0
        %1768 = vmatpush2.bf16.msra.mxu0 0
        %1769 = vmatprep.subr.bf16.mxu0 0
        %1770 = vmatpush2.bf16.msra.mxu0 0
        %1771 = vmatprep.subr.bf16.mxu0 0
        %1772 = vmatpush2.bf16.msra.mxu0 0
        %1773 = vmatprep.subr.bf16.mxu0 0
        %1774 = vmatpush2.bf16.msra.mxu0 0
        %1775 = vmatprep.subr.bf16.mxu0 0
        %1776 = vmatpush2.bf16.msra.mxu0 0
        %1777 = vmatprep.mubr.bf16.mxu0 0
        %1778 = vmatmul.mubr.bf16.gmra.mxu0 %v1490
        %v1779 = vpop.f32.mrf.mxu0
        %v1780 = vadd.f32 %v1252, %v1779
        %v1781 = vpop.f32.mrf.mxu0
        %v1782 = vadd.f32 %v1256, %v1781
        %v1783 = vpop.f32.mrf.mxu0
        %v1784 = vpop.f32.mrf.mxu0
        %1785 = vdwg.mxu0
        %1786 = vmatprep.subr.bf16.mxu0 0
        %1787 = vmatpush1.bf16.msra.mxu0 0
        %1788 = vmatprep.subr.bf16.mxu0 0
        %1789 = vmatpush1.bf16.msra.mxu0 0
        %1790 = vmatprep.subr.bf16.mxu0 0
        %1791 = vmatpush1.bf16.msra.mxu0 0
        %1792 = vmatprep.subr.bf16.mxu0 0
        %1793 = vmatpush1.bf16.msra.mxu0 0
        %1794 = vmatprep.subr.bf16.mxu0 0
        %1795 = vmatpush1.bf16.msra.mxu0 0
        %1796 = vmatprep.subr.bf16.mxu0 %v1532
        %1797 = vmatpush1.bf16.msra.mxu0 %v1529
        %1798 = vmatprep.subr.bf16.mxu0 %v1438
        %1799 = vmatpush1.bf16.msra.mxu0 %v1437
        %1800 = vmatprep.subr.bf16.mxu0 %v1422
        %1801 = vmatpush1.bf16.msra.mxu0 %v1421
        %1802 = vmatprep.subr.bf16.mxu0 0
        %1803 = vmatpush2.bf16.msra.mxu0 0
        %1804 = vmatprep.subr.bf16.mxu0 0
        %1805 = vmatpush2.bf16.msra.mxu0 0
        %1806 = vmatprep.subr.bf16.mxu0 0
        %1807 = vmatpush2.bf16.msra.mxu0 0
        %1808 = vmatprep.subr.bf16.mxu0 0
        %1809 = vmatpush2.bf16.msra.mxu0 0
        %1810 = vmatprep.subr.bf16.mxu0 0
        %1811 = vmatpush2.bf16.msra.mxu0 0
        %1812 = vmatprep.subr.bf16.mxu0 0
        %1813 = vmatpush2.bf16.msra.mxu0 0
        %1814 = vmatprep.subr.bf16.mxu0 0
        %1815 = vmatpush2.bf16.msra.mxu0 0
        %1816 = vmatprep.subr.bf16.mxu0 0
        %1817 = vmatpush2.bf16.msra.mxu0 0
        %1818 = vmatprep.mubr.bf16.mxu0 0
        %1819 = vmatmul.mubr.bf16.gmra.mxu0 %v1490
        %v1820 = vpop.f32.mrf.mxu0
        %v1821 = vadd.f32 %v1260, %v1820
        %v1822 = vpop.f32.mrf.mxu0
        %v1823 = vadd.f32 %v1264, %v1822
        %v1824 = vpop.f32.mrf.mxu0
        %v1825 = vpop.f32.mrf.mxu0
        %1826 = vdwg.mxu0
        %1827 = vmatprep.subr.bf16.mxu0 0
        %1828 = vmatpush1.bf16.msra.mxu0 0
        %1829 = vmatprep.subr.bf16.mxu0 0
        %1830 = vmatpush1.bf16.msra.mxu0 0
        %1831 = vmatprep.subr.bf16.mxu0 0
        %1832 = vmatpush1.bf16.msra.mxu0 0
        %1833 = vmatprep.subr.bf16.mxu0 0
        %1834 = vmatpush1.bf16.msra.mxu0 0
        %1835 = vmatprep.subr.bf16.mxu0 0
        %1836 = vmatpush1.bf16.msra.mxu0 0
        %1837 = vmatprep.subr.bf16.mxu0 %v1538
        %1838 = vmatpush1.bf16.msra.mxu0 %v1535
        %1839 = vmatprep.subr.bf16.mxu0 %v1440
        %1840 = vmatpush1.bf16.msra.mxu0 %v1439
        %1841 = vmatprep.subr.bf16.mxu0 %v1424
        %1842 = vmatpush1.bf16.msra.mxu0 %v1423
        %1843 = vmatprep.subr.bf16.mxu0 0
        %1844 = vmatpush2.bf16.msra.mxu0 0
        %1845 = vmatprep.subr.bf16.mxu0 0
        %1846 = vmatpush2.bf16.msra.mxu0 0
        %1847 = vmatprep.subr.bf16.mxu0 0
        %1848 = vmatpush2.bf16.msra.mxu0 0
        %1849 = vmatprep.subr.bf16.mxu0 0
        %1850 = vmatpush2.bf16.msra.mxu0 0
        %1851 = vmatprep.subr.bf16.mxu0 0
        %1852 = vmatpush2.bf16.msra.mxu0 0
        %1853 = vmatprep.subr.bf16.mxu0 0
        %1854 = vmatpush2.bf16.msra.mxu0 0
        %1855 = vmatprep.subr.bf16.mxu0 0
        %1856 = vmatpush2.bf16.msra.mxu0 0
        %1857 = vmatprep.subr.bf16.mxu0 0
        %1858 = vmatpush2.bf16.msra.mxu0 0
        %1859 = vmatprep.mubr.bf16.mxu0 0
        %1860 = vmatmul.mubr.bf16.gmra.mxu0 %v1490
        %v1861 = vpop.f32.mrf.mxu0
        %v1862 = vadd.f32 %v1268, %v1861
        %v1863 = vpop.f32.mrf.mxu0
        %v1864 = vadd.f32 %v1272, %v1863
        %v1865 = vpop.f32.mrf.mxu0
        %v1866 = vpop.f32.mrf.mxu0
        %1867 = vdwg.mxu0
        %v1868 = vmax.f32 %v1575, 0.0
        %v1869 = vmax.f32 %v1577, 0.0
        %v1870 = vmax.f32 %v1616, 0.0
        %v1871 = vmax.f32 %v1618, 0.0
        %v1872 = vmax.f32 %v1657, 0.0
        %v1873 = vmax.f32 %v1659, 0.0
        %v1874 = vmax.f32 %v1698, 0.0
        %v1875 = vmax.f32 %v1700, 0.0
        %v1876 = vmax.f32 %v1739, 0.0
        %v1877 = vmax.f32 %v1741, 0.0
        %v1878 = vmax.f32 %v1780, 0.0
        %v1879 = vmax.f32 %v1782, 0.0
        %v1880 = vmax.f32 %v1821, 0.0
        %v1881 = vmax.f32 %v1823, 0.0
        %v1882 = vmax.f32 %v1862, 0.0
        %v1883 = vmax.f32 %v1864, 0.0
        %v1884 = vpack.c.bf16 %v1868, %v1868
        %v1885 = vpack.c.bf16 %v1869, %v1869
        %v1886 = vpack.c.bf16 %v1870, %v1870
        %v1887 = vpack.c.bf16 %v1871, %v1871
        %v1888 = vpack.c.bf16 %v1872, %v1872
        %v1889 = vpack.c.bf16 %v1873, %v1873
        %v1890 = vpack.c.bf16 %v1874, %v1874
        %v1891 = vpack.c.bf16 %v1875, %v1875
        %v1892 = vpack.c.bf16 %v1876, %v1876
        %v1893 = vpack.c.bf16 %v1877, %v1877
        %v1894 = vpack.c.bf16 %v1878, %v1878
        %v1895 = vpack.c.bf16 %v1879, %v1879
        %v1896 = vpack.c.bf16 %v1880, %v1880
        %v1897 = vpack.c.bf16 %v1881, %v1881
        %v1898 = vpack.c.bf16 %v1882, %v1882
        %v1899 = vpack.c.bf16 %v1883, %v1883
        %v1900 = vld [vmem:[%s442] sm:$0xf]
        %v1901 = vld [vmem:[%s442 + $0x4] sm:$0xf]
        %v1902 = vld [vmem:[%s442 + $0x8] sm:$0xf]
        %v1903 = vld [vmem:[%s442 + $0xc] sm:$0xf]
        %v1904 = vld [vmem:[%s442 + $0x10] sm:$0xf]
        %v1905 = vld [vmem:[%s442 + $0x14] sm:$0xf]
        %v1906 = vld [vmem:[%s442 + $0x18] sm:$0xf]
        %v1907 = vld [vmem:[%s442 + $0x1c] sm:$0xf]
        %v1908 = vld [vmem:[%s442 + $0x20] sm:$0xf]
        %v1909 = vld [vmem:[%s442 + $0x24] sm:$0xf]
        %v1910 = vld [vmem:[%s442 + $0x28] sm:$0xf]
        %v1911 = vld [vmem:[%s442 + $0x2c] sm:$0xf]
        %v1912 = vld [vmem:[%s442 + $0x30] sm:$0xf]
        %v1913 = vld [vmem:[%s442 + $0x34] sm:$0xf]
        %v1914 = vld [vmem:[%s442 + $0x38] sm:$0xf]
        %v1915 = vld [vmem:[%s442 + $0x3c] sm:$0xf]
        %v1916 = vld [vmem:[%s442 + $0x40] sm:$0xf]
        %v1917 = vld [vmem:[%s442 + $0x44] sm:$0xf]
        %v1918 = vld [vmem:[%s442 + $0x48] sm:$0xf]
        %v1919 = vld [vmem:[%s442 + $0x4c] sm:$0xf]
        %v1920 = vld [vmem:[%s442 + $0x50] sm:$0xf]
        %v1921 = vld [vmem:[%s442 + $0x54] sm:$0xf]
        %v1922 = vld [vmem:[%s442 + $0x58] sm:$0xf]
        %v1923 = vld [vmem:[%s442 + $0x5c] sm:$0xf]
        %v1924 = vld [vmem:[%s442 + $0x60] sm:$0xf]
        %v1925 = vld [vmem:[%s442 + $0x64] sm:$0xf]
        %v1926 = vld [vmem:[%s442 + $0x68] sm:$0xf]
        %v1927 = vld [vmem:[%s442 + $0x6c] sm:$0xf]
        %v1928 = vld [vmem:[%s442 + $0x70] sm:$0xf]
        %v1929 = vld [vmem:[%s442 + $0x74] sm:$0xf]
        %v1930 = vld [vmem:[%s442 + $0x78] sm:$0xf]
        %v1931 = vld [vmem:[%s442 + $0x7c] sm:$0xf]
        %v1932 = vld [vmem:[%s442 + $0x80] sm:$0xf]
        %v1933 = vld [vmem:[%s442 + $0x84] sm:$0xf]
        %v1934 = vld [vmem:[%s442 + $0x88] sm:$0xf]
        %v1935 = vld [vmem:[%s442 + $0x8c] sm:$0xf]
        %v1936 = vld [vmem:[%s442 + $0x90] sm:$0xf]
        %v1937 = vld [vmem:[%s442 + $0x94] sm:$0xf]
        %v1938 = vld [vmem:[%s442 + $0x98] sm:$0xf]
        %v1939 = vld [vmem:[%s442 + $0x9c] sm:$0xf]
        %v1940 = vld [vmem:[%s442 + $0xa0] sm:$0xf]
        %v1941 = vld [vmem:[%s442 + $0xa4] sm:$0xf]
        %v1942 = vld [vmem:[%s442 + $0xa8] sm:$0xf]
        %v1943 = vld [vmem:[%s442 + $0xac] sm:$0xf]
        %v1944 = vld [vmem:[%s442 + $0xb0] sm:$0xf]
        %v1945 = vld [vmem:[%s442 + $0xb4] sm:$0xf]
        %v1946 = vld [vmem:[%s442 + $0xb8] sm:$0xf]
        %v1947 = vld [vmem:[%s442 + $0xbc] sm:$0xf]
        %v1948 = vld [vmem:[%s442 + $0xc0] sm:$0xf]
        %v1949 = vld [vmem:[%s442 + $0xc4] sm:$0xf]
        %v1950 = vld [vmem:[%s442 + $0xc8] sm:$0xf]
        %v1951 = vld [vmem:[%s442 + $0xcc] sm:$0xf]
        %v1952 = vld [vmem:[%s442 + $0xd0] sm:$0xf]
        %v1953 = vld [vmem:[%s442 + $0xd4] sm:$0xf]
        %v1954 = vld [vmem:[%s442 + $0xd8] sm:$0xf]
        %v1955 = vld [vmem:[%s442 + $0xdc] sm:$0xf]
        %v1956 = vld [vmem:[%s442 + $0xe0] sm:$0xf]
        %v1957 = vld [vmem:[%s442 + $0xe4] sm:$0xf]
        %v1958 = vld [vmem:[%s442 + $0xe8] sm:$0xf]
        %v1959 = vld [vmem:[%s442 + $0xec] sm:$0xf]
        %v1960 = vld [vmem:[%s442 + $0xf0] sm:$0xf]
        %v1961 = vld [vmem:[%s442 + $0xf4] sm:$0xf]
        %v1962 = vld [vmem:[%s442 + $0xf8] sm:$0xf]
        %v1963 = vld [vmem:[%s442 + $0xfc] sm:$0xf]
        %v1964 = vld [vmem:[%s442 + $0x100] sm:$0xf]
        %v1965 = vld [vmem:[%s442 + $0x104] sm:$0xf]
        %v1966 = vld [vmem:[%s442 + $0x108] sm:$0xf]
        %v1967 = vld [vmem:[%s442 + $0x10c] sm:$0xf]
        %v1968 = vld [vmem:[%s442 + $0x110] sm:$0xf]
        %v1969 = vld [vmem:[%s442 + $0x114] sm:$0xf]
        %v1970 = vld [vmem:[%s442 + $0x118] sm:$0xf]
        %v1971 = vld [vmem:[%s442 + $0x11c] sm:$0xf]
        %v1972 = vld [vmem:[%s442 + $0x120] sm:$0xf]
        %v1973 = vld [vmem:[%s442 + $0x124] sm:$0xf]
        %v1974 = vld [vmem:[%s442 + $0x128] sm:$0xf]
        %v1975 = vld [vmem:[%s442 + $0x12c] sm:$0xf]
        %v1976 = vld [vmem:[%s442 + $0x130] sm:$0xf]
        %v1977 = vld [vmem:[%s442 + $0x134] sm:$0xf]
        %v1978 = vld [vmem:[%s442 + $0x138] sm:$0xf]
        %v1979 = vld [vmem:[%s442 + $0x13c] sm:$0xf]
        %v1980 = vld [vmem:[%s442 + $0x140] sm:$0xf]
        %v1981 = vld [vmem:[%s442 + $0x144] sm:$0xf]
        %v1982 = vld [vmem:[%s442 + $0x148] sm:$0xf]
        %v1983 = vld [vmem:[%s442 + $0x14c] sm:$0xf]
        %v1984 = vld [vmem:[%s442 + $0x150] sm:$0xf]
        %v1985 = vld [vmem:[%s442 + $0x154] sm:$0xf]
        %v1986 = vld [vmem:[%s442 + $0x158] sm:$0xf]
        %v1987 = vld [vmem:[%s442 + $0x15c] sm:$0xf]
        %v1988 = vld [vmem:[%s442 + $0x160] sm:$0xf]
        %v1989 = vld [vmem:[%s442 + $0x164] sm:$0xf]
        %v1990 = vld [vmem:[%s442 + $0x168] sm:$0xf]
        %v1991 = vld [vmem:[%s442 + $0x16c] sm:$0xf]
        %v1992 = vld [vmem:[%s442 + $0x170] sm:$0xf]
        %v1993 = vld [vmem:[%s442 + $0x174] sm:$0xf]
        %v1994 = vld [vmem:[%s442 + $0x178] sm:$0xf]
        %v1995 = vld [vmem:[%s442 + $0x17c] sm:$0xf]
        %v1996 = vld [vmem:[%s442 + $0x180] sm:$0xf]
        %v1997 = vld [vmem:[%s442 + $0x184] sm:$0xf]
        %v1998 = vld [vmem:[%s442 + $0x188] sm:$0xf]
        %v1999 = vld [vmem:[%s442 + $0x18c] sm:$0xf]
        %v2000 = vld [vmem:[%s442 + $0x190] sm:$0xf]
        %v2001 = vld [vmem:[%s442 + $0x194] sm:$0xf]
        %v2002 = vld [vmem:[%s442 + $0x198] sm:$0xf]
        %v2003 = vld [vmem:[%s442 + $0x19c] sm:$0xf]
        %v2004 = vld [vmem:[%s442 + $0x1a0] sm:$0xf]
        %v2005 = vld [vmem:[%s442 + $0x1a4] sm:$0xf]
        %v2006 = vld [vmem:[%s442 + $0x1a8] sm:$0xf]
        %v2007 = vld [vmem:[%s442 + $0x1ac] sm:$0xf]
        %v2008 = vld [vmem:[%s442 + $0x1b0] sm:$0xf]
        %v2009 = vld [vmem:[%s442 + $0x1b4] sm:$0xf]
        %v2010 = vld [vmem:[%s442 + $0x1b8] sm:$0xf]
        %v2011 = vld [vmem:[%s442 + $0x1bc] sm:$0xf]
        %v2012 = vld [vmem:[%s442 + $0x1c0] sm:$0xf]
        %v2013 = vld [vmem:[%s442 + $0x1c4] sm:$0xf]
        %v2014 = vld [vmem:[%s442 + $0x1c8] sm:$0xf]
        %v2015 = vld [vmem:[%s442 + $0x1cc] sm:$0xf]
        %v2016 = vld [vmem:[%s442 + $0x1d0] sm:$0xf]
        %v2017 = vld [vmem:[%s442 + $0x1d4] sm:$0xf]
        %v2018 = vld [vmem:[%s442 + $0x1d8] sm:$0xf]
        %v2019 = vld [vmem:[%s442 + $0x1dc] sm:$0xf]
        %v2020 = vld [vmem:[%s442 + $0x1e0] sm:$0xf]
        %v2021 = vld [vmem:[%s442 + $0x1e4] sm:$0xf]
        %v2022 = vld [vmem:[%s442 + $0x1e8] sm:$0xf]
        %v2023 = vld [vmem:[%s442 + $0x1ec] sm:$0xf]
        %v2024 = vld [vmem:[%s442 + $0x1f0] sm:$0xf]
        %v2025 = vld [vmem:[%s442 + $0x1f4] sm:$0xf]
        %v2026 = vld [vmem:[%s442 + $0x1f8] sm:$0xf]
        %v2027 = vld [vmem:[%s442 + $0x1fc] sm:$0xf]
        %v2028 = vld [vmem:[%s442 + $0x200] sm:$0xf]
        %v2029 = vld [vmem:[%s442 + $0x204] sm:$0xf]
        %v2030 = vld [vmem:[%s442 + $0x208] sm:$0xf]
        %v2031 = vld [vmem:[%s442 + $0x20c] sm:$0xf]
        %v2032 = vld [vmem:[%s442 + $0x210] sm:$0xf]
        %v2033 = vld [vmem:[%s442 + $0x214] sm:$0xf]
        %v2034 = vld [vmem:[%s442 + $0x218] sm:$0xf]
        %v2035 = vld [vmem:[%s442 + $0x21c] sm:$0xf]
        %v2036 = vld [vmem:[%s442 + $0x220] sm:$0xf]
        %v2037 = vld [vmem:[%s442 + $0x224] sm:$0xf]
        %v2038 = vld [vmem:[%s442 + $0x228] sm:$0xf]
        %v2039 = vld [vmem:[%s442 + $0x22c] sm:$0xf]
        %v2040 = vld [vmem:[%s442 + $0x230] sm:$0xf]
        %v2041 = vld [vmem:[%s442 + $0x234] sm:$0xf]
        %v2042 = vld [vmem:[%s442 + $0x238] sm:$0xf]
        %v2043 = vld [vmem:[%s442 + $0x23c] sm:$0xf]
        %v2044 = vld [vmem:[%s442 + $0x240] sm:$0xf]
        %v2045 = vld [vmem:[%s442 + $0x244] sm:$0xf]
        %v2046 = vld [vmem:[%s442 + $0x248] sm:$0xf]
        %v2047 = vld [vmem:[%s442 + $0x24c] sm:$0xf]
        %v2048 = vld [vmem:[%s442 + $0x250] sm:$0xf]
        %v2049 = vld [vmem:[%s442 + $0x254] sm:$0xf]
        %v2050 = vld [vmem:[%s442 + $0x258] sm:$0xf]
        %v2051 = vld [vmem:[%s442 + $0x25c] sm:$0xf]
        %v2052 = vld [vmem:[%s442 + $0x260] sm:$0xf]
        %v2053 = vld [vmem:[%s442 + $0x264] sm:$0xf]
        %v2054 = vld [vmem:[%s442 + $0x268] sm:$0xf]
        %v2055 = vld [vmem:[%s442 + $0x26c] sm:$0xf]
        %v2056 = vld [vmem:[%s442 + $0x270] sm:$0xf]
        %v2057 = vld [vmem:[%s442 + $0x274] sm:$0xf]
        %v2058 = vld [vmem:[%s442 + $0x278] sm:$0xf]
        %v2059 = vld [vmem:[%s442 + $0x27c] sm:$0xf]
        %v2060 = vld [vmem:[%s442 + $0x280] sm:$0xf]
        %v2061 = vld [vmem:[%s442 + $0x284] sm:$0xf]
        %v2062 = vld [vmem:[%s442 + $0x288] sm:$0xf]
        %v2063 = vld [vmem:[%s442 + $0x28c] sm:$0xf]
        %v2064 = vld [vmem:[%s442 + $0x290] sm:$0xf]
        %v2065 = vld [vmem:[%s442 + $0x294] sm:$0xf]
        %v2066 = vld [vmem:[%s442 + $0x298] sm:$0xf]
        %v2067 = vld [vmem:[%s442 + $0x29c] sm:$0xf]
        %v2068 = vld [vmem:[%s442 + $0x2a0] sm:$0xf]
        %v2069 = vld [vmem:[%s442 + $0x2a4] sm:$0xf]
        %v2070 = vld [vmem:[%s442 + $0x2a8] sm:$0xf]
        %v2071 = vld [vmem:[%s442 + $0x2ac] sm:$0xf]
        %v2072 = vld [vmem:[%s442 + $0x2b0] sm:$0xf]
        %v2073 = vld [vmem:[%s442 + $0x2b4] sm:$0xf]
        %v2074 = vld [vmem:[%s442 + $0x2b8] sm:$0xf]
        %v2075 = vld [vmem:[%s442 + $0x2bc] sm:$0xf]
        %v2076 = vld [vmem:[%s442 + $0x2c0] sm:$0xf]
        %v2077 = vld [vmem:[%s442 + $0x2c4] sm:$0xf]
        %v2078 = vld [vmem:[%s442 + $0x2c8] sm:$0xf]
        %v2079 = vld [vmem:[%s442 + $0x2cc] sm:$0xf]
        %v2080 = vld [vmem:[%s442 + $0x2d0] sm:$0xf]
        %v2081 = vld [vmem:[%s442 + $0x2d4] sm:$0xf]
        %v2082 = vld [vmem:[%s442 + $0x2d8] sm:$0xf]
        %v2083 = vld [vmem:[%s442 + $0x2dc] sm:$0xf]
        %v2084 = vld [vmem:[%s442 + $0x2e0] sm:$0xf]
        %v2085 = vld [vmem:[%s442 + $0x2e4] sm:$0xf]
        %v2086 = vld [vmem:[%s442 + $0x2e8] sm:$0xf]
        %v2087 = vld [vmem:[%s442 + $0x2ec] sm:$0xf]
        %v2088 = vld [vmem:[%s442 + $0x2f0] sm:$0xf]
        %v2089 = vld [vmem:[%s442 + $0x2f4] sm:$0xf]
        %v2090 = vld [vmem:[%s442 + $0x2f8] sm:$0xf]
        %v2091 = vld [vmem:[%s442 + $0x2fc] sm:$0xf]
        %v2092 = vld [vmem:[%s442 + $0x300] sm:$0xf]
        %v2093 = vld [vmem:[%s442 + $0x304] sm:$0xf]
        %v2094 = vld [vmem:[%s442 + $0x308] sm:$0xf]
        %v2095 = vld [vmem:[%s442 + $0x30c] sm:$0xf]
        %v2096 = vld [vmem:[%s442 + $0x310] sm:$0xf]
        %v2097 = vld [vmem:[%s442 + $0x314] sm:$0xf]
        %v2098 = vld [vmem:[%s442 + $0x318] sm:$0xf]
        %v2099 = vld [vmem:[%s442 + $0x31c] sm:$0xf]
        %v2100 = vld [vmem:[%s442 + $0x320] sm:$0xf]
        %v2101 = vld [vmem:[%s442 + $0x324] sm:$0xf]
        %v2102 = vld [vmem:[%s442 + $0x328] sm:$0xf]
        %v2103 = vld [vmem:[%s442 + $0x32c] sm:$0xf]
        %v2104 = vld [vmem:[%s442 + $0x330] sm:$0xf]
        %v2105 = vld [vmem:[%s442 + $0x334] sm:$0xf]
        %v2106 = vld [vmem:[%s442 + $0x338] sm:$0xf]
        %v2107 = vld [vmem:[%s442 + $0x33c] sm:$0xf]
        %v2108 = vld [vmem:[%s442 + $0x340] sm:$0xf]
        %v2109 = vld [vmem:[%s442 + $0x344] sm:$0xf]
        %v2110 = vld [vmem:[%s442 + $0x348] sm:$0xf]
        %v2111 = vld [vmem:[%s442 + $0x34c] sm:$0xf]
        %v2112 = vld [vmem:[%s442 + $0x350] sm:$0xf]
        %v2113 = vld [vmem:[%s442 + $0x354] sm:$0xf]
        %v2114 = vld [vmem:[%s442 + $0x358] sm:$0xf]
        %v2115 = vld [vmem:[%s442 + $0x35c] sm:$0xf]
        %v2116 = vld [vmem:[%s442 + $0x360] sm:$0xf]
        %v2117 = vld [vmem:[%s442 + $0x364] sm:$0xf]
        %v2118 = vld [vmem:[%s442 + $0x368] sm:$0xf]
        %v2119 = vld [vmem:[%s442 + $0x36c] sm:$0xf]
        %v2120 = vld [vmem:[%s442 + $0x370] sm:$0xf]
        %v2121 = vld [vmem:[%s442 + $0x374] sm:$0xf]
        %v2122 = vld [vmem:[%s442 + $0x378] sm:$0xf]
        %v2123 = vld [vmem:[%s442 + $0x37c] sm:$0xf]
        %v2124 = vld [vmem:[%s442 + $0x380] sm:$0xf]
        %v2125 = vld [vmem:[%s442 + $0x384] sm:$0xf]
        %v2126 = vld [vmem:[%s442 + $0x388] sm:$0xf]
        %v2127 = vld [vmem:[%s442 + $0x38c] sm:$0xf]
        %v2128 = vld [vmem:[%s442 + $0x390] sm:$0xf]
        %v2129 = vld [vmem:[%s442 + $0x394] sm:$0xf]
        %v2130 = vld [vmem:[%s442 + $0x398] sm:$0xf]
        %v2131 = vld [vmem:[%s442 + $0x39c] sm:$0xf]
        %v2132 = vld [vmem:[%s442 + $0x3a0] sm:$0xf]
        %v2133 = vld [vmem:[%s442 + $0x3a4] sm:$0xf]
        %v2134 = vld [vmem:[%s442 + $0x3a8] sm:$0xf]
        %v2135 = vld [vmem:[%s442 + $0x3ac] sm:$0xf]
        %v2136 = vld [vmem:[%s442 + $0x3b0] sm:$0xf]
        %v2137 = vld [vmem:[%s442 + $0x3b4] sm:$0xf]
        %v2138 = vld [vmem:[%s442 + $0x3b8] sm:$0xf]
        %v2139 = vld [vmem:[%s442 + $0x3bc] sm:$0xf]
        %v2140 = vld [vmem:[%s442 + $0x3c0] sm:$0xf]
        %v2141 = vld [vmem:[%s442 + $0x3c4] sm:$0xf]
        %v2142 = vld [vmem:[%s442 + $0x3c8] sm:$0xf]
        %v2143 = vld [vmem:[%s442 + $0x3cc] sm:$0xf]
        %v2144 = vld [vmem:[%s442 + $0x3d0] sm:$0xf]
        %v2145 = vld [vmem:[%s442 + $0x3d4] sm:$0xf]
        %v2146 = vld [vmem:[%s442 + $0x3d8] sm:$0xf]
        %v2147 = vld [vmem:[%s442 + $0x3dc] sm:$0xf]
        %v2148 = vld [vmem:[%s442 + $0x3e0] sm:$0xf]
        %v2149 = vld [vmem:[%s442 + $0x3e4] sm:$0xf]
        %v2150 = vld [vmem:[%s442 + $0x3e8] sm:$0xf]
        %v2151 = vld [vmem:[%s442 + $0x3ec] sm:$0xf]
        %v2152 = vld [vmem:[%s442 + $0x3f0] sm:$0xf]
        %v2153 = vld [vmem:[%s442 + $0x3f4] sm:$0xf]
        %v2154 = vld [vmem:[%s442 + $0x3f8] sm:$0xf]
        %v2155 = vld [vmem:[%s442 + $0x3fc] sm:$0xf]
        %v2156 = vlaneseq
        %v2157 = vshrl.u32 %v2156, 7
        %v2158 = vsub.s32 0, %v2157
        %v2159 = vrot.slane %v463, %v2158
        %v2416 = vunpack.c.l.b16 %v1900
        %v2417 = vunpack.c.l.b16 %v1901
        %v2418 = vunpack.c.l.b16 %v1902
        %v2419 = vunpack.c.l.b16 %v1903
        %v2420 = vunpack.c.l.b16 %v1904
        %v2421 = vunpack.c.l.b16 %v1905
        %v2422 = vunpack.c.l.b16 %v1906
        %v2423 = vunpack.c.l.b16 %v1907
        %v2424 = vunpack.c.l.b16 %v1908
        %v2425 = vunpack.c.l.b16 %v1909
        %v2426 = vunpack.c.l.b16 %v1910
        %v2427 = vunpack.c.l.b16 %v1911
        %v2428 = vunpack.c.l.b16 %v1912
        %v2429 = vunpack.c.l.b16 %v1913
        %v2430 = vunpack.c.l.b16 %v1914
        %v2431 = vunpack.c.l.b16 %v1915
        %v2432 = vunpack.c.l.b16 %v1916
        %v2433 = vunpack.c.l.b16 %v1917
        %v2434 = vunpack.c.l.b16 %v1918
        %v2435 = vunpack.c.l.b16 %v1919
        %v2436 = vunpack.c.l.b16 %v1920
        %v2437 = vunpack.c.l.b16 %v1921
        %v2438 = vunpack.c.l.b16 %v1922
        %v2439 = vunpack.c.l.b16 %v1923
        %v2440 = vunpack.c.l.b16 %v1924
        %v2441 = vunpack.c.l.b16 %v1925
        %v2442 = vunpack.c.l.b16 %v1926
        %v2443 = vunpack.c.l.b16 %v1927
        %v2444 = vunpack.c.l.b16 %v1928
        %v2445 = vunpack.c.l.b16 %v1929
        %v2446 = vunpack.c.l.b16 %v1930
        %v2447 = vunpack.c.l.b16 %v1931
        %v2448 = vunpack.c.l.b16 %v1932
        %v2449 = vunpack.c.l.b16 %v1933
        %v2450 = vunpack.c.l.b16 %v1934
        %v2451 = vunpack.c.l.b16 %v1935
        %v2452 = vunpack.c.l.b16 %v1936
        %v2453 = vunpack.c.l.b16 %v1937
        %v2454 = vunpack.c.l.b16 %v1938
        %v2455 = vunpack.c.l.b16 %v1939
        %v2456 = vunpack.c.l.b16 %v1940
        %v2457 = vunpack.c.l.b16 %v1941
        %v2458 = vunpack.c.l.b16 %v1942
        %v2459 = vunpack.c.l.b16 %v1943
        %v2460 = vunpack.c.l.b16 %v1944
        %v2461 = vunpack.c.l.b16 %v1945
        %v2462 = vunpack.c.l.b16 %v1946
        %v2463 = vunpack.c.l.b16 %v1947
        %v2464 = vunpack.c.l.b16 %v1948
        %v2465 = vunpack.c.l.b16 %v1949
        %v2466 = vunpack.c.l.b16 %v1950
        %v2467 = vunpack.c.l.b16 %v1951
        %v2468 = vunpack.c.l.b16 %v1952
        %v2469 = vunpack.c.l.b16 %v1953
        %v2470 = vunpack.c.l.b16 %v1954
        %v2471 = vunpack.c.l.b16 %v1955
        %v2472 = vunpack.c.l.b16 %v1956
        %v2473 = vunpack.c.l.b16 %v1957
        %v2474 = vunpack.c.l.b16 %v1958
        %v2475 = vunpack.c.l.b16 %v1959
        %v2476 = vunpack.c.l.b16 %v1960
        %v2477 = vunpack.c.l.b16 %v1961
        %v2478 = vunpack.c.l.b16 %v1962
        %v2479 = vunpack.c.l.b16 %v1963
        %v2480 = vunpack.c.l.b16 %v1964
        %v2481 = vunpack.c.l.b16 %v1965
        %v2482 = vunpack.c.l.b16 %v1966
        %v2483 = vunpack.c.l.b16 %v1967
        %v2484 = vunpack.c.l.b16 %v1968
        %v2485 = vunpack.c.l.b16 %v1969
        %v2486 = vunpack.c.l.b16 %v1970
        %v2487 = vunpack.c.l.b16 %v1971
        %v2488 = vunpack.c.l.b16 %v1972
        %v2489 = vunpack.c.l.b16 %v1973
        %v2490 = vunpack.c.l.b16 %v1974
        %v2491 = vunpack.c.l.b16 %v1975
        %v2492 = vunpack.c.l.b16 %v1976
        %v2493 = vunpack.c.l.b16 %v1977
        %v2494 = vunpack.c.l.b16 %v1978
        %v2495 = vunpack.c.l.b16 %v1979
        %v2496 = vunpack.c.l.b16 %v1980
        %v2497 = vunpack.c.l.b16 %v1981
        %v2498 = vunpack.c.l.b16 %v1982
        %v2499 = vunpack.c.l.b16 %v1983
        %v2500 = vunpack.c.l.b16 %v1984
        %v2501 = vunpack.c.l.b16 %v1985
        %v2502 = vunpack.c.l.b16 %v1986
        %v2503 = vunpack.c.l.b16 %v1987
        %v2504 = vunpack.c.l.b16 %v1988
        %v2505 = vunpack.c.l.b16 %v1989
        %v2506 = vunpack.c.l.b16 %v1990
        %v2507 = vunpack.c.l.b16 %v1991
        %v2508 = vunpack.c.l.b16 %v1992
        %v2509 = vunpack.c.l.b16 %v1993
        %v2510 = vunpack.c.l.b16 %v1994
        %v2511 = vunpack.c.l.b16 %v1995
        %v2512 = vunpack.c.l.b16 %v1996
        %v2513 = vunpack.c.l.b16 %v1997
        %v2514 = vunpack.c.l.b16 %v1998
        %v2515 = vunpack.c.l.b16 %v1999
        %v2516 = vunpack.c.l.b16 %v2000
        %v2517 = vunpack.c.l.b16 %v2001
        %v2518 = vunpack.c.l.b16 %v2002
        %v2519 = vunpack.c.l.b16 %v2003
        %v2520 = vunpack.c.l.b16 %v2004
        %v2521 = vunpack.c.l.b16 %v2005
        %v2522 = vunpack.c.l.b16 %v2006
        %v2523 = vunpack.c.l.b16 %v2007
        %v2524 = vunpack.c.l.b16 %v2008
        %v2525 = vunpack.c.l.b16 %v2009
        %v2526 = vunpack.c.l.b16 %v2010
        %v2527 = vunpack.c.l.b16 %v2011
        %v2528 = vunpack.c.l.b16 %v2012
        %v2529 = vunpack.c.l.b16 %v2013
        %v2530 = vunpack.c.l.b16 %v2014
        %v2531 = vunpack.c.l.b16 %v2015
        %v2532 = vunpack.c.l.b16 %v2016
        %v2533 = vunpack.c.l.b16 %v2017
        %v2534 = vunpack.c.l.b16 %v2018
        %v2535 = vunpack.c.l.b16 %v2019
        %v2536 = vunpack.c.l.b16 %v2020
        %v2537 = vunpack.c.l.b16 %v2021
        %v2538 = vunpack.c.l.b16 %v2022
        %v2539 = vunpack.c.l.b16 %v2023
        %v2540 = vunpack.c.l.b16 %v2024
        %v2541 = vunpack.c.l.b16 %v2025
        %v2542 = vunpack.c.l.b16 %v2026
        %v2543 = vunpack.c.l.b16 %v2027
        %v2544 = vunpack.c.l.b16 %v2028
        %v2545 = vunpack.c.l.b16 %v2029
        %v2546 = vunpack.c.l.b16 %v2030
        %v2547 = vunpack.c.l.b16 %v2031
        %v2548 = vunpack.c.l.b16 %v2032
        %v2549 = vunpack.c.l.b16 %v2033
        %v2550 = vunpack.c.l.b16 %v2034
        %v2551 = vunpack.c.l.b16 %v2035
        %v2552 = vunpack.c.l.b16 %v2036
        %v2553 = vunpack.c.l.b16 %v2037
        %v2554 = vunpack.c.l.b16 %v2038
        %v2555 = vunpack.c.l.b16 %v2039
        %v2556 = vunpack.c.l.b16 %v2040
        %v2557 = vunpack.c.l.b16 %v2041
        %v2558 = vunpack.c.l.b16 %v2042
        %v2559 = vunpack.c.l.b16 %v2043
        %v2560 = vunpack.c.l.b16 %v2044
        %v2561 = vunpack.c.l.b16 %v2045
        %v2562 = vunpack.c.l.b16 %v2046
        %v2563 = vunpack.c.l.b16 %v2047
        %v2564 = vunpack.c.l.b16 %v2048
        %v2565 = vunpack.c.l.b16 %v2049
        %v2566 = vunpack.c.l.b16 %v2050
        %v2567 = vunpack.c.l.b16 %v2051
        %v2568 = vunpack.c.l.b16 %v2052
        %v2569 = vunpack.c.l.b16 %v2053
        %v2570 = vunpack.c.l.b16 %v2054
        %v2571 = vunpack.c.l.b16 %v2055
        %v2572 = vunpack.c.l.b16 %v2056
        %v2573 = vunpack.c.l.b16 %v2057
        %v2574 = vunpack.c.l.b16 %v2058
        %v2575 = vunpack.c.l.b16 %v2059
        %v2576 = vunpack.c.l.b16 %v2060
        %v2577 = vunpack.c.l.b16 %v2061
        %v2578 = vunpack.c.l.b16 %v2062
        %v2579 = vunpack.c.l.b16 %v2063
        %v2580 = vunpack.c.l.b16 %v2064
        %v2581 = vunpack.c.l.b16 %v2065
        %v2582 = vunpack.c.l.b16 %v2066
        %v2583 = vunpack.c.l.b16 %v2067
        %v2584 = vunpack.c.l.b16 %v2068
        %v2585 = vunpack.c.l.b16 %v2069
        %v2586 = vunpack.c.l.b16 %v2070
        %v2587 = vunpack.c.l.b16 %v2071
        %v2588 = vunpack.c.l.b16 %v2072
        %v2589 = vunpack.c.l.b16 %v2073
        %v2590 = vunpack.c.l.b16 %v2074
        %v2591 = vunpack.c.l.b16 %v2075
        %v2592 = vunpack.c.l.b16 %v2076
        %v2593 = vunpack.c.l.b16 %v2077
        %v2594 = vunpack.c.l.b16 %v2078
        %v2595 = vunpack.c.l.b16 %v2079
        %v2596 = vunpack.c.l.b16 %v2080
        %v2597 = vunpack.c.l.b16 %v2081
        %v2598 = vunpack.c.l.b16 %v2082
        %v2599 = vunpack.c.l.b16 %v2083
        %v2600 = vunpack.c.l.b16 %v2084
        %v2601 = vunpack.c.l.b16 %v2085
        %v2602 = vunpack.c.l.b16 %v2086
        %v2603 = vunpack.c.l.b16 %v2087
        %v2604 = vunpack.c.l.b16 %v2088
        %v2605 = vunpack.c.l.b16 %v2089
        %v2606 = vunpack.c.l.b16 %v2090
        %v2607 = vunpack.c.l.b16 %v2091
        %v2608 = vunpack.c.l.b16 %v2092
        %v2609 = vunpack.c.l.b16 %v2093
        %v2610 = vunpack.c.l.b16 %v2094
        %v2611 = vunpack.c.l.b16 %v2095
        %v2612 = vunpack.c.l.b16 %v2096
        %v2613 = vunpack.c.l.b16 %v2097
        %v2614 = vunpack.c.l.b16 %v2098
        %v2615 = vunpack.c.l.b16 %v2099
        %v2616 = vunpack.c.l.b16 %v2100
        %v2617 = vunpack.c.l.b16 %v2101
        %v2618 = vunpack.c.l.b16 %v2102
        %v2619 = vunpack.c.l.b16 %v2103
        %v2620 = vunpack.c.l.b16 %v2104
        %v2621 = vunpack.c.l.b16 %v2105
        %v2622 = vunpack.c.l.b16 %v2106
        %v2623 = vunpack.c.l.b16 %v2107
        %v2624 = vunpack.c.l.b16 %v2108
        %v2625 = vunpack.c.l.b16 %v2109
        %v2626 = vunpack.c.l.b16 %v2110
        %v2627 = vunpack.c.l.b16 %v2111
        %v2628 = vunpack.c.l.b16 %v2112
        %v2629 = vunpack.c.l.b16 %v2113
        %v2630 = vunpack.c.l.b16 %v2114
        %v2631 = vunpack.c.l.b16 %v2115
        %v2632 = vunpack.c.l.b16 %v2116
        %v2633 = vunpack.c.l.b16 %v2117
        %v2634 = vunpack.c.l.b16 %v2118
        %v2635 = vunpack.c.l.b16 %v2119
        %v2636 = vunpack.c.l.b16 %v2120
        %v2637 = vunpack.c.l.b16 %v2121
        %v2638 = vunpack.c.l.b16 %v2122
        %v2639 = vunpack.c.l.b16 %v2123
        %v2640 = vunpack.c.l.b16 %v2124
        %v2641 = vunpack.c.l.b16 %v2125
        %v2642 = vunpack.c.l.b16 %v2126
        %v2643 = vunpack.c.l.b16 %v2127
        %v2644 = vunpack.c.l.b16 %v2128
        %v2645 = vunpack.c.l.b16 %v2129
        %v2646 = vunpack.c.l.b16 %v2130
        %v2647 = vunpack.c.l.b16 %v2131
        %v2648 = vunpack.c.l.b16 %v2132
        %v2649 = vunpack.c.l.b16 %v2133
        %v2650 = vunpack.c.l.b16 %v2134
        %v2651 = vunpack.c.l.b16 %v2135
        %v2652 = vunpack.c.l.b16 %v2136
        %v2653 = vunpack.c.l.b16 %v2137
        %v2654 = vunpack.c.l.b16 %v2138
        %v2655 = vunpack.c.l.b16 %v2139
        %v2656 = vunpack.c.l.b16 %v2140
        %v2657 = vunpack.c.l.b16 %v2141
        %v2658 = vunpack.c.l.b16 %v2142
        %v2659 = vunpack.c.l.b16 %v2143
        %v2660 = vunpack.c.l.b16 %v2144
        %v2661 = vunpack.c.l.b16 %v2145
        %v2662 = vunpack.c.l.b16 %v2146
        %v2663 = vunpack.c.l.b16 %v2147
        %v2664 = vunpack.c.l.b16 %v2148
        %v2665 = vunpack.c.l.b16 %v2149
        %v2666 = vunpack.c.l.b16 %v2150
        %v2667 = vunpack.c.l.b16 %v2151
        %v2668 = vunpack.c.l.b16 %v2152
        %v2669 = vunpack.c.l.b16 %v2153
        %v2670 = vunpack.c.l.b16 %v2154
        %v2671 = vunpack.c.l.b16 %v2155
        %v2672 = vpack.c.b16 %v2417, %v2416
        %v2673 = vpack.c.b16 %v2419, %v2418
        %v2674 = vpack.c.b16 %v2421, %v2420
        %v2675 = vpack.c.b16 %v2423, %v2422
        %v2676 = vpack.c.b16 %v2425, %v2424
        %v2677 = vpack.c.b16 %v2427, %v2426
        %v2678 = vpack.c.b16 %v2429, %v2428
        %v2679 = vpack.c.b16 %v2431, %v2430
        %v2680 = vpack.c.b16 %v2433, %v2432
        %v2681 = vpack.c.b16 %v2435, %v2434
        %v2682 = vpack.c.b16 %v2437, %v2436
        %v2683 = vpack.c.b16 %v2439, %v2438
        %v2684 = vpack.c.b16 %v2441, %v2440
        %v2685 = vpack.c.b16 %v2443, %v2442
        %v2686 = vpack.c.b16 %v2445, %v2444
        %v2687 = vpack.c.b16 %v2447, %v2446
        %v2688 = vpack.c.b16 %v2449, %v2448
        %v2689 = vpack.c.b16 %v2451, %v2450
        %v2690 = vpack.c.b16 %v2453, %v2452
        %v2691 = vpack.c.b16 %v2455, %v2454
        %v2692 = vpack.c.b16 %v2457, %v2456
        %v2693 = vpack.c.b16 %v2459, %v2458
        %v2694 = vpack.c.b16 %v2461, %v2460
        %v2695 = vpack.c.b16 %v2463, %v2462
        %v2696 = vpack.c.b16 %v2465, %v2464
        %v2697 = vpack.c.b16 %v2467, %v2466
        %v2698 = vpack.c.b16 %v2469, %v2468
        %v2699 = vpack.c.b16 %v2471, %v2470
        %v2700 = vpack.c.b16 %v2473, %v2472
        %v2701 = vpack.c.b16 %v2475, %v2474
        %v2702 = vpack.c.b16 %v2477, %v2476
        %v2703 = vpack.c.b16 %v2479, %v2478
        %v2704 = vpack.c.b16 %v2481, %v2480
        %v2705 = vpack.c.b16 %v2483, %v2482
        %v2706 = vpack.c.b16 %v2485, %v2484
        %v2707 = vpack.c.b16 %v2487, %v2486
        %v2708 = vpack.c.b16 %v2489, %v2488
        %v2709 = vpack.c.b16 %v2491, %v2490
        %v2710 = vpack.c.b16 %v2493, %v2492
        %v2711 = vpack.c.b16 %v2495, %v2494
        %v2712 = vpack.c.b16 %v2497, %v2496
        %v2713 = vpack.c.b16 %v2499, %v2498
        %v2714 = vpack.c.b16 %v2501, %v2500
        %v2715 = vpack.c.b16 %v2503, %v2502
        %v2716 = vpack.c.b16 %v2505, %v2504
        %v2717 = vpack.c.b16 %v2507, %v2506
        %v2718 = vpack.c.b16 %v2509, %v2508
        %v2719 = vpack.c.b16 %v2511, %v2510
        %v2720 = vpack.c.b16 %v2513, %v2512
        %v2721 = vpack.c.b16 %v2515, %v2514
        %v2722 = vpack.c.b16 %v2517, %v2516
        %v2723 = vpack.c.b16 %v2519, %v2518
        %v2724 = vpack.c.b16 %v2521, %v2520
        %v2725 = vpack.c.b16 %v2523, %v2522
        %v2726 = vpack.c.b16 %v2525, %v2524
        %v2727 = vpack.c.b16 %v2527, %v2526
        %v2728 = vpack.c.b16 %v2529, %v2528
        %v2729 = vpack.c.b16 %v2531, %v2530
        %v2730 = vpack.c.b16 %v2533, %v2532
        %v2731 = vpack.c.b16 %v2535, %v2534
        %v2732 = vpack.c.b16 %v2537, %v2536
        %v2733 = vpack.c.b16 %v2539, %v2538
        %v2734 = vpack.c.b16 %v2541, %v2540
        %v2735 = vpack.c.b16 %v2543, %v2542
        %v2736 = vpack.c.b16 %v2545, %v2544
        %v2737 = vpack.c.b16 %v2547, %v2546
        %v2738 = vpack.c.b16 %v2549, %v2548
        %v2739 = vpack.c.b16 %v2551, %v2550
        %v2740 = vpack.c.b16 %v2553, %v2552
        %v2741 = vpack.c.b16 %v2555, %v2554
        %v2742 = vpack.c.b16 %v2557, %v2556
        %v2743 = vpack.c.b16 %v2559, %v2558
        %v2744 = vpack.c.b16 %v2561, %v2560
        %v2745 = vpack.c.b16 %v2563, %v2562
        %v2746 = vpack.c.b16 %v2565, %v2564
        %v2747 = vpack.c.b16 %v2567, %v2566
        %v2748 = vpack.c.b16 %v2569, %v2568
        %v2749 = vpack.c.b16 %v2571, %v2570
        %v2750 = vpack.c.b16 %v2573, %v2572
        %v2751 = vpack.c.b16 %v2575, %v2574
        %v2752 = vpack.c.b16 %v2577, %v2576
        %v2753 = vpack.c.b16 %v2579, %v2578
        %v2754 = vpack.c.b16 %v2581, %v2580
        %v2755 = vpack.c.b16 %v2583, %v2582
        %v2756 = vpack.c.b16 %v2585, %v2584
        %v2757 = vpack.c.b16 %v2587, %v2586
        %v2758 = vpack.c.b16 %v2589, %v2588
        %v2759 = vpack.c.b16 %v2591, %v2590
        %v2760 = vpack.c.b16 %v2593, %v2592
        %v2761 = vpack.c.b16 %v2595, %v2594
        %v2762 = vpack.c.b16 %v2597, %v2596
        %v2763 = vpack.c.b16 %v2599, %v2598
        %v2764 = vpack.c.b16 %v2601, %v2600
        %v2765 = vpack.c.b16 %v2603, %v2602
        %v2766 = vpack.c.b16 %v2605, %v2604
        %v2767 = vpack.c.b16 %v2607, %v2606
        %v2768 = vpack.c.b16 %v2609, %v2608
        %v2769 = vpack.c.b16 %v2611, %v2610
        %v2770 = vpack.c.b16 %v2613, %v2612
        %v2771 = vpack.c.b16 %v2615, %v2614
        %v2772 = vpack.c.b16 %v2617, %v2616
        %v2773 = vpack.c.b16 %v2619, %v2618
        %v2774 = vpack.c.b16 %v2621, %v2620
        %v2775 = vpack.c.b16 %v2623, %v2622
        %v2776 = vpack.c.b16 %v2625, %v2624
        %v2777 = vpack.c.b16 %v2627, %v2626
        %v2778 = vpack.c.b16 %v2629, %v2628
        %v2779 = vpack.c.b16 %v2631, %v2630
        %v2780 = vpack.c.b16 %v2633, %v2632
        %v2781 = vpack.c.b16 %v2635, %v2634
        %v2782 = vpack.c.b16 %v2637, %v2636
        %v2783 = vpack.c.b16 %v2639, %v2638
        %v2784 = vpack.c.b16 %v2641, %v2640
        %v2785 = vpack.c.b16 %v2643, %v2642
        %v2786 = vpack.c.b16 %v2645, %v2644
        %v2787 = vpack.c.b16 %v2647, %v2646
        %v2788 = vpack.c.b16 %v2649, %v2648
        %v2789 = vpack.c.b16 %v2651, %v2650
        %v2790 = vpack.c.b16 %v2653, %v2652
        %v2791 = vpack.c.b16 %v2655, %v2654
        %v2792 = vpack.c.b16 %v2657, %v2656
        %v2793 = vpack.c.b16 %v2659, %v2658
        %v2794 = vpack.c.b16 %v2661, %v2660
        %v2795 = vpack.c.b16 %v2663, %v2662
        %v2796 = vpack.c.b16 %v2665, %v2664
        %v2797 = vpack.c.b16 %v2667, %v2666
        %v2798 = vpack.c.b16 %v2669, %v2668
        %v2799 = vpack.c.b16 %v2671, %v2670
        %2928 = vmatprep.subr.bf16.mxu0 0
        %2929 = vmatpush1.bf16.msra.mxu0 %v2679
        %2930 = vmatprep.subr.bf16.mxu0 0
        %2931 = vmatpush1.bf16.msra.mxu0 %v2678
        %2932 = vmatprep.subr.bf16.mxu0 0
        %2933 = vmatpush1.bf16.msra.mxu0 %v2677
        %2934 = vmatprep.subr.bf16.mxu0 0
        %2935 = vmatpush1.bf16.msra.mxu0 %v2676
        %2936 = vmatprep.subr.bf16.mxu0 0
        %2937 = vmatpush1.bf16.msra.mxu0 %v2675
        %2938 = vmatprep.subr.bf16.mxu0 0
        %2939 = vmatpush1.bf16.msra.mxu0 %v2674
        %2940 = vmatprep.subr.bf16.mxu0 0
        %2941 = vmatpush1.bf16.msra.mxu0 %v2673
        %2942 = vmatprep.subr.bf16.mxu0 0
        %2943 = vmatpush1.bf16.msra.mxu0 %v2672
        %2944 = vmatprep.subr.bf16.mxu0 0
        %2945 = vmatpush2.bf16.msra.mxu0 %v2687
        %2946 = vmatprep.subr.bf16.mxu0 0
        %2947 = vmatpush2.bf16.msra.mxu0 %v2686
        %2948 = vmatprep.subr.bf16.mxu0 0
        %2949 = vmatpush2.bf16.msra.mxu0 %v2685
        %2950 = vmatprep.subr.bf16.mxu0 0
        %2951 = vmatpush2.bf16.msra.mxu0 %v2684
        %2952 = vmatprep.subr.bf16.mxu0 0
        %2953 = vmatpush2.bf16.msra.mxu0 %v2683
        %2954 = vmatprep.subr.bf16.mxu0 0
        %2955 = vmatpush2.bf16.msra.mxu0 %v2682
        %2956 = vmatprep.subr.bf16.mxu0 0
        %2957 = vmatpush2.bf16.msra.mxu0 %v2681
        %2958 = vmatprep.subr.bf16.mxu0 0
        %2959 = vmatpush2.bf16.msra.mxu0 %v2680
        %2960 = vmatprep.mubr.bf16.mxu0 %v1885
        %2961 = vmatmul.mubr.bf16.gmra.mxu0 %v1884
        %v2962 = vpop.f32.mrf.mxu0
        %v2963 = vadd.f32 %v2159, %v2962
        %v2964 = vpop.f32.mrf.mxu0
        %v2965 = vpop.f32.mrf.mxu0
        %v2966 = vpop.f32.mrf.mxu0
        %2967 = vdwg.mxu0
        %2968 = vmatprep.subr.bf16.mxu0 0
        %2969 = vmatpush1.bf16.msra.mxu0 %v2695
        %2970 = vmatprep.subr.bf16.mxu0 0
        %2971 = vmatpush1.bf16.msra.mxu0 %v2694
        %2972 = vmatprep.subr.bf16.mxu0 0
        %2973 = vmatpush1.bf16.msra.mxu0 %v2693
        %2974 = vmatprep.subr.bf16.mxu0 0
        %2975 = vmatpush1.bf16.msra.mxu0 %v2692
        %2976 = vmatprep.subr.bf16.mxu0 0
        %2977 = vmatpush1.bf16.msra.mxu0 %v2691
        %2978 = vmatprep.subr.bf16.mxu0 0
        %2979 = vmatpush1.bf16.msra.mxu0 %v2690
        %2980 = vmatprep.subr.bf16.mxu0 0
        %2981 = vmatpush1.bf16.msra.mxu0 %v2689
        %2982 = vmatprep.subr.bf16.mxu0 0
        %2983 = vmatpush1.bf16.msra.mxu0 %v2688
        %2984 = vmatprep.subr.bf16.mxu0 0
        %2985 = vmatpush2.bf16.msra.mxu0 %v2703
        %2986 = vmatprep.subr.bf16.mxu0 0
        %2987 = vmatpush2.bf16.msra.mxu0 %v2702
        %2988 = vmatprep.subr.bf16.mxu0 0
        %2989 = vmatpush2.bf16.msra.mxu0 %v2701
        %2990 = vmatprep.subr.bf16.mxu0 0
        %2991 = vmatpush2.bf16.msra.mxu0 %v2700
        %2992 = vmatprep.subr.bf16.mxu0 0
        %2993 = vmatpush2.bf16.msra.mxu0 %v2699
        %2994 = vmatprep.subr.bf16.mxu0 0
        %2995 = vmatpush2.bf16.msra.mxu0 %v2698
        %2996 = vmatprep.subr.bf16.mxu0 0
        %2997 = vmatpush2.bf16.msra.mxu0 %v2697
        %2998 = vmatprep.subr.bf16.mxu0 0
        %2999 = vmatpush2.bf16.msra.mxu0 %v2696
        %3000 = vmatprep.mubr.bf16.mxu0 %v1887
        %3001 = vmatmul.mubr.bf16.gmra.mxu0 %v1886
        %v3002 = vpop.f32.mrf.mxu0
        %v3003 = vadd.f32 %v2963, %v3002
        %v3004 = vpop.f32.mrf.mxu0
        %v3005 = vpop.f32.mrf.mxu0
        %v3006 = vpop.f32.mrf.mxu0
        %3007 = vdwg.mxu0
        %3008 = vmatprep.subr.bf16.mxu0 0
        %3009 = vmatpush1.bf16.msra.mxu0 %v2711
        %3010 = vmatprep.subr.bf16.mxu0 0
        %3011 = vmatpush1.bf16.msra.mxu0 %v2710
        %3012 = vmatprep.subr.bf16.mxu0 0
        %3013 = vmatpush1.bf16.msra.mxu0 %v2709
        %3014 = vmatprep.subr.bf16.mxu0 0
        %3015 = vmatpush1.bf16.msra.mxu0 %v2708
        %3016 = vmatprep.subr.bf16.mxu0 0
        %3017 = vmatpush1.bf16.msra.mxu0 %v2707
        %3018 = vmatprep.subr.bf16.mxu0 0
        %3019 = vmatpush1.bf16.msra.mxu0 %v2706
        %3020 = vmatprep.subr.bf16.mxu0 0
        %3021 = vmatpush1.bf16.msra.mxu0 %v2705
        %3022 = vmatprep.subr.bf16.mxu0 0
        %3023 = vmatpush1.bf16.msra.mxu0 %v2704
        %3024 = vmatprep.subr.bf16.mxu0 0
        %3025 = vmatpush2.bf16.msra.mxu0 %v2719
        %3026 = vmatprep.subr.bf16.mxu0 0
        %3027 = vmatpush2.bf16.msra.mxu0 %v2718
        %3028 = vmatprep.subr.bf16.mxu0 0
        %3029 = vmatpush2.bf16.msra.mxu0 %v2717
        %3030 = vmatprep.subr.bf16.mxu0 0
        %3031 = vmatpush2.bf16.msra.mxu0 %v2716
        %3032 = vmatprep.subr.bf16.mxu0 0
        %3033 = vmatpush2.bf16.msra.mxu0 %v2715
        %3034 = vmatprep.subr.bf16.mxu0 0
        %3035 = vmatpush2.bf16.msra.mxu0 %v2714
        %3036 = vmatprep.subr.bf16.mxu0 0
        %3037 = vmatpush2.bf16.msra.mxu0 %v2713
        %3038 = vmatprep.subr.bf16.mxu0 0
        %3039 = vmatpush2.bf16.msra.mxu0 %v2712
        %3040 = vmatprep.mubr.bf16.mxu0 %v1889
        %3041 = vmatmul.mubr.bf16.gmra.mxu0 %v1888
        %v3042 = vpop.f32.mrf.mxu0
        %v3043 = vadd.f32 %v3003, %v3042
        %v3044 = vpop.f32.mrf.mxu0
        %v3045 = vpop.f32.mrf.mxu0
        %v3046 = vpop.f32.mrf.mxu0
        %3047 = vdwg.mxu0
        %3048 = vmatprep.subr.bf16.mxu0 0
        %3049 = vmatpush1.bf16.msra.mxu0 %v2727
        %3050 = vmatprep.subr.bf16.mxu0 0
        %3051 = vmatpush1.bf16.msra.mxu0 %v2726
        %3052 = vmatprep.subr.bf16.mxu0 0
        %3053 = vmatpush1.bf16.msra.mxu0 %v2725
        %3054 = vmatprep.subr.bf16.mxu0 0
        %3055 = vmatpush1.bf16.msra.mxu0 %v2724
        %3056 = vmatprep.subr.bf16.mxu0 0
        %3057 = vmatpush1.bf16.msra.mxu0 %v2723
        %3058 = vmatprep.subr.bf16.mxu0 0
        %3059 = vmatpush1.bf16.msra.mxu0 %v2722
        %3060 = vmatprep.subr.bf16.mxu0 0
        %3061 = vmatpush1.bf16.msra.mxu0 %v2721
        %3062 = vmatprep.subr.bf16.mxu0 0
        %3063 = vmatpush1.bf16.msra.mxu0 %v2720
        %3064 = vmatprep.subr.bf16.mxu0 0
        %3065 = vmatpush2.bf16.msra.mxu0 %v2735
        %3066 = vmatprep.subr.bf16.mxu0 0
        %3067 = vmatpush2.bf16.msra.mxu0 %v2734
        %3068 = vmatprep.subr.bf16.mxu0 0
        %3069 = vmatpush2.bf16.msra.mxu0 %v2733
        %3070 = vmatprep.subr.bf16.mxu0 0
        %3071 = vmatpush2.bf16.msra.mxu0 %v2732
        %3072 = vmatprep.subr.bf16.mxu0 0
        %3073 = vmatpush2.bf16.msra.mxu0 %v2731
        %3074 = vmatprep.subr.bf16.mxu0 0
        %3075 = vmatpush2.bf16.msra.mxu0 %v2730
        %3076 = vmatprep.subr.bf16.mxu0 0
        %3077 = vmatpush2.bf16.msra.mxu0 %v2729
        %3078 = vmatprep.subr.bf16.mxu0 0
        %3079 = vmatpush2.bf16.msra.mxu0 %v2728
        %3080 = vmatprep.mubr.bf16.mxu0 %v1891
        %3081 = vmatmul.mubr.bf16.gmra.mxu0 %v1890
        %v3082 = vpop.f32.mrf.mxu0
        %v3083 = vadd.f32 %v3043, %v3082
        %v3084 = vpop.f32.mrf.mxu0
        %v3085 = vpop.f32.mrf.mxu0
        %v3086 = vpop.f32.mrf.mxu0
        %3087 = vdwg.mxu0
        %3088 = vmatprep.subr.bf16.mxu0 0
        %3089 = vmatpush1.bf16.msra.mxu0 %v2743
        %3090 = vmatprep.subr.bf16.mxu0 0
        %3091 = vmatpush1.bf16.msra.mxu0 %v2742
        %3092 = vmatprep.subr.bf16.mxu0 0
        %3093 = vmatpush1.bf16.msra.mxu0 %v2741
        %3094 = vmatprep.subr.bf16.mxu0 0
        %3095 = vmatpush1.bf16.msra.mxu0 %v2740
        %3096 = vmatprep.subr.bf16.mxu0 0
        %3097 = vmatpush1.bf16.msra.mxu0 %v2739
        %3098 = vmatprep.subr.bf16.mxu0 0
        %3099 = vmatpush1.bf16.msra.mxu0 %v2738
        %3100 = vmatprep.subr.bf16.mxu0 0
        %3101 = vmatpush1.bf16.msra.mxu0 %v2737
        %3102 = vmatprep.subr.bf16.mxu0 0
        %3103 = vmatpush1.bf16.msra.mxu0 %v2736
        %3104 = vmatprep.subr.bf16.mxu0 0
        %3105 = vmatpush2.bf16.msra.mxu0 %v2751
        %3106 = vmatprep.subr.bf16.mxu0 0
        %3107 = vmatpush2.bf16.msra.mxu0 %v2750
        %3108 = vmatprep.subr.bf16.mxu0 0
        %3109 = vmatpush2.bf16.msra.mxu0 %v2749
        %3110 = vmatprep.subr.bf16.mxu0 0
        %3111 = vmatpush2.bf16.msra.mxu0 %v2748
        %3112 = vmatprep.subr.bf16.mxu0 0
        %3113 = vmatpush2.bf16.msra.mxu0 %v2747
        %3114 = vmatprep.subr.bf16.mxu0 0
        %3115 = vmatpush2.bf16.msra.mxu0 %v2746
        %3116 = vmatprep.subr.bf16.mxu0 0
        %3117 = vmatpush2.bf16.msra.mxu0 %v2745
        %3118 = vmatprep.subr.bf16.mxu0 0
        %3119 = vmatpush2.bf16.msra.mxu0 %v2744
        %3120 = vmatprep.mubr.bf16.mxu0 %v1893
        %3121 = vmatmul.mubr.bf16.gmra.mxu0 %v1892
        %v3122 = vpop.f32.mrf.mxu0
        %v3123 = vadd.f32 %v3083, %v3122
        %v3124 = vpop.f32.mrf.mxu0
        %v3125 = vpop.f32.mrf.mxu0
        %v3126 = vpop.f32.mrf.mxu0
        %3127 = vdwg.mxu0
        %3128 = vmatprep.subr.bf16.mxu0 0
        %3129 = vmatpush1.bf16.msra.mxu0 %v2759
        %3130 = vmatprep.subr.bf16.mxu0 0
        %3131 = vmatpush1.bf16.msra.mxu0 %v2758
        %3132 = vmatprep.subr.bf16.mxu0 0
        %3133 = vmatpush1.bf16.msra.mxu0 %v2757
        %3134 = vmatprep.subr.bf16.mxu0 0
        %3135 = vmatpush1.bf16.msra.mxu0 %v2756
        %3136 = vmatprep.subr.bf16.mxu0 0
        %3137 = vmatpush1.bf16.msra.mxu0 %v2755
        %3138 = vmatprep.subr.bf16.mxu0 0
        %3139 = vmatpush1.bf16.msra.mxu0 %v2754
        %3140 = vmatprep.subr.bf16.mxu0 0
        %3141 = vmatpush1.bf16.msra.mxu0 %v2753
        %3142 = vmatprep.subr.bf16.mxu0 0
        %3143 = vmatpush1.bf16.msra.mxu0 %v2752
        %3144 = vmatprep.subr.bf16.mxu0 0
        %3145 = vmatpush2.bf16.msra.mxu0 %v2767
        %3146 = vmatprep.subr.bf16.mxu0 0
        %3147 = vmatpush2.bf16.msra.mxu0 %v2766
        %3148 = vmatprep.subr.bf16.mxu0 0
        %3149 = vmatpush2.bf16.msra.mxu0 %v2765
        %3150 = vmatprep.subr.bf16.mxu0 0
        %3151 = vmatpush2.bf16.msra.mxu0 %v2764
        %3152 = vmatprep.subr.bf16.mxu0 0
        %3153 = vmatpush2.bf16.msra.mxu0 %v2763
        %3154 = vmatprep.subr.bf16.mxu0 0
        %3155 = vmatpush2.bf16.msra.mxu0 %v2762
        %3156 = vmatprep.subr.bf16.mxu0 0
        %3157 = vmatpush2.bf16.msra.mxu0 %v2761
        %3158 = vmatprep.subr.bf16.mxu0 0
        %3159 = vmatpush2.bf16.msra.mxu0 %v2760
        %3160 = vmatprep.mubr.bf16.mxu0 %v1895
        %3161 = vmatmul.mubr.bf16.gmra.mxu0 %v1894
        %v3162 = vpop.f32.mrf.mxu0
        %v3163 = vadd.f32 %v3123, %v3162
        %v3164 = vpop.f32.mrf.mxu0
        %v3165 = vpop.f32.mrf.mxu0
        %v3166 = vpop.f32.mrf.mxu0
        %3167 = vdwg.mxu0
        %3168 = vmatprep.subr.bf16.mxu0 0
        %3169 = vmatpush1.bf16.msra.mxu0 %v2775
        %3170 = vmatprep.subr.bf16.mxu0 0
        %3171 = vmatpush1.bf16.msra.mxu0 %v2774
        %3172 = vmatprep.subr.bf16.mxu0 0
        %3173 = vmatpush1.bf16.msra.mxu0 %v2773
        %3174 = vmatprep.subr.bf16.mxu0 0
        %3175 = vmatpush1.bf16.msra.mxu0 %v2772
        %3176 = vmatprep.subr.bf16.mxu0 0
        %3177 = vmatpush1.bf16.msra.mxu0 %v2771
        %3178 = vmatprep.subr.bf16.mxu0 0
        %3179 = vmatpush1.bf16.msra.mxu0 %v2770
        %3180 = vmatprep.subr.bf16.mxu0 0
        %3181 = vmatpush1.bf16.msra.mxu0 %v2769
        %3182 = vmatprep.subr.bf16.mxu0 0
        %3183 = vmatpush1.bf16.msra.mxu0 %v2768
        %3184 = vmatprep.subr.bf16.mxu0 0
        %3185 = vmatpush2.bf16.msra.mxu0 %v2783
        %3186 = vmatprep.subr.bf16.mxu0 0
        %3187 = vmatpush2.bf16.msra.mxu0 %v2782
        %3188 = vmatprep.subr.bf16.mxu0 0
        %3189 = vmatpush2.bf16.msra.mxu0 %v2781
        %3190 = vmatprep.subr.bf16.mxu0 0
        %3191 = vmatpush2.bf16.msra.mxu0 %v2780
        %3192 = vmatprep.subr.bf16.mxu0 0
        %3193 = vmatpush2.bf16.msra.mxu0 %v2779
        %3194 = vmatprep.subr.bf16.mxu0 0
        %3195 = vmatpush2.bf16.msra.mxu0 %v2778
        %3196 = vmatprep.subr.bf16.mxu0 0
        %3197 = vmatpush2.bf16.msra.mxu0 %v2777
        %3198 = vmatprep.subr.bf16.mxu0 0
        %3199 = vmatpush2.bf16.msra.mxu0 %v2776
        %3200 = vmatprep.mubr.bf16.mxu0 %v1897
        %3201 = vmatmul.mubr.bf16.gmra.mxu0 %v1896
        %v3202 = vpop.f32.mrf.mxu0
        %v3203 = vadd.f32 %v3163, %v3202
        %v3204 = vpop.f32.mrf.mxu0
        %v3205 = vpop.f32.mrf.mxu0
        %v3206 = vpop.f32.mrf.mxu0
        %3207 = vdwg.mxu0
        %3208 = vmatprep.subr.bf16.mxu0 0
        %3209 = vmatpush1.bf16.msra.mxu0 %v2791
        %3210 = vmatprep.subr.bf16.mxu0 0
        %3211 = vmatpush1.bf16.msra.mxu0 %v2790
        %3212 = vmatprep.subr.bf16.mxu0 0
        %3213 = vmatpush1.bf16.msra.mxu0 %v2789
        %3214 = vmatprep.subr.bf16.mxu0 0
        %3215 = vmatpush1.bf16.msra.mxu0 %v2788
        %3216 = vmatprep.subr.bf16.mxu0 0
        %3217 = vmatpush1.bf16.msra.mxu0 %v2787
        %3218 = vmatprep.subr.bf16.mxu0 0
        %3219 = vmatpush1.bf16.msra.mxu0 %v2786
        %3220 = vmatprep.subr.bf16.mxu0 0
        %3221 = vmatpush1.bf16.msra.mxu0 %v2785
        %3222 = vmatprep.subr.bf16.mxu0 0
        %3223 = vmatpush1.bf16.msra.mxu0 %v2784
        %3224 = vmatprep.subr.bf16.mxu0 0
        %3225 = vmatpush2.bf16.msra.mxu0 %v2799
        %3226 = vmatprep.subr.bf16.mxu0 0
        %3227 = vmatpush2.bf16.msra.mxu0 %v2798
        %3228 = vmatprep.subr.bf16.mxu0 0
        %3229 = vmatpush2.bf16.msra.mxu0 %v2797
        %3230 = vmatprep.subr.bf16.mxu0 0
        %3231 = vmatpush2.bf16.msra.mxu0 %v2796
        %3232 = vmatprep.subr.bf16.mxu0 0
        %3233 = vmatpush2.bf16.msra.mxu0 %v2795
        %3234 = vmatprep.subr.bf16.mxu0 0
        %3235 = vmatpush2.bf16.msra.mxu0 %v2794
        %3236 = vmatprep.subr.bf16.mxu0 0
        %3237 = vmatpush2.bf16.msra.mxu0 %v2793
        %3238 = vmatprep.subr.bf16.mxu0 0
        %3239 = vmatpush2.bf16.msra.mxu0 %v2792
        %3240 = vmatprep.mubr.bf16.mxu0 %v1899
        %3241 = vmatmul.mubr.bf16.gmra.mxu0 %v1898
        %v3242 = vpop.f32.mrf.mxu0
        %v3243 = vadd.f32 %v3203, %v3242
        %v3244 = vpop.f32.mrf.mxu0
        %v3245 = vpop.f32.mrf.mxu0
        %v3246 = vpop.f32.mrf.mxu0
        %3247 = vdwg.mxu0
        %v3248 = vadd.f32 %v1163, %v3243
        %v3249 = vsel %vm515, %v3248, 0.0
        %3250 = vadd.xlane.f32.xlu0 %v3249
        %v3251 = vpop.xlane.xlu0 %3250
        %v3252 = vmul.f32 %v3251, %v1143
        %v3253 = vsub.f32 %v3248, %v3252
        %v3254 = vmul.f32 %v3253, %v3253
        %v3255 = vsel %vm515, %v3254, 0.0
        %3256 = vadd.xlane.f32.xlu0 %v3255
        %v3257 = vpop.xlane.xlu0 %3256
        %v3258 = vmul.f32 %v3257, %v1143
        %v3259 = vadd.f32 %v3258, 1e-05
        %v3260 = vrsqrt.pop %v3259
        %v3261 = vmul.f32 %v3253, %v3260
        %v3262 = vlaneseq
        %v3263 = vshrl.u32 %v3262, 7
        %v3264 = vsub.s32 6, %v3263
        %v3265 = vrot.slane %v462, %v3264
        %v3266 = vmul.f32 %v3261, %v3265
        %v3267 = vlaneseq
        %v3268 = vshrl.u32 %v3267, 7
        %v3269 = vsub.s32 7, %v3268
        %v3270 = vrot.slane %v462, %v3269
        %v3271 = vadd.f32 %v3266, %v3270
        %3272 = vst.msk [vmem:[#allocation2] sm:$0xff] %vm515, %v3271
        %p3273 = scmp.eq.s32.totalorder %s22, 2
        // Predicated region
        $region65: #{tpu_custom_call.1} parent=59 // pred_check
          %p3274 = pneg %p3273
        $region66: #{tpu_custom_call.1} parent=59 // pred_check_branch
          %3276 = sbr.rel (%p3274) target = $region68
        $region67: #{tpu_custom_call.1} parent=59 // pred_region
          %v3277 = vld [vmem:[%s8] sm:$0xff]
          %v3278 = vld [vmem:[%s8 + $0x8] sm:$0xff]
          %v3279 = vld [vmem:[%s8 + $0x10] sm:$0xff]
          %v3280 = vld [vmem:[%s8 + $0x18] sm:$0xff]
          %v3281 = vld [vmem:[%s8 + $0x20] sm:$0xff]
          %v3282 = vld [vmem:[%s9] sm:$0x1]
          %v3284 = vlaneseq
          %v3285 = vshrl.u32 %v3284, 7
          %v3286 = vsub.s32 0, %v3285
          %v3287 = vrot.slane %v3282, %v3286
          %v3290 = vsel %vm515, %v3271, 0
          %3292 = vmatprep.subr.mxu0 0.0
          %3293 = vmatpush1.msra.mxu0 0.0
          %3294 = vmatprep.subr.mxu0 0.0
          %3295 = vmatpush1.msra.mxu0 0.0
          %3296 = vmatprep.subr.mxu0 0.0
          %3297 = vmatpush1.msra.mxu0 0.0
          %3298 = vmatprep.subr.mxu0 0.0
          %3299 = vmatpush1.msra.mxu0 0.0
          %3300 = vmatprep.subr.mxu0 0.0
          %3301 = vmatpush1.msra.mxu0 0.0
          %3302 = vmatprep.subr.mxu0 0.0
          %3303 = vmatpush1.msra.mxu0 0.0
          %3304 = vmatprep.subr.mxu0 0.0
          %3305 = vmatpush1.msra.mxu0 0.0
          %3306 = vmatprep.subr.mxu0 0.0
          %3307 = vmatpush1.msra.mxu0 0.0
          %3308 = vmatprep.subr.mxu0 0.0
          %3309 = vmatpush1.msra.mxu0 0.0
          %3310 = vmatprep.subr.mxu0 0.0
          %3311 = vmatpush1.msra.mxu0 0.0
          %3312 = vmatprep.subr.mxu0 0.0
          %3313 = vmatpush1.msra.mxu0 0.0
          %3314 = vmatprep.subr.mxu0 0.0
          %3315 = vmatpush1.msra.mxu0 %v3281
          %3316 = vmatprep.subr.mxu0 0.0
          %3317 = vmatpush1.msra.mxu0 %v3280
          %3318 = vmatprep.subr.mxu0 0.0
          %3319 = vmatpush1.msra.mxu0 %v3279
          %3320 = vmatprep.subr.mxu0 0.0
          %3321 = vmatpush1.msra.mxu0 %v3278
          %3322 = vmatprep.subr.mxu0 0.0
          %3323 = vmatpush1.msra.mxu0 %v3277
          %3324 = vmatprep.subr.mxu0 0.0
          %3325 = vmatpush2.msra.mxu0 0.0
          %3326 = vmatprep.subr.mxu0 0.0
          %3327 = vmatpush2.msra.mxu0 0.0
          %3328 = vmatprep.subr.mxu0 0.0
          %3329 = vmatpush2.msra.mxu0 0.0
          %3330 = vmatprep.subr.mxu0 0.0
          %3331 = vmatpush2.msra.mxu0 0.0
          %3332 = vmatprep.subr.mxu0 0.0
          %3333 = vmatpush2.msra.mxu0 0.0
          %3334 = vmatprep.subr.mxu0 0.0
          %3335 = vmatpush2.msra.mxu0 0.0
          %3336 = vmatprep.subr.mxu0 0.0
          %3337 = vmatpush2.msra.mxu0 0.0
          %3338 = vmatprep.subr.mxu0 0.0
          %3339 = vmatpush2.msra.mxu0 0.0
          %3340 = vmatprep.subr.mxu0 0.0
          %3341 = vmatpush2.msra.mxu0 0.0
          %3342 = vmatprep.subr.mxu0 0.0
          %3343 = vmatpush2.msra.mxu0 0.0
          %3344 = vmatprep.subr.mxu0 0.0
          %3345 = vmatpush2.msra.mxu0 0.0
          %3346 = vmatprep.subr.mxu0 0.0
          %3347 = vmatpush2.msra.mxu0 0.0
          %3348 = vmatprep.subr.mxu0 0.0
          %3349 = vmatpush2.msra.mxu0 0.0
          %3350 = vmatprep.subr.mxu0 0.0
          %3351 = vmatpush2.msra.mxu0 0.0
          %3352 = vmatprep.subr.mxu0 0.0
          %3353 = vmatpush2.msra.mxu0 0.0
          %3354 = vmatprep.subr.mxu0 0.0
          %3355 = vmatpush2.msra.mxu0 0.0
          %3356 = vmatprep.mubr.f32.mxu0 0.0
          %3357 = vmatmul.mubr.f32.gmra.mxu0 %v3290
          %v3358 = vpop.f32.mrf.mxu0
          %v3359 = vadd.f32 %v3287, %v3358
          %v3360 = vpop.f32.mrf.mxu0
          %3361 = vdwg.mxu0
          %vm3362 = vcmask 310272
          %3363 = vst.msk [vmem:[#allocation3] sm:$0xff] %vm3362, %v3359
        $region68: #{tpu_custom_call.1} parent=59 // pred_fallthru
          _
        // Predicated region
        $region69: #{tpu_custom_call.1} parent=59 // pred_check
          %p3364 = pneg %p275
        $region70: #{tpu_custom_call.1} parent=59 // pred_check_branch
          %3366 = sbr.rel (%p3364) target = $region72
        $region71: #{tpu_custom_call.1} parent=59 // pred_region
          %s3368 = ssub.s32 128, 128
          %3369 = vsyncadd [#allocation4], %s3368
          %s3371 = sshll.u32 [#allocation3], 4
          %s3372 = int_to_ptr.vmem [resolvable:$true] %s3371
          %3374 = dma.vmem_to_hbm [thread:$0]  %s3372, 128, %s10, [#allocation4]
        $region72: #{tpu_custom_call.1} parent=59 // pred_fallthru
          _
        // Predicated region
        $region73: #{tpu_custom_call.1} parent=59 // pred_check
          %p3375 = pneg %p275
        $region74: #{tpu_custom_call.1} parent=59 // pred_check_branch
          %3377 = sbr.rel (%p3375) target = $region76
        $region75: #{tpu_custom_call.1} parent=59 // pred_region
          %3378 = dma.done [#allocation4], 128
        $region76: #{tpu_custom_call.1} parent=59 // pred_fallthru
          _
      $region60: #{tpu_custom_call.1} parent=5 // pred_fallthru
        _
      %p3379 = scmp.le.s32.totalorder 2, %s17
      // Predicated region
      $region77: #{tpu_custom_call.1} parent=5 // pred_check
        %p3380 = pneg %p3379
      $region78: #{tpu_custom_call.1} parent=5 // pred_check_branch
        %3382 = sbr.rel (%p3380) target = $region80
      $region79: #{tpu_custom_call.1} parent=5 // pred_region
        %s3383 = ssub.s32 %s17, 2
      $region80: #{tpu_custom_call.1} parent=5 // pred_fallthru
        _
    $region6: #{tpu_custom_call.1} parent=1 // loop_footer
      %s21 = sadd.s32 1, %s17
    $region7: #{tpu_custom_call.1} parent=1 // loop_footer_branch
      %16 = sbr.rel target = $region3
    $region8: #{tpu_custom_call.1} parent=1 // loop_exit
      _
    %3384 = vsyncpa [#allocation4], 1
    %s3385 = scalar_lea.sflag [#allocation4], 1
    %3386 = vsyncpa %s3385, 1

</llo_original>
